<compile_context>
chip_gen: v7x
topology: tpu7x:2x2x1
jax: 0.10.0
libtpu: 0.0.40
codegen_flags: <defaults>
</compile_context>

<pallas_src>
import numpy as np
import jax
import jax.numpy as jnp
from jax import lax
from jax.experimental import pallas as pl
from jax.experimental.pallas import tpu as pltpu

STABILITY_OFFSET = 1e-10

SIZE = 7                       # Gabor filter size (odd -> "same" conv)
WAVELENGTH = 4.0
ORIENTATIONS = [90, -45, 0, 45]
NUM_ORI = len(ORIENTATIONS)
PAD = SIZE // 2


def gabor_filter(size, wavelength, orientation):
    """Same construction as the PyTorch module (pure numpy, deterministic)."""
    lambda_ = size * 2.0 / wavelength
    sigma = lambda_ * 0.8
    gamma = 0.3
    theta = np.deg2rad(orientation + 90)
    x, y = np.mgrid[:size, :size] - size // 2
    rotx = x * np.cos(theta) + y * np.sin(theta)
    roty = -x * np.sin(theta) + y * np.cos(theta)
    filt = np.exp(-(rotx ** 2 + gamma ** 2 * roty ** 2) / (2 * sigma ** 2))
    filt *= np.cos(2 * np.pi * rotx / lambda_)
    filt[np.sqrt(x ** 2 + y ** 2) > size / 2] = 0
    filt = filt - np.mean(filt)
    filt = filt / np.sqrt(np.sum(filt ** 2))
    return filt.astype(np.float32)


def _make_s1_kernel(gabor_w_np):
    """Build the kernel with the (frozen) Gabor weights baked in as constants."""
    gabor_w_np = np.asarray(gabor_w_np, dtype=np.float32)
    assert gabor_w_np.shape == (NUM_ORI, SIZE, SIZE)
    # (kh, kw, per-orientation weights) as Python floats -> trace-time constants.
    taps = []
    for kh in range(SIZE):
        for kw in range(SIZE):
            ws = tuple(float(gabor_w_np[o, kh, kw]) for o in range(NUM_ORI))
            taps.append((kh, kw, ws))

    def _s1_kernel(x_ref, o_ref):
        """x_ref: (B, Hp, Wp) VMEM, o_ref: (B, NUM_ORI, H, W) VMEM."""
        H = o_ref.shape[2]
        W = o_ref.shape[3]

        x = x_ref[...]                                   # (B, Hp, Wp) f32

        # ---- local-energy ("uniform" all-ones conv) via separable box sum ----
        # sum_{kh,kw} x^2 == (sum over kw along lanes) then (sum over kh along
        # sublanes): 1 square + 14 shifted adds instead of 49 mul-adds.
        x2 = x * x                                       # (B, Hp, Wp)
        row = x2[:, :, 0:W]
        for kw in range(1, SIZE):
            row = row + x2[:, :, kw:kw + W]              # (B, Hp, W)
        norm_acc = row[:, 0:H, :]
        for kh in range(1, SIZE):
            norm_acc = norm_acc + row[:, kh:kh + H, :]   # (B, H, W)

        # norm = sqrt(relu(sum_sq) + eps); sum of squares >= 0 so relu is a
        # no-op, and 1/sqrt fuses into a single rsqrt on the EUP.
        inv_norm = lax.rsqrt(norm_acc + STABILITY_OFFSET)

        # ---- Gabor convolutions: fused pass over the 7x7 taps ----
        accs = [jnp.zeros(x.shape[:1] + (H, W), jnp.float32)
                for _ in range(NUM_ORI)]
        for kh, kw, ws in taps:
            win = x[:, kh:kh + H, kw:kw + W]             # (B, H, W), read once
            for o in range(NUM_ORI):
                w = ws[o]
                if w != 0.0:                             # skip structurally-zero taps
                    accs[o] = accs[o] + w * win

        for o in range(NUM_ORI):
            o_ref[:, o:o + 1, :, :] = (jnp.abs(accs[o]) * inv_norm)[:, None, :, :]

    return _s1_kernel


def s1_forward(img, gabor_w, batch_block=8):
    """img: (N, 1, H, W) f32, gabor_w: (NUM_ORI, SIZE, SIZE) -> (N, NUM_ORI, H, W)."""
    N, C, H, W = img.shape
    assert C == 1

    # B batch elements per grid step (amortizes the ~0.35us/step overhead for
    # small frames).  Pad batch up to a multiple of B; padded all-zero images
    # produce abs(0) * rsqrt(eps) = 0 (no NaNs) and are sliced off at the end.
    B = max(1, min(batch_block, N))
    Np = ((N + B - 1) // B) * B
    if Np != N:
        img = jnp.pad(img, ((0, Np - N), (0, 0), (0, 0), (0, 0)))

    # Zero padding (Conv2d padding=size//2) done in plain JAX glue.
    x_pad = jnp.pad(img[:, 0], ((0, 0), (PAD, PAD), (PAD, PAD)))   # (Np, Hp, Wp)
    Hp, Wp = H + 2 * PAD, W + 2 * PAD

    kernel = _make_s1_kernel(gabor_w)

    out = pl.pallas_call(
        kernel,
        out_shape=jax.ShapeDtypeStruct((Np, NUM_ORI, H, W), jnp.float32),
        grid=(Np // B,),
        in_specs=[
            pl.BlockSpec((B, Hp, Wp), lambda n: (n, 0, 0)),          # padded images
        ],
        out_specs=pl.BlockSpec((B, NUM_ORI, H, W), lambda n: (n, 0, 0, 0)),
        compiler_params=pltpu.CompilerParams(
            dimension_semantics=("parallel",),       # batch steps are independent
        ),
    )(x_pad)
    return out[:N]
    # TODO(synk): for large frames (e.g. 1024x1024) add a row-tile grid axis
    # with a 2*PAD-row halo so double-buffered blocks fit v7x's 64 MiB VMEM.


def s1_reference(img, gabor_w):
    """Pure-JAX reference matching the PyTorch forward (include_borders=True)."""
    dn = ("NCHW", "OIHW", "NCHW")
    gab = jax.lax.conv_general_dilated(
        img, jnp.asarray(gabor_w, dtype=jnp.float32)[:, None, :, :],
        window_strides=(1, 1), padding=[(PAD, PAD), (PAD, PAD)],
        dimension_numbers=dn)
    ones = jnp.ones((NUM_ORI, 1, SIZE, SIZE), jnp.float32)
    uni = jax.lax.conv_general_dilated(
        img ** 2, ones, window_strides=(1, 1),
        padding=[(PAD, PAD), (PAD, PAD)], dimension_numbers=dn)
    norm = jnp.sqrt(jax.nn.relu(uni) + STABILITY_OFFSET)
    return jnp.abs(gab) / norm
    # TODO(synk): include_borders=False path (zeroing border rows/cols) not exercised here.


if __name__ == "__main__":
    # Deterministic Gabor weights (module __init__).
    gabor_w = np.stack(
        [gabor_filter(SIZE, WAVELENGTH, o) for o in ORIENTATIONS], axis=0)

    # Small deterministic input: batch=2, 1 channel, 16x16.
    key = jax.random.PRNGKey(0)
    img = jax.random.normal(key, (2, 1, 16, 16), dtype=jnp.float32)

    out = s1_forward(img, gabor_w)
    out = jax.block_until_ready(out)

    ref = s1_reference(img, gabor_w)
    np.testing.assert_allclose(np.asarray(out), np.asarray(ref), rtol=1e-4, atol=1e-5)

    print("KERNEL_OK")
</pallas_src>

<mosaic_0001>
module attributes {stable_mosaic.version = 11 : i64} {
  func.func @_s1_kernel(%arg0: i32, %arg1: memref<2x22x22xf32, #tpu.memory_space<vmem>>, %arg2: memref<2x4x16x16xf32, #tpu.memory_space<vmem>>) attributes {dimension_semantics = [#tpu.dimension_semantics<parallel>], iteration_bounds = array<i64: 1>, scalar_prefetch = 0 : i64, scratch_operands = 0 : i64, tpu.core_type = #tpu.core_type<tc>, window_params = [{transform_indices = @transform_0, window_bounds = array<i64: 2, 22, 22>}, {transform_indices = @transform_1, window_bounds = array<i64: 2, 4, 16, 16>}]} {
    %c0 = arith.constant 0 : index
    %c0_0 = arith.constant 0 : index
    %c0_1 = arith.constant 0 : index
    %0 = vector.load %arg1[%c0, %c0_0, %c0_1] : memref<2x22x22xf32, #tpu.memory_space<vmem>>, vector<2x22x22xf32>
    %1 = arith.mulf %0, %0 : vector<2x22x22xf32>
    %2 = vector.extract_strided_slice %1 {offsets = [0, 0, 0], sizes = [2, 22, 16], strides = [1, 1, 1]} : vector<2x22x22xf32> to vector<2x22x16xf32>
    %3 = vector.extract_strided_slice %1 {offsets = [0, 0, 1], sizes = [2, 22, 16], strides = [1, 1, 1]} : vector<2x22x22xf32> to vector<2x22x16xf32>
    %4 = arith.addf %2, %3 : vector<2x22x16xf32>
    %5 = vector.extract_strided_slice %1 {offsets = [0, 0, 2], sizes = [2, 22, 16], strides = [1, 1, 1]} : vector<2x22x22xf32> to vector<2x22x16xf32>
    %6 = arith.addf %4, %5 : vector<2x22x16xf32>
    %7 = vector.extract_strided_slice %1 {offsets = [0, 0, 3], sizes = [2, 22, 16], strides = [1, 1, 1]} : vector<2x22x22xf32> to vector<2x22x16xf32>
    %8 = arith.addf %6, %7 : vector<2x22x16xf32>
    %9 = vector.extract_strided_slice %1 {offsets = [0, 0, 4], sizes = [2, 22, 16], strides = [1, 1, 1]} : vector<2x22x22xf32> to vector<2x22x16xf32>
    %10 = arith.addf %8, %9 : vector<2x22x16xf32>
    %11 = vector.extract_strided_slice %1 {offsets = [0, 0, 5], sizes = [2, 22, 16], strides = [1, 1, 1]} : vector<2x22x22xf32> to vector<2x22x16xf32>
    %12 = arith.addf %10, %11 : vector<2x22x16xf32>
    %13 = vector.extract_strided_slice %1 {offsets = [0, 0, 6], sizes = [2, 22, 16], strides = [1, 1, 1]} : vector<2x22x22xf32> to vector<2x22x16xf32>
    %14 = arith.addf %12, %13 : vector<2x22x16xf32>
    %15 = vector.extract_strided_slice %14 {offsets = [0, 0, 0], sizes = [2, 16, 16], strides = [1, 1, 1]} : vector<2x22x16xf32> to vector<2x16x16xf32>
    %16 = vector.extract_strided_slice %14 {offsets = [0, 1, 0], sizes = [2, 16, 16], strides = [1, 1, 1]} : vector<2x22x16xf32> to vector<2x16x16xf32>
    %17 = arith.addf %15, %16 : vector<2x16x16xf32>
    %18 = vector.extract_strided_slice %14 {offsets = [0, 2, 0], sizes = [2, 16, 16], strides = [1, 1, 1]} : vector<2x22x16xf32> to vector<2x16x16xf32>
    %19 = arith.addf %17, %18 : vector<2x16x16xf32>
    %20 = vector.extract_strided_slice %14 {offsets = [0, 3, 0], sizes = [2, 16, 16], strides = [1, 1, 1]} : vector<2x22x16xf32> to vector<2x16x16xf32>
    %21 = arith.addf %19, %20 : vector<2x16x16xf32>
    %22 = vector.extract_strided_slice %14 {offsets = [0, 4, 0], sizes = [2, 16, 16], strides = [1, 1, 1]} : vector<2x22x16xf32> to vector<2x16x16xf32>
    %23 = arith.addf %21, %22 : vector<2x16x16xf32>
    %24 = vector.extract_strided_slice %14 {offsets = [0, 5, 0], sizes = [2, 16, 16], strides = [1, 1, 1]} : vector<2x22x16xf32> to vector<2x16x16xf32>
    %25 = arith.addf %23, %24 : vector<2x16x16xf32>
    %26 = vector.extract_strided_slice %14 {offsets = [0, 6, 0], sizes = [2, 16, 16], strides = [1, 1, 1]} : vector<2x22x16xf32> to vector<2x16x16xf32>
    %27 = arith.addf %25, %26 : vector<2x16x16xf32>
    %cst = arith.constant 1.000000e-10 : f32
    %28 = vector.broadcast %cst : f32 to vector<2x16x16xf32>
    %29 = arith.addf %27, %28 : vector<2x16x16xf32>
    %30 = math.rsqrt %29 : vector<2x16x16xf32>
    %cst_2 = arith.constant 0.000000e+00 : f32
    %31 = vector.broadcast %cst_2 : f32 to vector<2x16x16xf32>
    %cst_3 = arith.constant 0.000000e+00 : f32
    %32 = vector.broadcast %cst_3 : f32 to vector<2x16x16xf32>
    %cst_4 = arith.constant 0.000000e+00 : f32
    %33 = vector.broadcast %cst_4 : f32 to vector<2x16x16xf32>
    %cst_5 = arith.constant 0.000000e+00 : f32
    %34 = vector.broadcast %cst_5 : f32 to vector<2x16x16xf32>
    %35 = vector.extract_strided_slice %0 {offsets = [0, 0, 0], sizes = [2, 16, 16], strides = [1, 1, 1]} : vector<2x22x22xf32> to vector<2x16x16xf32>
    %cst_6 = arith.constant 4.668450e-03 : f32
    %36 = vector.broadcast %cst_6 : f32 to vector<2x16x16xf32>
    %37 = arith.mulf %36, %35 : vector<2x16x16xf32>
    %38 = arith.addf %31, %37 : vector<2x16x16xf32>
    %cst_7 = arith.constant 0.0185802113 : f32
    %39 = vector.broadcast %cst_7 : f32 to vector<2x16x16xf32>
    %40 = arith.mulf %39, %35 : vector<2x16x16xf32>
    %41 = arith.addf %32, %40 : vector<2x16x16xf32>
    %cst_8 = arith.constant 4.668450e-03 : f32
    %42 = vector.broadcast %cst_8 : f32 to vector<2x16x16xf32>
    %43 = arith.mulf %42, %35 : vector<2x16x16xf32>
    %44 = arith.addf %33, %43 : vector<2x16x16xf32>
    %cst_9 = arith.constant 0.0185802113 : f32
    %45 = vector.broadcast %cst_9 : f32 to vector<2x16x16xf32>
    %46 = arith.mulf %45, %35 : vector<2x16x16xf32>
    %47 = arith.addf %34, %46 : vector<2x16x16xf32>
    %48 = vector.extract_strided_slice %0 {offsets = [0, 0, 1], sizes = [2, 16, 16], strides = [1, 1, 1]} : vector<2x22x22xf32> to vector<2x16x16xf32>
    %cst_10 = arith.constant 4.668450e-03 : f32
    %49 = vector.broadcast %cst_10 : f32 to vector<2x16x16xf32>
    %50 = arith.mulf %49, %48 : vector<2x16x16xf32>
    %51 = arith.addf %38, %50 : vector<2x16x16xf32>
    %cst_11 = arith.constant 0.0185802113 : f32
    %52 = vector.broadcast %cst_11 : f32 to vector<2x16x16xf32>
    %53 = arith.mulf %52, %48 : vector<2x16x16xf32>
    %54 = arith.addf %41, %53 : vector<2x16x16xf32>
    %cst_12 = arith.constant 4.668450e-03 : f32
    %55 = vector.broadcast %cst_12 : f32 to vector<2x16x16xf32>
    %56 = arith.mulf %55, %48 : vector<2x16x16xf32>
    %57 = arith.addf %44, %56 : vector<2x16x16xf32>
    %cst_13 = arith.constant 0.0185802113 : f32
    %58 = vector.broadcast %cst_13 : f32 to vector<2x16x16xf32>
    %59 = arith.mulf %58, %48 : vector<2x16x16xf32>
    %60 = arith.addf %47, %59 : vector<2x16x16xf32>
    %61 = vector.extract_strided_slice %0 {offsets = [0, 0, 2], sizes = [2, 16, 16], strides = [1, 1, 1]} : vector<2x22x22xf32> to vector<2x16x16xf32>
    %cst_14 = arith.constant 0.102426723 : f32
    %62 = vector.broadcast %cst_14 : f32 to vector<2x16x16xf32>
    %63 = arith.mulf %62, %61 : vector<2x16x16xf32>
    %64 = arith.addf %51, %63 : vector<2x16x16xf32>
    %cst_15 = arith.constant 0.0769182593 : f32
    %65 = vector.broadcast %cst_15 : f32 to vector<2x16x16xf32>
    %66 = arith.mulf %65, %61 : vector<2x16x16xf32>
    %67 = arith.addf %54, %66 : vector<2x16x16xf32>
    %cst_16 = arith.constant -0.0508365072 : f32
    %68 = vector.broadcast %cst_16 : f32 to vector<2x16x16xf32>
    %69 = arith.mulf %68, %61 : vector<2x16x16xf32>
    %70 = arith.addf %57, %69 : vector<2x16x16xf32>
    %cst_17 = arith.constant -1.720320e-01 : f32
    %71 = vector.broadcast %cst_17 : f32 to vector<2x16x16xf32>
    %72 = arith.mulf %71, %61 : vector<2x16x16xf32>
    %73 = arith.addf %60, %72 : vector<2x16x16xf32>
    %74 = vector.extract_strided_slice %0 {offsets = [0, 0, 3], sizes = [2, 16, 16], strides = [1, 1, 1]} : vector<2x22x22xf32> to vector<2x16x16xf32>
    %cst_18 = arith.constant 0.10298945 : f32
    %75 = vector.broadcast %cst_18 : f32 to vector<2x16x16xf32>
    %76 = arith.mulf %75, %74 : vector<2x16x16xf32>
    %77 = arith.addf %64, %76 : vector<2x16x16xf32>
    %cst_19 = arith.constant -0.139625475 : f32
    %78 = vector.broadcast %cst_19 : f32 to vector<2x16x16xf32>
    %79 = arith.mulf %78, %74 : vector<2x16x16xf32>
    %80 = arith.addf %67, %79 : vector<2x16x16xf32>
    %cst_20 = arith.constant 0.270531654 : f32
    %81 = vector.broadcast %cst_20 : f32 to vector<2x16x16xf32>
    %82 = arith.mulf %81, %74 : vector<2x16x16xf32>
    %83 = arith.addf %70, %82 : vector<2x16x16xf32>
    %cst_21 = arith.constant -0.139625475 : f32
    %84 = vector.broadcast %cst_21 : f32 to vector<2x16x16xf32>
    %85 = arith.mulf %84, %74 : vector<2x16x16xf32>
    %86 = arith.addf %73, %85 : vector<2x16x16xf32>
    %87 = vector.extract_strided_slice %0 {offsets = [0, 0, 4], sizes = [2, 16, 16], strides = [1, 1, 1]} : vector<2x22x22xf32> to vector<2x16x16xf32>
    %cst_22 = arith.constant 0.102426723 : f32
    %88 = vector.broadcast %cst_22 : f32 to vector<2x16x16xf32>
    %89 = arith.mulf %88, %87 : vector<2x16x16xf32>
    %90 = arith.addf %77, %89 : vector<2x16x16xf32>
    %cst_23 = arith.constant -1.720320e-01 : f32
    %91 = vector.broadcast %cst_23 : f32 to vector<2x16x16xf32>
    %92 = arith.mulf %91, %87 : vector<2x16x16xf32>
    %93 = arith.addf %80, %92 : vector<2x16x16xf32>
    %cst_24 = arith.constant -0.0508365072 : f32
    %94 = vector.broadcast %cst_24 : f32 to vector<2x16x16xf32>
    %95 = arith.mulf %94, %87 : vector<2x16x16xf32>
    %96 = arith.addf %83, %95 : vector<2x16x16xf32>
    %cst_25 = arith.constant 0.0769182593 : f32
    %97 = vector.broadcast %cst_25 : f32 to vector<2x16x16xf32>
    %98 = arith.mulf %97, %87 : vector<2x16x16xf32>
    %99 = arith.addf %86, %98 : vector<2x16x16xf32>
    %100 = vector.extract_strided_slice %0 {offsets = [0, 0, 5], sizes = [2, 16, 16], strides = [1, 1, 1]} : vector<2x22x22xf32> to vector<2x16x16xf32>
    %cst_26 = arith.constant 4.668450e-03 : f32
    %101 = vector.broadcast %cst_26 : f32 to vector<2x16x16xf32>
    %102 = arith.mulf %101, %100 : vector<2x16x16xf32>
    %103 = arith.addf %90, %102 : vector<2x16x16xf32>
    %cst_27 = arith.constant 0.0185802113 : f32
    %104 = vector.broadcast %cst_27 : f32 to vector<2x16x16xf32>
    %105 = arith.mulf %104, %100 : vector<2x16x16xf32>
    %106 = arith.addf %93, %105 : vector<2x16x16xf32>
    %cst_28 = arith.constant 4.668450e-03 : f32
    %107 = vector.broadcast %cst_28 : f32 to vector<2x16x16xf32>
    %108 = arith.mulf %107, %100 : vector<2x16x16xf32>
    %109 = arith.addf %96, %108 : vector<2x16x16xf32>
    %cst_29 = arith.constant 0.0185802113 : f32
    %110 = vector.broadcast %cst_29 : f32 to vector<2x16x16xf32>
    %111 = arith.mulf %110, %100 : vector<2x16x16xf32>
    %112 = arith.addf %99, %111 : vector<2x16x16xf32>
    %113 = vector.extract_strided_slice %0 {offsets = [0, 0, 6], sizes = [2, 16, 16], strides = [1, 1, 1]} : vector<2x22x22xf32> to vector<2x16x16xf32>
    %cst_30 = arith.constant 4.668450e-03 : f32
    %114 = vector.broadcast %cst_30 : f32 to vector<2x16x16xf32>
    %115 = arith.mulf %114, %113 : vector<2x16x16xf32>
    %116 = arith.addf %103, %115 : vector<2x16x16xf32>
    %cst_31 = arith.constant 0.0185802113 : f32
    %117 = vector.broadcast %cst_31 : f32 to vector<2x16x16xf32>
    %118 = arith.mulf %117, %113 : vector<2x16x16xf32>
    %119 = arith.addf %106, %118 : vector<2x16x16xf32>
    %cst_32 = arith.constant 4.668450e-03 : f32
    %120 = vector.broadcast %cst_32 : f32 to vector<2x16x16xf32>
    %121 = arith.mulf %120, %113 : vector<2x16x16xf32>
    %122 = arith.addf %109, %121 : vector<2x16x16xf32>
    %cst_33 = arith.constant 0.0185802113 : f32
    %123 = vector.broadcast %cst_33 : f32 to vector<2x16x16xf32>
    %124 = arith.mulf %123, %113 : vector<2x16x16xf32>
    %125 = arith.addf %112, %124 : vector<2x16x16xf32>
    %126 = vector.extract_strided_slice %0 {offsets = [0, 1, 0], sizes = [2, 16, 16], strides = [1, 1, 1]} : vector<2x22x22xf32> to vector<2x16x16xf32>
    %cst_34 = arith.constant 4.668450e-03 : f32
    %127 = vector.broadcast %cst_34 : f32 to vector<2x16x16xf32>
    %128 = arith.mulf %127, %126 : vector<2x16x16xf32>
    %129 = arith.addf %116, %128 : vector<2x16x16xf32>
    %cst_35 = arith.constant 0.0185802113 : f32
    %130 = vector.broadcast %cst_35 : f32 to vector<2x16x16xf32>
    %131 = arith.mulf %130, %126 : vector<2x16x16xf32>
    %132 = arith.addf %119, %131 : vector<2x16x16xf32>
    %cst_36 = arith.constant 4.668450e-03 : f32
    %133 = vector.broadcast %cst_36 : f32 to vector<2x16x16xf32>
    %134 = arith.mulf %133, %126 : vector<2x16x16xf32>
    %135 = arith.addf %122, %134 : vector<2x16x16xf32>
    %cst_37 = arith.constant 0.0185802113 : f32
    %136 = vector.broadcast %cst_37 : f32 to vector<2x16x16xf32>
    %137 = arith.mulf %136, %126 : vector<2x16x16xf32>
    %138 = arith.addf %125, %137 : vector<2x16x16xf32>
    %139 = vector.extract_strided_slice %0 {offsets = [0, 1, 1], sizes = [2, 16, 16], strides = [1, 1, 1]} : vector<2x22x22xf32> to vector<2x16x16xf32>
    %cst_38 = arith.constant -0.186335534 : f32
    %140 = vector.broadcast %cst_38 : f32 to vector<2x16x16xf32>
    %141 = arith.mulf %140, %139 : vector<2x16x16xf32>
    %142 = arith.addf %129, %141 : vector<2x16x16xf32>
    %cst_39 = arith.constant 0.0775918141 : f32
    %143 = vector.broadcast %cst_39 : f32 to vector<2x16x16xf32>
    %144 = arith.mulf %143, %139 : vector<2x16x16xf32>
    %145 = arith.addf %132, %144 : vector<2x16x16xf32>
    %cst_40 = arith.constant -0.186335534 : f32
    %146 = vector.broadcast %cst_40 : f32 to vector<2x16x16xf32>
    %147 = arith.mulf %146, %139 : vector<2x16x16xf32>
    %148 = arith.addf %135, %147 : vector<2x16x16xf32>
    %cst_41 = arith.constant 0.281455636 : f32
    %149 = vector.broadcast %cst_41 : f32 to vector<2x16x16xf32>
    %150 = arith.mulf %149, %139 : vector<2x16x16xf32>
    %151 = arith.addf %138, %150 : vector<2x16x16xf32>
    %152 = vector.extract_strided_slice %0 {offsets = [0, 1, 2], sizes = [2, 16, 16], strides = [1, 1, 1]} : vector<2x22x22xf32> to vector<2x16x16xf32>
    %cst_42 = arith.constant -0.189652979 : f32
    %153 = vector.broadcast %cst_42 : f32 to vector<2x16x16xf32>
    %154 = arith.mulf %153, %152 : vector<2x16x16xf32>
    %155 = arith.addf %142, %154 : vector<2x16x16xf32>
    %cst_43 = arith.constant -0.143299758 : f32
    %156 = vector.broadcast %cst_43 : f32 to vector<2x16x16xf32>
    %157 = arith.mulf %156, %152 : vector<2x16x16xf32>
    %158 = arith.addf %145, %157 : vector<2x16x16xf32>
    %cst_44 = arith.constant -0.0524525195 : f32
    %159 = vector.broadcast %cst_44 : f32 to vector<2x16x16xf32>
    %160 = arith.mulf %159, %152 : vector<2x16x16xf32>
    %161 = arith.addf %148, %160 : vector<2x16x16xf32>
    %cst_45 = arith.constant 0.0957017168 : f32
    %162 = vector.broadcast %cst_45 : f32 to vector<2x16x16xf32>
    %163 = arith.mulf %162, %152 : vector<2x16x16xf32>
    %164 = arith.addf %151, %163 : vector<2x16x16xf32>
    %165 = vector.extract_strided_slice %0 {offsets = [0, 1, 3], sizes = [2, 16, 16], strides = [1, 1, 1]} : vector<2x22x22xf32> to vector<2x16x16xf32>
    %cst_46 = arith.constant -0.190771565 : f32
    %166 = vector.broadcast %cst_46 : f32 to vector<2x16x16xf32>
    %167 = arith.mulf %166, %165 : vector<2x16x16xf32>
    %168 = arith.addf %155, %167 : vector<2x16x16xf32>
    %cst_47 = arith.constant -0.178710788 : f32
    %169 = vector.broadcast %cst_47 : f32 to vector<2x16x16xf32>
    %170 = arith.mulf %169, %165 : vector<2x16x16xf32>
    %171 = arith.addf %158, %170 : vector<2x16x16xf32>
    %cst_48 = arith.constant 0.278272212 : f32
    %172 = vector.broadcast %cst_48 : f32 to vector<2x16x16xf32>
    %173 = arith.mulf %172, %165 : vector<2x16x16xf32>
    %174 = arith.addf %161, %173 : vector<2x16x16xf32>
    %cst_49 = arith.constant -0.178710788 : f32
    %175 = vector.broadcast %cst_49 : f32 to vector<2x16x16xf32>
    %176 = arith.mulf %175, %165 : vector<2x16x16xf32>
    %177 = arith.addf %164, %176 : vector<2x16x16xf32>
    %178 = vector.extract_strided_slice %0 {offsets = [0, 1, 4], sizes = [2, 16, 16], strides = [1, 1, 1]} : vector<2x22x22xf32> to vector<2x16x16xf32>
    %cst_50 = arith.constant -0.189652979 : f32
    %179 = vector.broadcast %cst_50 : f32 to vector<2x16x16xf32>
    %180 = arith.mulf %179, %178 : vector<2x16x16xf32>
    %181 = arith.addf %168, %180 : vector<2x16x16xf32>
    %cst_51 = arith.constant 0.0957017168 : f32
    %182 = vector.broadcast %cst_51 : f32 to vector<2x16x16xf32>
    %183 = arith.mulf %182, %178 : vector<2x16x16xf32>
    %184 = arith.addf %171, %183 : vector<2x16x16xf32>
    %cst_52 = arith.constant -0.0524525195 : f32
    %185 = vector.broadcast %cst_52 : f32 to vector<2x16x16xf32>
    %186 = arith.mulf %185, %178 : vector<2x16x16xf32>
    %187 = arith.addf %174, %186 : vector<2x16x16xf32>
    %cst_53 = arith.constant -0.143299758 : f32
    %188 = vector.broadcast %cst_53 : f32 to vector<2x16x16xf32>
    %189 = arith.mulf %188, %178 : vector<2x16x16xf32>
    %190 = arith.addf %177, %189 : vector<2x16x16xf32>
    %191 = vector.extract_strided_slice %0 {offsets = [0, 1, 5], sizes = [2, 16, 16], strides = [1, 1, 1]} : vector<2x22x22xf32> to vector<2x16x16xf32>
    %cst_54 = arith.constant -0.186335534 : f32
    %192 = vector.broadcast %cst_54 : f32 to vector<2x16x16xf32>
    %193 = arith.mulf %192, %191 : vector<2x16x16xf32>
    %194 = arith.addf %181, %193 : vector<2x16x16xf32>
    %cst_55 = arith.constant 0.281455636 : f32
    %195 = vector.broadcast %cst_55 : f32 to vector<2x16x16xf32>
    %196 = arith.mulf %195, %191 : vector<2x16x16xf32>
    %197 = arith.addf %184, %196 : vector<2x16x16xf32>
    %cst_56 = arith.constant -0.186335534 : f32
    %198 = vector.broadcast %cst_56 : f32 to vector<2x16x16xf32>
    %199 = arith.mulf %198, %191 : vector<2x16x16xf32>
    %200 = arith.addf %187, %199 : vector<2x16x16xf32>
    %cst_57 = arith.constant 0.0775918141 : f32
    %201 = vector.broadcast %cst_57 : f32 to vector<2x16x16xf32>
    %202 = arith.mulf %201, %191 : vector<2x16x16xf32>
    %203 = arith.addf %190, %202 : vector<2x16x16xf32>
    %204 = vector.extract_strided_slice %0 {offsets = [0, 1, 6], sizes = [2, 16, 16], strides = [1, 1, 1]} : vector<2x22x22xf32> to vector<2x16x16xf32>
    %cst_58 = arith.constant 4.668450e-03 : f32
    %205 = vector.broadcast %cst_58 : f32 to vector<2x16x16xf32>
    %206 = arith.mulf %205, %204 : vector<2x16x16xf32>
    %207 = arith.addf %194, %206 : vector<2x16x16xf32>
    %cst_59 = arith.constant 0.0185802113 : f32
    %208 = vector.broadcast %cst_59 : f32 to vector<2x16x16xf32>
    %209 = arith.mulf %208, %204 : vector<2x16x16xf32>
    %210 = arith.addf %197, %209 : vector<2x16x16xf32>
    %cst_60 = arith.constant 4.668450e-03 : f32
    %211 = vector.broadcast %cst_60 : f32 to vector<2x16x16xf32>
    %212 = arith.mulf %211, %204 : vector<2x16x16xf32>
    %213 = arith.addf %200, %212 : vector<2x16x16xf32>
    %cst_61 = arith.constant 0.0185802113 : f32
    %214 = vector.broadcast %cst_61 : f32 to vector<2x16x16xf32>
    %215 = arith.mulf %214, %204 : vector<2x16x16xf32>
    %216 = arith.addf %203, %215 : vector<2x16x16xf32>
    %217 = vector.extract_strided_slice %0 {offsets = [0, 2, 0], sizes = [2, 16, 16], strides = [1, 1, 1]} : vector<2x22x22xf32> to vector<2x16x16xf32>
    %cst_62 = arith.constant -0.0508365072 : f32
    %218 = vector.broadcast %cst_62 : f32 to vector<2x16x16xf32>
    %219 = arith.mulf %218, %217 : vector<2x16x16xf32>
    %220 = arith.addf %207, %219 : vector<2x16x16xf32>
    %cst_63 = arith.constant 0.0769182593 : f32
    %221 = vector.broadcast %cst_63 : f32 to vector<2x16x16xf32>
    %222 = arith.mulf %221, %217 : vector<2x16x16xf32>
    %223 = arith.addf %210, %222 : vector<2x16x16xf32>
    %cst_64 = arith.constant 0.102426723 : f32
    %224 = vector.broadcast %cst_64 : f32 to vector<2x16x16xf32>
    %225 = arith.mulf %224, %217 : vector<2x16x16xf32>
    %226 = arith.addf %213, %225 : vector<2x16x16xf32>
    %cst_65 = arith.constant -1.720320e-01 : f32
    %227 = vector.broadcast %cst_65 : f32 to vector<2x16x16xf32>
    %228 = arith.mulf %227, %217 : vector<2x16x16xf32>
    %229 = arith.addf %216, %228 : vector<2x16x16xf32>
    %230 = vector.extract_strided_slice %0 {offsets = [0, 2, 1], sizes = [2, 16, 16], strides = [1, 1, 1]} : vector<2x22x22xf32> to vector<2x16x16xf32>
    %cst_66 = arith.constant -0.0524525195 : f32
    %231 = vector.broadcast %cst_66 : f32 to vector<2x16x16xf32>
    %232 = arith.mulf %231, %230 : vector<2x16x16xf32>
    %233 = arith.addf %220, %232 : vector<2x16x16xf32>
    %cst_67 = arith.constant -0.143299758 : f32
    %234 = vector.broadcast %cst_67 : f32 to vector<2x16x16xf32>
    %235 = arith.mulf %234, %230 : vector<2x16x16xf32>
    %236 = arith.addf %223, %235 : vector<2x16x16xf32>
    %cst_68 = arith.constant -0.189652979 : f32
    %237 = vector.broadcast %cst_68 : f32 to vector<2x16x16xf32>
    %238 = arith.mulf %237, %230 : vector<2x16x16xf32>
    %239 = arith.addf %226, %238 : vector<2x16x16xf32>
    %cst_69 = arith.constant 0.0957017168 : f32
    %240 = vector.broadcast %cst_69 : f32 to vector<2x16x16xf32>
    %241 = arith.mulf %240, %230 : vector<2x16x16xf32>
    %242 = arith.addf %229, %241 : vector<2x16x16xf32>
    %243 = vector.extract_strided_slice %0 {offsets = [0, 2, 2], sizes = [2, 16, 16], strides = [1, 1, 1]} : vector<2x22x22xf32> to vector<2x16x16xf32>
    %cst_70 = arith.constant -0.0534446239 : f32
    %244 = vector.broadcast %cst_70 : f32 to vector<2x16x16xf32>
    %245 = arith.mulf %244, %243 : vector<2x16x16xf32>
    %246 = arith.addf %233, %245 : vector<2x16x16xf32>
    %cst_71 = arith.constant -0.180988669 : f32
    %247 = vector.broadcast %cst_71 : f32 to vector<2x16x16xf32>
    %248 = arith.mulf %247, %243 : vector<2x16x16xf32>
    %249 = arith.addf %236, %248 : vector<2x16x16xf32>
    %cst_72 = arith.constant -0.0534446239 : f32
    %250 = vector.broadcast %cst_72 : f32 to vector<2x16x16xf32>
    %251 = arith.mulf %250, %243 : vector<2x16x16xf32>
    %252 = arith.addf %239, %251 : vector<2x16x16xf32>
    %cst_73 = arith.constant 0.290666431 : f32
    %253 = vector.broadcast %cst_73 : f32 to vector<2x16x16xf32>
    %254 = arith.mulf %253, %243 : vector<2x16x16xf32>
    %255 = arith.addf %242, %254 : vector<2x16x16xf32>
    %256 = vector.extract_strided_slice %0 {offsets = [0, 2, 3], sizes = [2, 16, 16], strides = [1, 1, 1]} : vector<2x22x22xf32> to vector<2x16x16xf32>
    %cst_74 = arith.constant -0.0537791401 : f32
    %257 = vector.broadcast %cst_74 : f32 to vector<2x16x16xf32>
    %258 = arith.mulf %257, %256 : vector<2x16x16xf32>
    %259 = arith.addf %246, %258 : vector<2x16x16xf32>
    %cst_75 = arith.constant 0.0974928513 : f32
    %260 = vector.broadcast %cst_75 : f32 to vector<2x16x16xf32>
    %261 = arith.mulf %260, %256 : vector<2x16x16xf32>
    %262 = arith.addf %249, %261 : vector<2x16x16xf32>
    %cst_76 = arith.constant 0.283024281 : f32
    %263 = vector.broadcast %cst_76 : f32 to vector<2x16x16xf32>
    %264 = arith.mulf %263, %256 : vector<2x16x16xf32>
    %265 = arith.addf %252, %264 : vector<2x16x16xf32>
    %cst_77 = arith.constant 0.0974928513 : f32
    %266 = vector.broadcast %cst_77 : f32 to vector<2x16x16xf32>
    %267 = arith.mulf %266, %256 : vector<2x16x16xf32>
    %268 = arith.addf %255, %267 : vector<2x16x16xf32>
    %269 = vector.extract_strided_slice %0 {offsets = [0, 2, 4], sizes = [2, 16, 16], strides = [1, 1, 1]} : vector<2x22x22xf32> to vector<2x16x16xf32>
    %cst_78 = arith.constant -0.0534446239 : f32
    %270 = vector.broadcast %cst_78 : f32 to vector<2x16x16xf32>
    %271 = arith.mulf %270, %269 : vector<2x16x16xf32>
    %272 = arith.addf %259, %271 : vector<2x16x16xf32>
    %cst_79 = arith.constant 0.290666431 : f32
    %273 = vector.broadcast %cst_79 : f32 to vector<2x16x16xf32>
    %274 = arith.mulf %273, %269 : vector<2x16x16xf32>
    %275 = arith.addf %262, %274 : vector<2x16x16xf32>
    %cst_80 = arith.constant -0.0534446239 : f32
    %276 = vector.broadcast %cst_80 : f32 to vector<2x16x16xf32>
    %277 = arith.mulf %276, %269 : vector<2x16x16xf32>
    %278 = arith.addf %265, %277 : vector<2x16x16xf32>
    %cst_81 = arith.constant -0.180988669 : f32
    %279 = vector.broadcast %cst_81 : f32 to vector<2x16x16xf32>
    %280 = arith.mulf %279, %269 : vector<2x16x16xf32>
    %281 = arith.addf %268, %280 : vector<2x16x16xf32>
    %282 = vector.extract_strided_slice %0 {offsets = [0, 2, 5], sizes = [2, 16, 16], strides = [1, 1, 1]} : vector<2x22x22xf32> to vector<2x16x16xf32>
    %cst_82 = arith.constant -0.0524525195 : f32
    %283 = vector.broadcast %cst_82 : f32 to vector<2x16x16xf32>
    %284 = arith.mulf %283, %282 : vector<2x16x16xf32>
    %285 = arith.addf %272, %284 : vector<2x16x16xf32>
    %cst_83 = arith.constant 0.0957017168 : f32
    %286 = vector.broadcast %cst_83 : f32 to vector<2x16x16xf32>
    %287 = arith.mulf %286, %282 : vector<2x16x16xf32>
    %288 = arith.addf %275, %287 : vector<2x16x16xf32>
    %cst_84 = arith.constant -0.189652979 : f32
    %289 = vector.broadcast %cst_84 : f32 to vector<2x16x16xf32>
    %290 = arith.mulf %289, %282 : vector<2x16x16xf32>
    %291 = arith.addf %278, %290 : vector<2x16x16xf32>
    %cst_85 = arith.constant -0.143299758 : f32
    %292 = vector.broadcast %cst_85 : f32 to vector<2x16x16xf32>
    %293 = arith.mulf %292, %282 : vector<2x16x16xf32>
    %294 = arith.addf %281, %293 : vector<2x16x16xf32>
    %295 = vector.extract_strided_slice %0 {offsets = [0, 2, 6], sizes = [2, 16, 16], strides = [1, 1, 1]} : vector<2x22x22xf32> to vector<2x16x16xf32>
    %cst_86 = arith.constant -0.0508365072 : f32
    %296 = vector.broadcast %cst_86 : f32 to vector<2x16x16xf32>
    %297 = arith.mulf %296, %295 : vector<2x16x16xf32>
    %298 = arith.addf %285, %297 : vector<2x16x16xf32>
    %cst_87 = arith.constant -1.720320e-01 : f32
    %299 = vector.broadcast %cst_87 : f32 to vector<2x16x16xf32>
    %300 = arith.mulf %299, %295 : vector<2x16x16xf32>
    %301 = arith.addf %288, %300 : vector<2x16x16xf32>
    %cst_88 = arith.constant 0.102426723 : f32
    %302 = vector.broadcast %cst_88 : f32 to vector<2x16x16xf32>
    %303 = arith.mulf %302, %295 : vector<2x16x16xf32>
    %304 = arith.addf %291, %303 : vector<2x16x16xf32>
    %cst_89 = arith.constant 0.0769182593 : f32
    %305 = vector.broadcast %cst_89 : f32 to vector<2x16x16xf32>
    %306 = arith.mulf %305, %295 : vector<2x16x16xf32>
    %307 = arith.addf %294, %306 : vector<2x16x16xf32>
    %308 = vector.extract_strided_slice %0 {offsets = [0, 3, 0], sizes = [2, 16, 16], strides = [1, 1, 1]} : vector<2x22x22xf32> to vector<2x16x16xf32>
    %cst_90 = arith.constant 0.270531654 : f32
    %309 = vector.broadcast %cst_90 : f32 to vector<2x16x16xf32>
    %310 = arith.mulf %309, %308 : vector<2x16x16xf32>
    %311 = arith.addf %298, %310 : vector<2x16x16xf32>
    %cst_91 = arith.constant -0.139625475 : f32
    %312 = vector.broadcast %cst_91 : f32 to vector<2x16x16xf32>
    %313 = arith.mulf %312, %308 : vector<2x16x16xf32>
    %314 = arith.addf %301, %313 : vector<2x16x16xf32>
    %cst_92 = arith.constant 0.10298945 : f32
    %315 = vector.broadcast %cst_92 : f32 to vector<2x16x16xf32>
    %316 = arith.mulf %315, %308 : vector<2x16x16xf32>
    %317 = arith.addf %304, %316 : vector<2x16x16xf32>
    %cst_93 = arith.constant -0.139625475 : f32
    %318 = vector.broadcast %cst_93 : f32 to vector<2x16x16xf32>
    %319 = arith.mulf %318, %308 : vector<2x16x16xf32>
    %320 = arith.addf %307, %319 : vector<2x16x16xf32>
    %321 = vector.extract_strided_slice %0 {offsets = [0, 3, 1], sizes = [2, 16, 16], strides = [1, 1, 1]} : vector<2x22x22xf32> to vector<2x16x16xf32>
    %cst_94 = arith.constant 0.278272212 : f32
    %322 = vector.broadcast %cst_94 : f32 to vector<2x16x16xf32>
    %323 = arith.mulf %322, %321 : vector<2x16x16xf32>
    %324 = arith.addf %311, %323 : vector<2x16x16xf32>
    %cst_95 = arith.constant -0.178710788 : f32
    %325 = vector.broadcast %cst_95 : f32 to vector<2x16x16xf32>
    %326 = arith.mulf %325, %321 : vector<2x16x16xf32>
    %327 = arith.addf %314, %326 : vector<2x16x16xf32>
    %cst_96 = arith.constant -0.190771565 : f32
    %328 = vector.broadcast %cst_96 : f32 to vector<2x16x16xf32>
    %329 = arith.mulf %328, %321 : vector<2x16x16xf32>
    %330 = arith.addf %317, %329 : vector<2x16x16xf32>
    %cst_97 = arith.constant -0.178710788 : f32
    %331 = vector.broadcast %cst_97 : f32 to vector<2x16x16xf32>
    %332 = arith.mulf %331, %321 : vector<2x16x16xf32>
    %333 = arith.addf %320, %332 : vector<2x16x16xf32>
    %334 = vector.extract_strided_slice %0 {offsets = [0, 3, 2], sizes = [2, 16, 16], strides = [1, 1, 1]} : vector<2x22x22xf32> to vector<2x16x16xf32>
    %cst_98 = arith.constant 0.283024281 : f32
    %335 = vector.broadcast %cst_98 : f32 to vector<2x16x16xf32>
    %336 = arith.mulf %335, %334 : vector<2x16x16xf32>
    %337 = arith.addf %324, %336 : vector<2x16x16xf32>
    %cst_99 = arith.constant 0.0974928513 : f32
    %338 = vector.broadcast %cst_99 : f32 to vector<2x16x16xf32>
    %339 = arith.mulf %338, %334 : vector<2x16x16xf32>
    %340 = arith.addf %327, %339 : vector<2x16x16xf32>
    %cst_100 = arith.constant -0.0537791401 : f32
    %341 = vector.broadcast %cst_100 : f32 to vector<2x16x16xf32>
    %342 = arith.mulf %341, %334 : vector<2x16x16xf32>
    %343 = arith.addf %330, %342 : vector<2x16x16xf32>
    %cst_101 = arith.constant 0.0974928513 : f32
    %344 = vector.broadcast %cst_101 : f32 to vector<2x16x16xf32>
    %345 = arith.mulf %344, %334 : vector<2x16x16xf32>
    %346 = arith.addf %333, %345 : vector<2x16x16xf32>
    %347 = vector.extract_strided_slice %0 {offsets = [0, 3, 3], sizes = [2, 16, 16], strides = [1, 1, 1]} : vector<2x22x22xf32> to vector<2x16x16xf32>
    %cst_102 = arith.constant 0.284626603 : f32
    %348 = vector.broadcast %cst_102 : f32 to vector<2x16x16xf32>
    %349 = arith.mulf %348, %347 : vector<2x16x16xf32>
    %350 = arith.addf %337, %349 : vector<2x16x16xf32>
    %cst_103 = arith.constant 0.293807864 : f32
    %351 = vector.broadcast %cst_103 : f32 to vector<2x16x16xf32>
    %352 = arith.mulf %351, %347 : vector<2x16x16xf32>
    %353 = arith.addf %340, %352 : vector<2x16x16xf32>
    %cst_104 = arith.constant 0.284626603 : f32
    %354 = vector.broadcast %cst_104 : f32 to vector<2x16x16xf32>
    %355 = arith.mulf %354, %347 : vector<2x16x16xf32>
    %356 = arith.addf %343, %355 : vector<2x16x16xf32>
    %cst_105 = arith.constant 0.293807864 : f32
    %357 = vector.broadcast %cst_105 : f32 to vector<2x16x16xf32>
    %358 = arith.mulf %357, %347 : vector<2x16x16xf32>
    %359 = arith.addf %346, %358 : vector<2x16x16xf32>
    %360 = vector.extract_strided_slice %0 {offsets = [0, 3, 4], sizes = [2, 16, 16], strides = [1, 1, 1]} : vector<2x22x22xf32> to vector<2x16x16xf32>
    %cst_106 = arith.constant 0.283024281 : f32
    %361 = vector.broadcast %cst_106 : f32 to vector<2x16x16xf32>
    %362 = arith.mulf %361, %360 : vector<2x16x16xf32>
    %363 = arith.addf %350, %362 : vector<2x16x16xf32>
    %cst_107 = arith.constant 0.0974928513 : f32
    %364 = vector.broadcast %cst_107 : f32 to vector<2x16x16xf32>
    %365 = arith.mulf %364, %360 : vector<2x16x16xf32>
    %366 = arith.addf %353, %365 : vector<2x16x16xf32>
    %cst_108 = arith.constant -0.0537791401 : f32
    %367 = vector.broadcast %cst_108 : f32 to vector<2x16x16xf32>
    %368 = arith.mulf %367, %360 : vector<2x16x16xf32>
    %369 = arith.addf %356, %368 : vector<2x16x16xf32>
    %cst_109 = arith.constant 0.0974928513 : f32
    %370 = vector.broadcast %cst_109 : f32 to vector<2x16x16xf32>
    %371 = arith.mulf %370, %360 : vector<2x16x16xf32>
    %372 = arith.addf %359, %371 : vector<2x16x16xf32>
    %373 = vector.extract_strided_slice %0 {offsets = [0, 3, 5], sizes = [2, 16, 16], strides = [1, 1, 1]} : vector<2x22x22xf32> to vector<2x16x16xf32>
    %cst_110 = arith.constant 0.278272212 : f32
    %374 = vector.broadcast %cst_110 : f32 to vector<2x16x16xf32>
    %375 = arith.mulf %374, %373 : vector<2x16x16xf32>
    %376 = arith.addf %363, %375 : vector<2x16x16xf32>
    %cst_111 = arith.constant -0.178710788 : f32
    %377 = vector.broadcast %cst_111 : f32 to vector<2x16x16xf32>
    %378 = arith.mulf %377, %373 : vector<2x16x16xf32>
    %379 = arith.addf %366, %378 : vector<2x16x16xf32>
    %cst_112 = arith.constant -0.190771565 : f32
    %380 = vector.broadcast %cst_112 : f32 to vector<2x16x16xf32>
    %381 = arith.mulf %380, %373 : vector<2x16x16xf32>
    %382 = arith.addf %369, %381 : vector<2x16x16xf32>
    %cst_113 = arith.constant -0.178710788 : f32
    %383 = vector.broadcast %cst_113 : f32 to vector<2x16x16xf32>
    %384 = arith.mulf %383, %373 : vector<2x16x16xf32>
    %385 = arith.addf %372, %384 : vector<2x16x16xf32>
    %386 = vector.extract_strided_slice %0 {offsets = [0, 3, 6], sizes = [2, 16, 16], strides = [1, 1, 1]} : vector<2x22x22xf32> to vector<2x16x16xf32>
    %cst_114 = arith.constant 0.270531654 : f32
    %387 = vector.broadcast %cst_114 : f32 to vector<2x16x16xf32>
    %388 = arith.mulf %387, %386 : vector<2x16x16xf32>
    %389 = arith.addf %376, %388 : vector<2x16x16xf32>
    %cst_115 = arith.constant -0.139625475 : f32
    %390 = vector.broadcast %cst_115 : f32 to vector<2x16x16xf32>
    %391 = arith.mulf %390, %386 : vector<2x16x16xf32>
    %392 = arith.addf %379, %391 : vector<2x16x16xf32>
    %cst_116 = arith.constant 0.10298945 : f32
    %393 = vector.broadcast %cst_116 : f32 to vector<2x16x16xf32>
    %394 = arith.mulf %393, %386 : vector<2x16x16xf32>
    %395 = arith.addf %382, %394 : vector<2x16x16xf32>
    %cst_117 = arith.constant -0.139625475 : f32
    %396 = vector.broadcast %cst_117 : f32 to vector<2x16x16xf32>
    %397 = arith.mulf %396, %386 : vector<2x16x16xf32>
    %398 = arith.addf %385, %397 : vector<2x16x16xf32>
    %399 = vector.extract_strided_slice %0 {offsets = [0, 4, 0], sizes = [2, 16, 16], strides = [1, 1, 1]} : vector<2x22x22xf32> to vector<2x16x16xf32>
    %cst_118 = arith.constant -0.0508365072 : f32
    %400 = vector.broadcast %cst_118 : f32 to vector<2x16x16xf32>
    %401 = arith.mulf %400, %399 : vector<2x16x16xf32>
    %402 = arith.addf %389, %401 : vector<2x16x16xf32>
    %cst_119 = arith.constant -1.720320e-01 : f32
    %403 = vector.broadcast %cst_119 : f32 to vector<2x16x16xf32>
    %404 = arith.mulf %403, %399 : vector<2x16x16xf32>
    %405 = arith.addf %392, %404 : vector<2x16x16xf32>
    %cst_120 = arith.constant 0.102426723 : f32
    %406 = vector.broadcast %cst_120 : f32 to vector<2x16x16xf32>
    %407 = arith.mulf %406, %399 : vector<2x16x16xf32>
    %408 = arith.addf %395, %407 : vector<2x16x16xf32>
    %cst_121 = arith.constant 0.0769182593 : f32
    %409 = vector.broadcast %cst_121 : f32 to vector<2x16x16xf32>
    %410 = arith.mulf %409, %399 : vector<2x16x16xf32>
    %411 = arith.addf %398, %410 : vector<2x16x16xf32>
    %412 = vector.extract_strided_slice %0 {offsets = [0, 4, 1], sizes = [2, 16, 16], strides = [1, 1, 1]} : vector<2x22x22xf32> to vector<2x16x16xf32>
    %cst_122 = arith.constant -0.0524525195 : f32
    %413 = vector.broadcast %cst_122 : f32 to vector<2x16x16xf32>
    %414 = arith.mulf %413, %412 : vector<2x16x16xf32>
    %415 = arith.addf %402, %414 : vector<2x16x16xf32>
    %cst_123 = arith.constant 0.0957017168 : f32
    %416 = vector.broadcast %cst_123 : f32 to vector<2x16x16xf32>
    %417 = arith.mulf %416, %412 : vector<2x16x16xf32>
    %418 = arith.addf %405, %417 : vector<2x16x16xf32>
    %cst_124 = arith.constant -0.189652979 : f32
    %419 = vector.broadcast %cst_124 : f32 to vector<2x16x16xf32>
    %420 = arith.mulf %419, %412 : vector<2x16x16xf32>
    %421 = arith.addf %408, %420 : vector<2x16x16xf32>
    %cst_125 = arith.constant -0.143299758 : f32
    %422 = vector.broadcast %cst_125 : f32 to vector<2x16x16xf32>
    %423 = arith.mulf %422, %412 : vector<2x16x16xf32>
    %424 = arith.addf %411, %423 : vector<2x16x16xf32>
    %425 = vector.extract_strided_slice %0 {offsets = [0, 4, 2], sizes = [2, 16, 16], strides = [1, 1, 1]} : vector<2x22x22xf32> to vector<2x16x16xf32>
    %cst_126 = arith.constant -0.0534446239 : f32
    %426 = vector.broadcast %cst_126 : f32 to vector<2x16x16xf32>
    %427 = arith.mulf %426, %425 : vector<2x16x16xf32>
    %428 = arith.addf %415, %427 : vector<2x16x16xf32>
    %cst_127 = arith.constant 0.290666431 : f32
    %429 = vector.broadcast %cst_127 : f32 to vector<2x16x16xf32>
    %430 = arith.mulf %429, %425 : vector<2x16x16xf32>
    %431 = arith.addf %418, %430 : vector<2x16x16xf32>
    %cst_128 = arith.constant -0.0534446239 : f32
    %432 = vector.broadcast %cst_128 : f32 to vector<2x16x16xf32>
    %433 = arith.mulf %432, %425 : vector<2x16x16xf32>
    %434 = arith.addf %421, %433 : vector<2x16x16xf32>
    %cst_129 = arith.constant -0.180988669 : f32
    %435 = vector.broadcast %cst_129 : f32 to vector<2x16x16xf32>
    %436 = arith.mulf %435, %425 : vector<2x16x16xf32>
    %437 = arith.addf %424, %436 : vector<2x16x16xf32>
    %438 = vector.extract_strided_slice %0 {offsets = [0, 4, 3], sizes = [2, 16, 16], strides = [1, 1, 1]} : vector<2x22x22xf32> to vector<2x16x16xf32>
    %cst_130 = arith.constant -0.0537791401 : f32
    %439 = vector.broadcast %cst_130 : f32 to vector<2x16x16xf32>
    %440 = arith.mulf %439, %438 : vector<2x16x16xf32>
    %441 = arith.addf %428, %440 : vector<2x16x16xf32>
    %cst_131 = arith.constant 0.0974928513 : f32
    %442 = vector.broadcast %cst_131 : f32 to vector<2x16x16xf32>
    %443 = arith.mulf %442, %438 : vector<2x16x16xf32>
    %444 = arith.addf %431, %443 : vector<2x16x16xf32>
    %cst_132 = arith.constant 0.283024281 : f32
    %445 = vector.broadcast %cst_132 : f32 to vector<2x16x16xf32>
    %446 = arith.mulf %445, %438 : vector<2x16x16xf32>
    %447 = arith.addf %434, %446 : vector<2x16x16xf32>
    %cst_133 = arith.constant 0.0974928513 : f32
    %448 = vector.broadcast %cst_133 : f32 to vector<2x16x16xf32>
    %449 = arith.mulf %448, %438 : vector<2x16x16xf32>
    %450 = arith.addf %437, %449 : vector<2x16x16xf32>
    %451 = vector.extract_strided_slice %0 {offsets = [0, 4, 4], sizes = [2, 16, 16], strides = [1, 1, 1]} : vector<2x22x22xf32> to vector<2x16x16xf32>
    %cst_134 = arith.constant -0.0534446239 : f32
    %452 = vector.broadcast %cst_134 : f32 to vector<2x16x16xf32>
    %453 = arith.mulf %452, %451 : vector<2x16x16xf32>
    %454 = arith.addf %441, %453 : vector<2x16x16xf32>
    %cst_135 = arith.constant -0.180988669 : f32
    %455 = vector.broadcast %cst_135 : f32 to vector<2x16x16xf32>
    %456 = arith.mulf %455, %451 : vector<2x16x16xf32>
    %457 = arith.addf %444, %456 : vector<2x16x16xf32>
    %cst_136 = arith.constant -0.0534446239 : f32
    %458 = vector.broadcast %cst_136 : f32 to vector<2x16x16xf32>
    %459 = arith.mulf %458, %451 : vector<2x16x16xf32>
    %460 = arith.addf %447, %459 : vector<2x16x16xf32>
    %cst_137 = arith.constant 0.290666431 : f32
    %461 = vector.broadcast %cst_137 : f32 to vector<2x16x16xf32>
    %462 = arith.mulf %461, %451 : vector<2x16x16xf32>
    %463 = arith.addf %450, %462 : vector<2x16x16xf32>
    %464 = vector.extract_strided_slice %0 {offsets = [0, 4, 5], sizes = [2, 16, 16], strides = [1, 1, 1]} : vector<2x22x22xf32> to vector<2x16x16xf32>
    %cst_138 = arith.constant -0.0524525195 : f32
    %465 = vector.broadcast %cst_138 : f32 to vector<2x16x16xf32>
    %466 = arith.mulf %465, %464 : vector<2x16x16xf32>
    %467 = arith.addf %454, %466 : vector<2x16x16xf32>
    %cst_139 = arith.constant -0.143299758 : f32
    %468 = vector.broadcast %cst_139 : f32 to vector<2x16x16xf32>
    %469 = arith.mulf %468, %464 : vector<2x16x16xf32>
    %470 = arith.addf %457, %469 : vector<2x16x16xf32>
    %cst_140 = arith.constant -0.189652979 : f32
    %471 = vector.broadcast %cst_140 : f32 to vector<2x16x16xf32>
    %472 = arith.mulf %471, %464 : vector<2x16x16xf32>
    %473 = arith.addf %460, %472 : vector<2x16x16xf32>
    %cst_141 = arith.constant 0.0957017168 : f32
    %474 = vector.broadcast %cst_141 : f32 to vector<2x16x16xf32>
    %475 = arith.mulf %474, %464 : vector<2x16x16xf32>
    %476 = arith.addf %463, %475 : vector<2x16x16xf32>
    %477 = vector.extract_strided_slice %0 {offsets = [0, 4, 6], sizes = [2, 16, 16], strides = [1, 1, 1]} : vector<2x22x22xf32> to vector<2x16x16xf32>
    %cst_142 = arith.constant -0.0508365072 : f32
    %478 = vector.broadcast %cst_142 : f32 to vector<2x16x16xf32>
    %479 = arith.mulf %478, %477 : vector<2x16x16xf32>
    %480 = arith.addf %467, %479 : vector<2x16x16xf32>
    %cst_143 = arith.constant 0.0769182593 : f32
    %481 = vector.broadcast %cst_143 : f32 to vector<2x16x16xf32>
    %482 = arith.mulf %481, %477 : vector<2x16x16xf32>
    %483 = arith.addf %470, %482 : vector<2x16x16xf32>
    %cst_144 = arith.constant 0.102426723 : f32
    %484 = vector.broadcast %cst_144 : f32 to vector<2x16x16xf32>
    %485 = arith.mulf %484, %477 : vector<2x16x16xf32>
    %486 = arith.addf %473, %485 : vector<2x16x16xf32>
    %cst_145 = arith.constant -1.720320e-01 : f32
    %487 = vector.broadcast %cst_145 : f32 to vector<2x16x16xf32>
    %488 = arith.mulf %487, %477 : vector<2x16x16xf32>
    %489 = arith.addf %476, %488 : vector<2x16x16xf32>
    %490 = vector.extract_strided_slice %0 {offsets = [0, 5, 0], sizes = [2, 16, 16], strides = [1, 1, 1]} : vector<2x22x22xf32> to vector<2x16x16xf32>
    %cst_146 = arith.constant 4.668450e-03 : f32
    %491 = vector.broadcast %cst_146 : f32 to vector<2x16x16xf32>
    %492 = arith.mulf %491, %490 : vector<2x16x16xf32>
    %493 = arith.addf %480, %492 : vector<2x16x16xf32>
    %cst_147 = arith.constant 0.0185802113 : f32
    %494 = vector.broadcast %cst_147 : f32 to vector<2x16x16xf32>
    %495 = arith.mulf %494, %490 : vector<2x16x16xf32>
    %496 = arith.addf %483, %495 : vector<2x16x16xf32>
    %cst_148 = arith.constant 4.668450e-03 : f32
    %497 = vector.broadcast %cst_148 : f32 to vector<2x16x16xf32>
    %498 = arith.mulf %497, %490 : vector<2x16x16xf32>
    %499 = arith.addf %486, %498 : vector<2x16x16xf32>
    %cst_149 = arith.constant 0.0185802113 : f32
    %500 = vector.broadcast %cst_149 : f32 to vector<2x16x16xf32>
    %501 = arith.mulf %500, %490 : vector<2x16x16xf32>
    %502 = arith.addf %489, %501 : vector<2x16x16xf32>
    %503 = vector.extract_strided_slice %0 {offsets = [0, 5, 1], sizes = [2, 16, 16], strides = [1, 1, 1]} : vector<2x22x22xf32> to vector<2x16x16xf32>
    %cst_150 = arith.constant -0.186335534 : f32
    %504 = vector.broadcast %cst_150 : f32 to vector<2x16x16xf32>
    %505 = arith.mulf %504, %503 : vector<2x16x16xf32>
    %506 = arith.addf %493, %505 : vector<2x16x16xf32>
    %cst_151 = arith.constant 0.281455636 : f32
    %507 = vector.broadcast %cst_151 : f32 to vector<2x16x16xf32>
    %508 = arith.mulf %507, %503 : vector<2x16x16xf32>
    %509 = arith.addf %496, %508 : vector<2x16x16xf32>
    %cst_152 = arith.constant -0.186335534 : f32
    %510 = vector.broadcast %cst_152 : f32 to vector<2x16x16xf32>
    %511 = arith.mulf %510, %503 : vector<2x16x16xf32>
    %512 = arith.addf %499, %511 : vector<2x16x16xf32>
    %cst_153 = arith.constant 0.0775918141 : f32
    %513 = vector.broadcast %cst_153 : f32 to vector<2x16x16xf32>
    %514 = arith.mulf %513, %503 : vector<2x16x16xf32>
    %515 = arith.addf %502, %514 : vector<2x16x16xf32>
    %516 = vector.extract_strided_slice %0 {offsets = [0, 5, 2], sizes = [2, 16, 16], strides = [1, 1, 1]} : vector<2x22x22xf32> to vector<2x16x16xf32>
    %cst_154 = arith.constant -0.189652979 : f32
    %517 = vector.broadcast %cst_154 : f32 to vector<2x16x16xf32>
    %518 = arith.mulf %517, %516 : vector<2x16x16xf32>
    %519 = arith.addf %506, %518 : vector<2x16x16xf32>
    %cst_155 = arith.constant 0.0957017168 : f32
    %520 = vector.broadcast %cst_155 : f32 to vector<2x16x16xf32>
    %521 = arith.mulf %520, %516 : vector<2x16x16xf32>
    %522 = arith.addf %509, %521 : vector<2x16x16xf32>
    %cst_156 = arith.constant -0.0524525195 : f32
    %523 = vector.broadcast %cst_156 : f32 to vector<2x16x16xf32>
    %524 = arith.mulf %523, %516 : vector<2x16x16xf32>
    %525 = arith.addf %512, %524 : vector<2x16x16xf32>
    %cst_157 = arith.constant -0.143299758 : f32
    %526 = vector.broadcast %cst_157 : f32 to vector<2x16x16xf32>
    %527 = arith.mulf %526, %516 : vector<2x16x16xf32>
    %528 = arith.addf %515, %527 : vector<2x16x16xf32>
    %529 = vector.extract_strided_slice %0 {offsets = [0, 5, 3], sizes = [2, 16, 16], strides = [1, 1, 1]} : vector<2x22x22xf32> to vector<2x16x16xf32>
    %cst_158 = arith.constant -0.190771565 : f32
    %530 = vector.broadcast %cst_158 : f32 to vector<2x16x16xf32>
    %531 = arith.mulf %530, %529 : vector<2x16x16xf32>
    %532 = arith.addf %519, %531 : vector<2x16x16xf32>
    %cst_159 = arith.constant -0.178710788 : f32
    %533 = vector.broadcast %cst_159 : f32 to vector<2x16x16xf32>
    %534 = arith.mulf %533, %529 : vector<2x16x16xf32>
    %535 = arith.addf %522, %534 : vector<2x16x16xf32>
    %cst_160 = arith.constant 0.278272212 : f32
    %536 = vector.broadcast %cst_160 : f32 to vector<2x16x16xf32>
    %537 = arith.mulf %536, %529 : vector<2x16x16xf32>
    %538 = arith.addf %525, %537 : vector<2x16x16xf32>
    %cst_161 = arith.constant -0.178710788 : f32
    %539 = vector.broadcast %cst_161 : f32 to vector<2x16x16xf32>
    %540 = arith.mulf %539, %529 : vector<2x16x16xf32>
    %541 = arith.addf %528, %540 : vector<2x16x16xf32>
    %542 = vector.extract_strided_slice %0 {offsets = [0, 5, 4], sizes = [2, 16, 16], strides = [1, 1, 1]} : vector<2x22x22xf32> to vector<2x16x16xf32>
    %cst_162 = arith.constant -0.189652979 : f32
    %543 = vector.broadcast %cst_162 : f32 to vector<2x16x16xf32>
    %544 = arith.mulf %543, %542 : vector<2x16x16xf32>
    %545 = arith.addf %532, %544 : vector<2x16x16xf32>
    %cst_163 = arith.constant -0.143299758 : f32
    %546 = vector.broadcast %cst_163 : f32 to vector<2x16x16xf32>
    %547 = arith.mulf %546, %542 : vector<2x16x16xf32>
    %548 = arith.addf %535, %547 : vector<2x16x16xf32>
    %cst_164 = arith.constant -0.0524525195 : f32
    %549 = vector.broadcast %cst_164 : f32 to vector<2x16x16xf32>
    %550 = arith.mulf %549, %542 : vector<2x16x16xf32>
    %551 = arith.addf %538, %550 : vector<2x16x16xf32>
    %cst_165 = arith.constant 0.0957017168 : f32
    %552 = vector.broadcast %cst_165 : f32 to vector<2x16x16xf32>
    %553 = arith.mulf %552, %542 : vector<2x16x16xf32>
    %554 = arith.addf %541, %553 : vector<2x16x16xf32>
    %555 = vector.extract_strided_slice %0 {offsets = [0, 5, 5], sizes = [2, 16, 16], strides = [1, 1, 1]} : vector<2x22x22xf32> to vector<2x16x16xf32>
    %cst_166 = arith.constant -0.186335534 : f32
    %556 = vector.broadcast %cst_166 : f32 to vector<2x16x16xf32>
    %557 = arith.mulf %556, %555 : vector<2x16x16xf32>
    %558 = arith.addf %545, %557 : vector<2x16x16xf32>
    %cst_167 = arith.constant 0.0775918141 : f32
    %559 = vector.broadcast %cst_167 : f32 to vector<2x16x16xf32>
    %560 = arith.mulf %559, %555 : vector<2x16x16xf32>
    %561 = arith.addf %548, %560 : vector<2x16x16xf32>
    %cst_168 = arith.constant -0.186335534 : f32
    %562 = vector.broadcast %cst_168 : f32 to vector<2x16x16xf32>
    %563 = arith.mulf %562, %555 : vector<2x16x16xf32>
    %564 = arith.addf %551, %563 : vector<2x16x16xf32>
    %cst_169 = arith.constant 0.281455636 : f32
    %565 = vector.broadcast %cst_169 : f32 to vector<2x16x16xf32>
    %566 = arith.mulf %565, %555 : vector<2x16x16xf32>
    %567 = arith.addf %554, %566 : vector<2x16x16xf32>
    %568 = vector.extract_strided_slice %0 {offsets = [0, 5, 6], sizes = [2, 16, 16], strides = [1, 1, 1]} : vector<2x22x22xf32> to vector<2x16x16xf32>
    %cst_170 = arith.constant 4.668450e-03 : f32
    %569 = vector.broadcast %cst_170 : f32 to vector<2x16x16xf32>
    %570 = arith.mulf %569, %568 : vector<2x16x16xf32>
    %571 = arith.addf %558, %570 : vector<2x16x16xf32>
    %cst_171 = arith.constant 0.0185802113 : f32
    %572 = vector.broadcast %cst_171 : f32 to vector<2x16x16xf32>
    %573 = arith.mulf %572, %568 : vector<2x16x16xf32>
    %574 = arith.addf %561, %573 : vector<2x16x16xf32>
    %cst_172 = arith.constant 4.668450e-03 : f32
    %575 = vector.broadcast %cst_172 : f32 to vector<2x16x16xf32>
    %576 = arith.mulf %575, %568 : vector<2x16x16xf32>
    %577 = arith.addf %564, %576 : vector<2x16x16xf32>
    %cst_173 = arith.constant 0.0185802113 : f32
    %578 = vector.broadcast %cst_173 : f32 to vector<2x16x16xf32>
    %579 = arith.mulf %578, %568 : vector<2x16x16xf32>
    %580 = arith.addf %567, %579 : vector<2x16x16xf32>
    %581 = vector.extract_strided_slice %0 {offsets = [0, 6, 0], sizes = [2, 16, 16], strides = [1, 1, 1]} : vector<2x22x22xf32> to vector<2x16x16xf32>
    %cst_174 = arith.constant 4.668450e-03 : f32
    %582 = vector.broadcast %cst_174 : f32 to vector<2x16x16xf32>
    %583 = arith.mulf %582, %581 : vector<2x16x16xf32>
    %584 = arith.addf %571, %583 : vector<2x16x16xf32>
    %cst_175 = arith.constant 0.0185802113 : f32
    %585 = vector.broadcast %cst_175 : f32 to vector<2x16x16xf32>
    %586 = arith.mulf %585, %581 : vector<2x16x16xf32>
    %587 = arith.addf %574, %586 : vector<2x16x16xf32>
    %cst_176 = arith.constant 4.668450e-03 : f32
    %588 = vector.broadcast %cst_176 : f32 to vector<2x16x16xf32>
    %589 = arith.mulf %588, %581 : vector<2x16x16xf32>
    %590 = arith.addf %577, %589 : vector<2x16x16xf32>
    %cst_177 = arith.constant 0.0185802113 : f32
    %591 = vector.broadcast %cst_177 : f32 to vector<2x16x16xf32>
    %592 = arith.mulf %591, %581 : vector<2x16x16xf32>
    %593 = arith.addf %580, %592 : vector<2x16x16xf32>
    %594 = vector.extract_strided_slice %0 {offsets = [0, 6, 1], sizes = [2, 16, 16], strides = [1, 1, 1]} : vector<2x22x22xf32> to vector<2x16x16xf32>
    %cst_178 = arith.constant 4.668450e-03 : f32
    %595 = vector.broadcast %cst_178 : f32 to vector<2x16x16xf32>
    %596 = arith.mulf %595, %594 : vector<2x16x16xf32>
    %597 = arith.addf %584, %596 : vector<2x16x16xf32>
    %cst_179 = arith.constant 0.0185802113 : f32
    %598 = vector.broadcast %cst_179 : f32 to vector<2x16x16xf32>
    %599 = arith.mulf %598, %594 : vector<2x16x16xf32>
    %600 = arith.addf %587, %599 : vector<2x16x16xf32>
    %cst_180 = arith.constant 4.668450e-03 : f32
    %601 = vector.broadcast %cst_180 : f32 to vector<2x16x16xf32>
    %602 = arith.mulf %601, %594 : vector<2x16x16xf32>
    %603 = arith.addf %590, %602 : vector<2x16x16xf32>
    %cst_181 = arith.constant 0.0185802113 : f32
    %604 = vector.broadcast %cst_181 : f32 to vector<2x16x16xf32>
    %605 = arith.mulf %604, %594 : vector<2x16x16xf32>
    %606 = arith.addf %593, %605 : vector<2x16x16xf32>
    %607 = vector.extract_strided_slice %0 {offsets = [0, 6, 2], sizes = [2, 16, 16], strides = [1, 1, 1]} : vector<2x22x22xf32> to vector<2x16x16xf32>
    %cst_182 = arith.constant 0.102426723 : f32
    %608 = vector.broadcast %cst_182 : f32 to vector<2x16x16xf32>
    %609 = arith.mulf %608, %607 : vector<2x16x16xf32>
    %610 = arith.addf %597, %609 : vector<2x16x16xf32>
    %cst_183 = arith.constant -1.720320e-01 : f32
    %611 = vector.broadcast %cst_183 : f32 to vector<2x16x16xf32>
    %612 = arith.mulf %611, %607 : vector<2x16x16xf32>
    %613 = arith.addf %600, %612 : vector<2x16x16xf32>
    %cst_184 = arith.constant -0.0508365072 : f32
    %614 = vector.broadcast %cst_184 : f32 to vector<2x16x16xf32>
    %615 = arith.mulf %614, %607 : vector<2x16x16xf32>
    %616 = arith.addf %603, %615 : vector<2x16x16xf32>
    %cst_185 = arith.constant 0.0769182593 : f32
    %617 = vector.broadcast %cst_185 : f32 to vector<2x16x16xf32>
    %618 = arith.mulf %617, %607 : vector<2x16x16xf32>
    %619 = arith.addf %606, %618 : vector<2x16x16xf32>
    %620 = vector.extract_strided_slice %0 {offsets = [0, 6, 3], sizes = [2, 16, 16], strides = [1, 1, 1]} : vector<2x22x22xf32> to vector<2x16x16xf32>
    %cst_186 = arith.constant 0.10298945 : f32
    %621 = vector.broadcast %cst_186 : f32 to vector<2x16x16xf32>
    %622 = arith.mulf %621, %620 : vector<2x16x16xf32>
    %623 = arith.addf %610, %622 : vector<2x16x16xf32>
    %cst_187 = arith.constant -0.139625475 : f32
    %624 = vector.broadcast %cst_187 : f32 to vector<2x16x16xf32>
    %625 = arith.mulf %624, %620 : vector<2x16x16xf32>
    %626 = arith.addf %613, %625 : vector<2x16x16xf32>
    %cst_188 = arith.constant 0.270531654 : f32
    %627 = vector.broadcast %cst_188 : f32 to vector<2x16x16xf32>
    %628 = arith.mulf %627, %620 : vector<2x16x16xf32>
    %629 = arith.addf %616, %628 : vector<2x16x16xf32>
    %cst_189 = arith.constant -0.139625475 : f32
    %630 = vector.broadcast %cst_189 : f32 to vector<2x16x16xf32>
    %631 = arith.mulf %630, %620 : vector<2x16x16xf32>
    %632 = arith.addf %619, %631 : vector<2x16x16xf32>
    %633 = vector.extract_strided_slice %0 {offsets = [0, 6, 4], sizes = [2, 16, 16], strides = [1, 1, 1]} : vector<2x22x22xf32> to vector<2x16x16xf32>
    %cst_190 = arith.constant 0.102426723 : f32
    %634 = vector.broadcast %cst_190 : f32 to vector<2x16x16xf32>
    %635 = arith.mulf %634, %633 : vector<2x16x16xf32>
    %636 = arith.addf %623, %635 : vector<2x16x16xf32>
    %cst_191 = arith.constant 0.0769182593 : f32
    %637 = vector.broadcast %cst_191 : f32 to vector<2x16x16xf32>
    %638 = arith.mulf %637, %633 : vector<2x16x16xf32>
    %639 = arith.addf %626, %638 : vector<2x16x16xf32>
    %cst_192 = arith.constant -0.0508365072 : f32
    %640 = vector.broadcast %cst_192 : f32 to vector<2x16x16xf32>
    %641 = arith.mulf %640, %633 : vector<2x16x16xf32>
    %642 = arith.addf %629, %641 : vector<2x16x16xf32>
    %cst_193 = arith.constant -1.720320e-01 : f32
    %643 = vector.broadcast %cst_193 : f32 to vector<2x16x16xf32>
    %644 = arith.mulf %643, %633 : vector<2x16x16xf32>
    %645 = arith.addf %632, %644 : vector<2x16x16xf32>
    %646 = vector.extract_strided_slice %0 {offsets = [0, 6, 5], sizes = [2, 16, 16], strides = [1, 1, 1]} : vector<2x22x22xf32> to vector<2x16x16xf32>
    %cst_194 = arith.constant 4.668450e-03 : f32
    %647 = vector.broadcast %cst_194 : f32 to vector<2x16x16xf32>
    %648 = arith.mulf %647, %646 : vector<2x16x16xf32>
    %649 = arith.addf %636, %648 : vector<2x16x16xf32>
    %cst_195 = arith.constant 0.0185802113 : f32
    %650 = vector.broadcast %cst_195 : f32 to vector<2x16x16xf32>
    %651 = arith.mulf %650, %646 : vector<2x16x16xf32>
    %652 = arith.addf %639, %651 : vector<2x16x16xf32>
    %cst_196 = arith.constant 4.668450e-03 : f32
    %653 = vector.broadcast %cst_196 : f32 to vector<2x16x16xf32>
    %654 = arith.mulf %653, %646 : vector<2x16x16xf32>
    %655 = arith.addf %642, %654 : vector<2x16x16xf32>
    %cst_197 = arith.constant 0.0185802113 : f32
    %656 = vector.broadcast %cst_197 : f32 to vector<2x16x16xf32>
    %657 = arith.mulf %656, %646 : vector<2x16x16xf32>
    %658 = arith.addf %645, %657 : vector<2x16x16xf32>
    %659 = vector.extract_strided_slice %0 {offsets = [0, 6, 6], sizes = [2, 16, 16], strides = [1, 1, 1]} : vector<2x22x22xf32> to vector<2x16x16xf32>
    %cst_198 = arith.constant 4.668450e-03 : f32
    %660 = vector.broadcast %cst_198 : f32 to vector<2x16x16xf32>
    %661 = arith.mulf %660, %659 : vector<2x16x16xf32>
    %662 = arith.addf %649, %661 : vector<2x16x16xf32>
    %cst_199 = arith.constant 0.0185802113 : f32
    %663 = vector.broadcast %cst_199 : f32 to vector<2x16x16xf32>
    %664 = arith.mulf %663, %659 : vector<2x16x16xf32>
    %665 = arith.addf %652, %664 : vector<2x16x16xf32>
    %cst_200 = arith.constant 4.668450e-03 : f32
    %666 = vector.broadcast %cst_200 : f32 to vector<2x16x16xf32>
    %667 = arith.mulf %666, %659 : vector<2x16x16xf32>
    %668 = arith.addf %655, %667 : vector<2x16x16xf32>
    %cst_201 = arith.constant 0.0185802113 : f32
    %669 = vector.broadcast %cst_201 : f32 to vector<2x16x16xf32>
    %670 = arith.mulf %669, %659 : vector<2x16x16xf32>
    %671 = arith.addf %658, %670 : vector<2x16x16xf32>
    %672 = math.absf %662 : vector<2x16x16xf32>
    %673 = arith.mulf %672, %30 : vector<2x16x16xf32>
    %674 = vector.shape_cast %673 : vector<2x16x16xf32> to vector<2x1x16x16xf32>
    %c0_202 = arith.constant 0 : index
    %c0_203 = arith.constant 0 : index
    %c0_204 = arith.constant 0 : index
    %c0_205 = arith.constant 0 : index
    %675 = vector.load %arg2[%c0_202, %c0_203, %c0_204, %c0_205] : memref<2x4x16x16xf32, #tpu.memory_space<vmem>>, vector<2x1x16x16xf32>
    tpu.vector_store %arg2[%c0_202, %c0_203, %c0_204, %c0_205], %674 {strides = array<i32>} : memref<2x4x16x16xf32, #tpu.memory_space<vmem>>, vector<2x1x16x16xf32>,
    %676 = math.absf %665 : vector<2x16x16xf32>
    %677 = arith.mulf %676, %30 : vector<2x16x16xf32>
    %678 = vector.shape_cast %677 : vector<2x16x16xf32> to vector<2x1x16x16xf32>
    %c0_206 = arith.constant 0 : index
    %c1 = arith.constant 1 : index
    %c0_207 = arith.constant 0 : index
    %c0_208 = arith.constant 0 : index
    %679 = vector.load %arg2[%c0_206, %c1, %c0_207, %c0_208] : memref<2x4x16x16xf32, #tpu.memory_space<vmem>>, vector<2x1x16x16xf32>
    tpu.vector_store %arg2[%c0_206, %c1, %c0_207, %c0_208], %678 {strides = array<i32>} : memref<2x4x16x16xf32, #tpu.memory_space<vmem>>, vector<2x1x16x16xf32>,
    %680 = math.absf %668 : vector<2x16x16xf32>
    %681 = arith.mulf %680, %30 : vector<2x16x16xf32>
    %682 = vector.shape_cast %681 : vector<2x16x16xf32> to vector<2x1x16x16xf32>
    %c0_209 = arith.constant 0 : index
    %c2 = arith.constant 2 : index
    %c0_210 = arith.constant 0 : index
    %c0_211 = arith.constant 0 : index
    %683 = vector.load %arg2[%c0_209, %c2, %c0_210, %c0_211] : memref<2x4x16x16xf32, #tpu.memory_space<vmem>>, vector<2x1x16x16xf32>
    tpu.vector_store %arg2[%c0_209, %c2, %c0_210, %c0_211], %682 {strides = array<i32>} : memref<2x4x16x16xf32, #tpu.memory_space<vmem>>, vector<2x1x16x16xf32>,
    %684 = math.absf %671 : vector<2x16x16xf32>
    %685 = arith.mulf %684, %30 : vector<2x16x16xf32>
    %686 = vector.shape_cast %685 : vector<2x16x16xf32> to vector<2x1x16x16xf32>
    %c0_212 = arith.constant 0 : index
    %c3 = arith.constant 3 : index
    %c0_213 = arith.constant 0 : index
    %c0_214 = arith.constant 0 : index
    %687 = vector.load %arg2[%c0_212, %c3, %c0_213, %c0_214] : memref<2x4x16x16xf32, #tpu.memory_space<vmem>>, vector<2x1x16x16xf32>
    tpu.vector_store %arg2[%c0_212, %c3, %c0_213, %c0_214], %686 {strides = array<i32>} : memref<2x4x16x16xf32, #tpu.memory_space<vmem>>, vector<2x1x16x16xf32>,
    return
  }
  func.func @transform_0(%arg0: i32) -> (i32, i32, i32) {
    %c0_i32 = arith.constant 0 : i32
    %c0_i32_0 = arith.constant 0 : i32
    %c0_i32_1 = arith.constant 0 : i32
    return %arg0, %c0_i32, %c0_i32_0 : i32, i32, i32
  }
  func.func @transform_1(%arg0: i32) -> (i32, i32, i32, i32) {
    %c0_i32 = arith.constant 0 : i32
    %c0_i32_0 = arith.constant 0 : i32
    %c0_i32_1 = arith.constant 0 : i32
    %c0_i32_2 = arith.constant 0 : i32
    return %arg0, %c0_i32, %c0_i32_0, %c0_i32_1 : i32, i32, i32, i32
  }
}

</mosaic_0001>

<llo_original>
// kernel: tpu_custom_call.1
$region0: #{tpu_custom_call.1}
  #allocation0 [shape = 'u32[]', space=smem, size = 0x4, offset = 0x4, fixed_abs, tag = 'smem constant byte address 0x4 - core index']
  #allocation1 [shape = 'u32[144,128]{1,0:T(1,128)}', space=vmem, size = 0x12000, scoped, tag = 'internal scratch']
  %s0 = inlined_call_operand.vmem [shape: f32[2,22,22], index: 0, kind: input, shape index: {}]
  %s1 = inlined_call_operand.hbm [shape: f32[2,4,16,16], index: 1, kind: output, shape index: {}]
  %s2 = sld [smem:[#allocation0]]
  $region14: #{tpu_custom_call.1} parent=0
    _
  %s4 = ssub.s32 1, %s2
  %s5 = scalar_select 0, %s4, %s2
  $region1: #{tpu_custom_call.1} parent=0
    #allocation2 [shape = 'u8[65536]{0}', space=vmem, size = 0x10000, scoped, tag = 'output window, operand 0, single buffered']
    #allocation3 [shape = 's32[1]{0}', space=sflag, size = 0x4, scoped, tag = 'scoped memory for tpu_custom_call.1']
    %6 = vsyncpa [#allocation3], 0
    // Predicated region
    $region2: #{tpu_custom_call.1} parent=1 // pred_check
      _
    $region3: #{tpu_custom_call.1} parent=1 // pred_check_branch
      %8 = sbr.rel (0) target = $region5
    $region4: #{tpu_custom_call.1} parent=1 // pred_region
      _
    $region5: #{tpu_custom_call.1} parent=1 // pred_fallthru
      _
    %v9 = vld [vmem:[%s0] sm:$0xff]
    %v10 = vld [vmem:[%s0 + $0x8] sm:$0xff]
    %v11 = vld [vmem:[%s0 + $0x10] sm:$0x3f]
    %v12 = vld [vmem:[%s0 + $0x18] sm:$0xff]
    %v13 = vld [vmem:[%s0 + $0x20] sm:$0xff]
    %v14 = vld [vmem:[%s0 + $0x28] sm:$0x3f]
    %v15 = vmul.f32 %v9, %v9
    %v16 = vmul.f32 %v10, %v10
    %v17 = vmul.f32 %v11, %v11
    %v18 = vmul.f32 %v12, %v12
    %v19 = vmul.f32 %v13, %v13
    %v20 = vmul.f32 %v14, %v14
    %27 = vrot.lane.b32.xlu0 %v15, 127
    %v28 = vpop.permute.xlu0 %27
    %29 = vrot.lane.b32.xlu0 %v16, 127
    %v30 = vpop.permute.xlu0 %29
    %31 = vrot.lane.b32.xlu0 %v17, 127
    %v32 = vpop.permute.xlu0 %31
    %33 = vrot.lane.b32.xlu0 %v18, 127
    %v34 = vpop.permute.xlu0 %33
    %35 = vrot.lane.b32.xlu0 %v19, 127
    %v36 = vpop.permute.xlu0 %35
    %37 = vrot.lane.b32.xlu0 %v20, 127
    %v38 = vpop.permute.xlu0 %37
    %v45 = vadd.f32 %v15, %v28
    %v46 = vadd.f32 %v16, %v30
    %v47 = vadd.f32 %v17, %v32
    %v48 = vadd.f32 %v18, %v34
    %v49 = vadd.f32 %v19, %v36
    %v50 = vadd.f32 %v20, %v38
    %51 = vrot.lane.b32.xlu0 %v15, 126
    %v52 = vpop.permute.xlu0 %51
    %53 = vrot.lane.b32.xlu0 %v16, 126
    %v54 = vpop.permute.xlu0 %53
    %55 = vrot.lane.b32.xlu0 %v17, 126
    %v56 = vpop.permute.xlu0 %55
    %57 = vrot.lane.b32.xlu0 %v18, 126
    %v58 = vpop.permute.xlu0 %57
    %59 = vrot.lane.b32.xlu0 %v19, 126
    %v60 = vpop.permute.xlu0 %59
    %61 = vrot.lane.b32.xlu0 %v20, 126
    %v62 = vpop.permute.xlu0 %61
    %v69 = vadd.f32 %v45, %v52
    %v70 = vadd.f32 %v46, %v54
    %v71 = vadd.f32 %v47, %v56
    %v72 = vadd.f32 %v48, %v58
    %v73 = vadd.f32 %v49, %v60
    %v74 = vadd.f32 %v50, %v62
    %75 = vrot.lane.b32.xlu0 %v15, 125
    %v76 = vpop.permute.xlu0 %75
    %77 = vrot.lane.b32.xlu0 %v16, 125
    %v78 = vpop.permute.xlu0 %77
    %79 = vrot.lane.b32.xlu0 %v17, 125
    %v80 = vpop.permute.xlu0 %79
    %81 = vrot.lane.b32.xlu0 %v18, 125
    %v82 = vpop.permute.xlu0 %81
    %83 = vrot.lane.b32.xlu0 %v19, 125
    %v84 = vpop.permute.xlu0 %83
    %85 = vrot.lane.b32.xlu0 %v20, 125
    %v86 = vpop.permute.xlu0 %85
    %v93 = vadd.f32 %v69, %v76
    %v94 = vadd.f32 %v70, %v78
    %v95 = vadd.f32 %v71, %v80
    %v96 = vadd.f32 %v72, %v82
    %v97 = vadd.f32 %v73, %v84
    %v98 = vadd.f32 %v74, %v86
    %99 = vrot.lane.b32.xlu0 %v15, 124
    %v100 = vpop.permute.xlu0 %99
    %101 = vrot.lane.b32.xlu0 %v16, 124
    %v102 = vpop.permute.xlu0 %101
    %103 = vrot.lane.b32.xlu0 %v17, 124
    %v104 = vpop.permute.xlu0 %103
    %105 = vrot.lane.b32.xlu0 %v18, 124
    %v106 = vpop.permute.xlu0 %105
    %107 = vrot.lane.b32.xlu0 %v19, 124
    %v108 = vpop.permute.xlu0 %107
    %109 = vrot.lane.b32.xlu0 %v20, 124
    %v110 = vpop.permute.xlu0 %109
    %v117 = vadd.f32 %v93, %v100
    %v118 = vadd.f32 %v94, %v102
    %v119 = vadd.f32 %v95, %v104
    %v120 = vadd.f32 %v96, %v106
    %v121 = vadd.f32 %v97, %v108
    %v122 = vadd.f32 %v98, %v110
    %123 = vrot.lane.b32.xlu0 %v15, 123
    %v124 = vpop.permute.xlu0 %123
    %125 = vrot.lane.b32.xlu0 %v16, 123
    %v126 = vpop.permute.xlu0 %125
    %127 = vrot.lane.b32.xlu0 %v17, 123
    %v128 = vpop.permute.xlu0 %127
    %129 = vrot.lane.b32.xlu0 %v18, 123
    %v130 = vpop.permute.xlu0 %129
    %131 = vrot.lane.b32.xlu0 %v19, 123
    %v132 = vpop.permute.xlu0 %131
    %133 = vrot.lane.b32.xlu0 %v20, 123
    %v134 = vpop.permute.xlu0 %133
    %v141 = vadd.f32 %v117, %v124
    %v142 = vadd.f32 %v118, %v126
    %v143 = vadd.f32 %v119, %v128
    %v144 = vadd.f32 %v120, %v130
    %v145 = vadd.f32 %v121, %v132
    %v146 = vadd.f32 %v122, %v134
    %147 = vrot.lane.b32.xlu0 %v15, 122
    %v148 = vpop.permute.xlu0 %147
    %149 = vrot.lane.b32.xlu0 %v16, 122
    %v150 = vpop.permute.xlu0 %149
    %151 = vrot.lane.b32.xlu0 %v17, 122
    %v152 = vpop.permute.xlu0 %151
    %153 = vrot.lane.b32.xlu0 %v18, 122
    %v154 = vpop.permute.xlu0 %153
    %155 = vrot.lane.b32.xlu0 %v19, 122
    %v156 = vpop.permute.xlu0 %155
    %157 = vrot.lane.b32.xlu0 %v20, 122
    %v158 = vpop.permute.xlu0 %157
    %v165 = vadd.f32 %v141, %v148
    %v166 = vadd.f32 %v142, %v150
    %v167 = vadd.f32 %v143, %v152
    %v168 = vadd.f32 %v144, %v154
    %v169 = vadd.f32 %v145, %v156
    %v170 = vadd.f32 %v146, %v158
    %vm177 = vcmask 1046528
    %v178 = vrot.slane %v165, 1
    %v179 = vrot.slane %v166, 1
    %v180 = vsel %vm177, %v178, %v179
    %v181 = vrot.slane %v167, 1
    %v182 = vsel %vm177, %v179, %v181
    %v183 = vrot.slane %v168, 1
    %v184 = vrot.slane %v169, 1
    %v185 = vsel %vm177, %v183, %v184
    %v186 = vrot.slane %v170, 1
    %v187 = vsel %vm177, %v184, %v186
    %v192 = vadd.f32 %v165, %v180
    %v193 = vadd.f32 %v166, %v182
    %v194 = vadd.f32 %v168, %v185
    %v195 = vadd.f32 %v169, %v187
    %vm196 = vcmask 1045504
    %v197 = vrot.slane %v165, 2
    %v198 = vrot.slane %v166, 2
    %v199 = vsel %vm196, %v197, %v198
    %v200 = vrot.slane %v167, 2
    %v201 = vsel %vm196, %v198, %v200
    %v202 = vrot.slane %v168, 2
    %v203 = vrot.slane %v169, 2
    %v204 = vsel %vm196, %v202, %v203
    %v205 = vrot.slane %v170, 2
    %v206 = vsel %vm196, %v203, %v205
    %v211 = vadd.f32 %v192, %v199
    %v212 = vadd.f32 %v193, %v201
    %v213 = vadd.f32 %v194, %v204
    %v214 = vadd.f32 %v195, %v206
    %vm215 = vcmask 1044480
    %v216 = vrot.slane %v165, 3
    %v217 = vrot.slane %v166, 3
    %v218 = vsel %vm215, %v216, %v217
    %v219 = vrot.slane %v167, 3
    %v220 = vsel %vm215, %v217, %v219
    %v221 = vrot.slane %v168, 3
    %v222 = vrot.slane %v169, 3
    %v223 = vsel %vm215, %v221, %v222
    %v224 = vrot.slane %v170, 3
    %v225 = vsel %vm215, %v222, %v224
    %v230 = vadd.f32 %v211, %v218
    %v231 = vadd.f32 %v212, %v220
    %v232 = vadd.f32 %v213, %v223
    %v233 = vadd.f32 %v214, %v225
    %vm234 = vcmask 1043456
    %v235 = vrot.slane %v165, 4
    %v236 = vrot.slane %v166, 4
    %v237 = vsel %vm234, %v235, %v236
    %v238 = vrot.slane %v167, 4
    %v239 = vsel %vm234, %v236, %v238
    %v240 = vrot.slane %v168, 4
    %v241 = vrot.slane %v169, 4
    %v242 = vsel %vm234, %v240, %v241
    %v243 = vrot.slane %v170, 4
    %v244 = vsel %vm234, %v241, %v243
    %v249 = vadd.f32 %v230, %v237
    %v250 = vadd.f32 %v231, %v239
    %v251 = vadd.f32 %v232, %v242
    %v252 = vadd.f32 %v233, %v244
    %vm253 = vcmask 1042432
    %v254 = vrot.slane %v165, 5
    %v255 = vrot.slane %v166, 5
    %v256 = vsel %vm253, %v254, %v255
    %v257 = vrot.slane %v167, 5
    %v258 = vsel %vm253, %v255, %v257
    %v259 = vrot.slane %v168, 5
    %v260 = vrot.slane %v169, 5
    %v261 = vsel %vm253, %v259, %v260
    %v262 = vrot.slane %v170, 5
    %v263 = vsel %vm253, %v260, %v262
    %v268 = vadd.f32 %v249, %v256
    %v269 = vadd.f32 %v250, %v258
    %v270 = vadd.f32 %v251, %v261
    %v271 = vadd.f32 %v252, %v263
    %vm272 = vcmask 1041408
    %v273 = vrot.slane %v165, 6
    %v274 = vrot.slane %v166, 6
    %v275 = vsel %vm272, %v273, %v274
    %v276 = vrot.slane %v167, 6
    %v277 = vsel %vm272, %v274, %v276
    %v278 = vrot.slane %v168, 6
    %v279 = vrot.slane %v169, 6
    %v280 = vsel %vm272, %v278, %v279
    %v281 = vrot.slane %v170, 6
    %v282 = vsel %vm272, %v279, %v281
    %v287 = vadd.f32 %v268, %v275
    %v288 = vadd.f32 %v269, %v277
    %v289 = vadd.f32 %v270, %v280
    %v290 = vadd.f32 %v271, %v282
    %v291 = vadd.f32 %v287, 1e-10
    %v292 = vadd.f32 %v288, 1e-10
    %v293 = vadd.f32 %v289, 1e-10
    %v294 = vadd.f32 %v290, 1e-10
    %v295 = vrsqrt.pop %v291
    %v296 = vrsqrt.pop %v292
    %v297 = vrsqrt.pop %v293
    %v298 = vrsqrt.pop %v294
    %v299 = vmul.f32 %v9, 0.00466845
    %v300 = vmul.f32 %v10, 0.00466845
    %v301 = vmul.f32 %v12, 0.00466845
    %v302 = vmul.f32 %v13, 0.00466845
    %v303 = vadd.f32 %v299, 0.0
    %v304 = vadd.f32 %v300, 0.0
    %v305 = vadd.f32 %v301, 0.0
    %v306 = vadd.f32 %v302, 0.0
    %v307 = vmul.f32 %v9, 0.018580211
    %v308 = vmul.f32 %v10, 0.018580211
    %v309 = vmul.f32 %v12, 0.018580211
    %v310 = vmul.f32 %v13, 0.018580211
    %v311 = vadd.f32 %v307, 0.0
    %v312 = vadd.f32 %v308, 0.0
    %v313 = vadd.f32 %v309, 0.0
    %v314 = vadd.f32 %v310, 0.0
    %319 = vrot.lane.b32.xlu0 %v299, 127
    %v320 = vpop.permute.xlu0 %319
    %321 = vrot.lane.b32.xlu0 %v300, 127
    %v322 = vpop.permute.xlu0 %321
    %323 = vrot.lane.b32.xlu0 %v301, 127
    %v324 = vpop.permute.xlu0 %323
    %325 = vrot.lane.b32.xlu0 %v302, 127
    %v326 = vpop.permute.xlu0 %325
    %v331 = vadd.f32 %v303, %v320
    %v332 = vadd.f32 %v304, %v322
    %v333 = vadd.f32 %v305, %v324
    %v334 = vadd.f32 %v306, %v326
    %339 = vrot.lane.b32.xlu0 %v307, 127
    %v340 = vpop.permute.xlu0 %339
    %341 = vrot.lane.b32.xlu0 %v308, 127
    %v342 = vpop.permute.xlu0 %341
    %343 = vrot.lane.b32.xlu0 %v309, 127
    %v344 = vpop.permute.xlu0 %343
    %345 = vrot.lane.b32.xlu0 %v310, 127
    %v346 = vpop.permute.xlu0 %345
    %v351 = vadd.f32 %v311, %v340
    %v352 = vadd.f32 %v312, %v342
    %v353 = vadd.f32 %v313, %v344
    %v354 = vadd.f32 %v314, %v346
    %v355 = vmul.f32 %v9, 0.10242672
    %v356 = vmul.f32 %v10, 0.10242672
    %v357 = vmul.f32 %v12, 0.10242672
    %v358 = vmul.f32 %v13, 0.10242672
    %363 = vrot.lane.b32.xlu0 %v355, 126
    %v364 = vpop.permute.xlu0 %363
    %365 = vrot.lane.b32.xlu0 %v356, 126
    %v366 = vpop.permute.xlu0 %365
    %367 = vrot.lane.b32.xlu0 %v357, 126
    %v368 = vpop.permute.xlu0 %367
    %369 = vrot.lane.b32.xlu0 %v358, 126
    %v370 = vpop.permute.xlu0 %369
    %v375 = vadd.f32 %v331, %v364
    %v376 = vadd.f32 %v332, %v366
    %v377 = vadd.f32 %v333, %v368
    %v378 = vadd.f32 %v334, %v370
    %v379 = vmul.f32 %v9, 0.07691826
    %v380 = vmul.f32 %v10, 0.07691826
    %v381 = vmul.f32 %v12, 0.07691826
    %v382 = vmul.f32 %v13, 0.07691826
    %387 = vrot.lane.b32.xlu0 %v379, 126
    %v388 = vpop.permute.xlu0 %387
    %389 = vrot.lane.b32.xlu0 %v380, 126
    %v390 = vpop.permute.xlu0 %389
    %391 = vrot.lane.b32.xlu0 %v381, 126
    %v392 = vpop.permute.xlu0 %391
    %393 = vrot.lane.b32.xlu0 %v382, 126
    %v394 = vpop.permute.xlu0 %393
    %v399 = vadd.f32 %v351, %v388
    %v400 = vadd.f32 %v352, %v390
    %v401 = vadd.f32 %v353, %v392
    %v402 = vadd.f32 %v354, %v394
    %v403 = vmul.f32 %v9, -0.050836507
    %v404 = vmul.f32 %v10, -0.050836507
    %v405 = vmul.f32 %v12, -0.050836507
    %v406 = vmul.f32 %v13, -0.050836507
    %411 = vrot.lane.b32.xlu0 %v403, 126
    %v412 = vpop.permute.xlu0 %411
    %413 = vrot.lane.b32.xlu0 %v404, 126
    %v414 = vpop.permute.xlu0 %413
    %415 = vrot.lane.b32.xlu0 %v405, 126
    %v416 = vpop.permute.xlu0 %415
    %417 = vrot.lane.b32.xlu0 %v406, 126
    %v418 = vpop.permute.xlu0 %417
    %v423 = vadd.f32 %v331, %v412
    %v424 = vadd.f32 %v332, %v414
    %v425 = vadd.f32 %v333, %v416
    %v426 = vadd.f32 %v334, %v418
    %v427 = vmul.f32 %v9, -0.172032
    %v428 = vmul.f32 %v10, -0.172032
    %v429 = vmul.f32 %v12, -0.172032
    %v430 = vmul.f32 %v13, -0.172032
    %435 = vrot.lane.b32.xlu0 %v427, 126
    %v436 = vpop.permute.xlu0 %435
    %437 = vrot.lane.b32.xlu0 %v428, 126
    %v438 = vpop.permute.xlu0 %437
    %439 = vrot.lane.b32.xlu0 %v429, 126
    %v440 = vpop.permute.xlu0 %439
    %441 = vrot.lane.b32.xlu0 %v430, 126
    %v442 = vpop.permute.xlu0 %441
    %v447 = vadd.f32 %v351, %v436
    %v448 = vadd.f32 %v352, %v438
    %v449 = vadd.f32 %v353, %v440
    %v450 = vadd.f32 %v354, %v442
    %v451 = vmul.f32 %v9, 0.10298945
    %v452 = vmul.f32 %v10, 0.10298945
    %v453 = vmul.f32 %v12, 0.10298945
    %v454 = vmul.f32 %v13, 0.10298945
    %459 = vrot.lane.b32.xlu0 %v451, 125
    %v460 = vpop.permute.xlu0 %459
    %461 = vrot.lane.b32.xlu0 %v452, 125
    %v462 = vpop.permute.xlu0 %461
    %463 = vrot.lane.b32.xlu0 %v453, 125
    %v464 = vpop.permute.xlu0 %463
    %465 = vrot.lane.b32.xlu0 %v454, 125
    %v466 = vpop.permute.xlu0 %465
    %v471 = vadd.f32 %v375, %v460
    %v472 = vadd.f32 %v376, %v462
    %v473 = vadd.f32 %v377, %v464
    %v474 = vadd.f32 %v378, %v466
    %v475 = vmul.f32 %v9, -0.13962547
    %v476 = vmul.f32 %v10, -0.13962547
    %v477 = vmul.f32 %v12, -0.13962547
    %v478 = vmul.f32 %v13, -0.13962547
    %483 = vrot.lane.b32.xlu0 %v475, 125
    %v484 = vpop.permute.xlu0 %483
    %485 = vrot.lane.b32.xlu0 %v476, 125
    %v486 = vpop.permute.xlu0 %485
    %487 = vrot.lane.b32.xlu0 %v477, 125
    %v488 = vpop.permute.xlu0 %487
    %489 = vrot.lane.b32.xlu0 %v478, 125
    %v490 = vpop.permute.xlu0 %489
    %v495 = vadd.f32 %v399, %v484
    %v496 = vadd.f32 %v400, %v486
    %v497 = vadd.f32 %v401, %v488
    %v498 = vadd.f32 %v402, %v490
    %v499 = vmul.f32 %v9, 0.27053165
    %v500 = vmul.f32 %v10, 0.27053165
    %v501 = vmul.f32 %v12, 0.27053165
    %v502 = vmul.f32 %v13, 0.27053165
    %507 = vrot.lane.b32.xlu0 %v499, 125
    %v508 = vpop.permute.xlu0 %507
    %509 = vrot.lane.b32.xlu0 %v500, 125
    %v510 = vpop.permute.xlu0 %509
    %511 = vrot.lane.b32.xlu0 %v501, 125
    %v512 = vpop.permute.xlu0 %511
    %513 = vrot.lane.b32.xlu0 %v502, 125
    %v514 = vpop.permute.xlu0 %513
    %v519 = vadd.f32 %v423, %v508
    %v520 = vadd.f32 %v424, %v510
    %v521 = vadd.f32 %v425, %v512
    %v522 = vadd.f32 %v426, %v514
    %v523 = vadd.f32 %v447, %v484
    %v524 = vadd.f32 %v448, %v486
    %v525 = vadd.f32 %v449, %v488
    %v526 = vadd.f32 %v450, %v490
    %527 = vrot.lane.b32.xlu0 %v355, 124
    %v528 = vpop.permute.xlu0 %527
    %529 = vrot.lane.b32.xlu0 %v356, 124
    %v530 = vpop.permute.xlu0 %529
    %531 = vrot.lane.b32.xlu0 %v357, 124
    %v532 = vpop.permute.xlu0 %531
    %533 = vrot.lane.b32.xlu0 %v358, 124
    %v534 = vpop.permute.xlu0 %533
    %v539 = vadd.f32 %v471, %v528
    %v540 = vadd.f32 %v472, %v530
    %v541 = vadd.f32 %v473, %v532
    %v542 = vadd.f32 %v474, %v534
    %543 = vrot.lane.b32.xlu0 %v427, 124
    %v544 = vpop.permute.xlu0 %543
    %545 = vrot.lane.b32.xlu0 %v428, 124
    %v546 = vpop.permute.xlu0 %545
    %547 = vrot.lane.b32.xlu0 %v429, 124
    %v548 = vpop.permute.xlu0 %547
    %549 = vrot.lane.b32.xlu0 %v430, 124
    %v550 = vpop.permute.xlu0 %549
    %v555 = vadd.f32 %v495, %v544
    %v556 = vadd.f32 %v496, %v546
    %v557 = vadd.f32 %v497, %v548
    %v558 = vadd.f32 %v498, %v550
    %559 = vrot.lane.b32.xlu0 %v403, 124
    %v560 = vpop.permute.xlu0 %559
    %561 = vrot.lane.b32.xlu0 %v404, 124
    %v562 = vpop.permute.xlu0 %561
    %563 = vrot.lane.b32.xlu0 %v405, 124
    %v564 = vpop.permute.xlu0 %563
    %565 = vrot.lane.b32.xlu0 %v406, 124
    %v566 = vpop.permute.xlu0 %565
    %v571 = vadd.f32 %v519, %v560
    %v572 = vadd.f32 %v520, %v562
    %v573 = vadd.f32 %v521, %v564
    %v574 = vadd.f32 %v522, %v566
    %575 = vrot.lane.b32.xlu0 %v379, 124
    %v576 = vpop.permute.xlu0 %575
    %577 = vrot.lane.b32.xlu0 %v380, 124
    %v578 = vpop.permute.xlu0 %577
    %579 = vrot.lane.b32.xlu0 %v381, 124
    %v580 = vpop.permute.xlu0 %579
    %581 = vrot.lane.b32.xlu0 %v382, 124
    %v582 = vpop.permute.xlu0 %581
    %v587 = vadd.f32 %v523, %v576
    %v588 = vadd.f32 %v524, %v578
    %v589 = vadd.f32 %v525, %v580
    %v590 = vadd.f32 %v526, %v582
    %591 = vrot.lane.b32.xlu0 %v299, 123
    %v592 = vpop.permute.xlu0 %591
    %593 = vrot.lane.b32.xlu0 %v300, 123
    %v594 = vpop.permute.xlu0 %593
    %595 = vrot.lane.b32.xlu0 %v301, 123
    %v596 = vpop.permute.xlu0 %595
    %597 = vrot.lane.b32.xlu0 %v302, 123
    %v598 = vpop.permute.xlu0 %597
    %v603 = vadd.f32 %v539, %v592
    %v604 = vadd.f32 %v540, %v594
    %v605 = vadd.f32 %v541, %v596
    %v606 = vadd.f32 %v542, %v598
    %607 = vrot.lane.b32.xlu0 %v307, 123
    %v608 = vpop.permute.xlu0 %607
    %609 = vrot.lane.b32.xlu0 %v308, 123
    %v610 = vpop.permute.xlu0 %609
    %611 = vrot.lane.b32.xlu0 %v309, 123
    %v612 = vpop.permute.xlu0 %611
    %613 = vrot.lane.b32.xlu0 %v310, 123
    %v614 = vpop.permute.xlu0 %613
    %v619 = vadd.f32 %v555, %v608
    %v620 = vadd.f32 %v556, %v610
    %v621 = vadd.f32 %v557, %v612
    %v622 = vadd.f32 %v558, %v614
    %v623 = vadd.f32 %v571, %v592
    %v624 = vadd.f32 %v572, %v594
    %v625 = vadd.f32 %v573, %v596
    %v626 = vadd.f32 %v574, %v598
    %v627 = vadd.f32 %v587, %v608
    %v628 = vadd.f32 %v588, %v610
    %v629 = vadd.f32 %v589, %v612
    %v630 = vadd.f32 %v590, %v614
    %631 = vrot.lane.b32.xlu0 %v299, 122
    %v632 = vpop.permute.xlu0 %631
    %633 = vrot.lane.b32.xlu0 %v300, 122
    %v634 = vpop.permute.xlu0 %633
    %635 = vrot.lane.b32.xlu0 %v301, 122
    %v636 = vpop.permute.xlu0 %635
    %637 = vrot.lane.b32.xlu0 %v302, 122
    %v638 = vpop.permute.xlu0 %637
    %v643 = vadd.f32 %v603, %v632
    %v644 = vadd.f32 %v604, %v634
    %v645 = vadd.f32 %v605, %v636
    %v646 = vadd.f32 %v606, %v638
    %647 = vrot.lane.b32.xlu0 %v307, 122
    %v648 = vpop.permute.xlu0 %647
    %649 = vrot.lane.b32.xlu0 %v308, 122
    %v650 = vpop.permute.xlu0 %649
    %651 = vrot.lane.b32.xlu0 %v309, 122
    %v652 = vpop.permute.xlu0 %651
    %653 = vrot.lane.b32.xlu0 %v310, 122
    %v654 = vpop.permute.xlu0 %653
    %v659 = vadd.f32 %v619, %v648
    %v660 = vadd.f32 %v620, %v650
    %v661 = vadd.f32 %v621, %v652
    %v662 = vadd.f32 %v622, %v654
    %v663 = vadd.f32 %v623, %v632
    %v664 = vadd.f32 %v624, %v634
    %v665 = vadd.f32 %v625, %v636
    %v666 = vadd.f32 %v626, %v638
    %v667 = vadd.f32 %v627, %v648
    %v668 = vadd.f32 %v628, %v650
    %v669 = vadd.f32 %v629, %v652
    %v670 = vadd.f32 %v630, %v654
    %v671 = vmul.f32 %v11, 0.00466845
    %v672 = vmul.f32 %v14, 0.00466845
    %v675 = vrot.slane %v299, 1
    %v676 = vrot.slane %v300, 1
    %v677 = vsel %vm177, %v675, %v676
    %v678 = vrot.slane %v671, 1
    %v679 = vsel %vm177, %v676, %v678
    %v680 = vrot.slane %v301, 1
    %v681 = vrot.slane %v302, 1
    %v682 = vsel %vm177, %v680, %v681
    %v683 = vrot.slane %v672, 1
    %v684 = vsel %vm177, %v681, %v683
    %v689 = vadd.f32 %v643, %v677
    %v690 = vadd.f32 %v644, %v679
    %v691 = vadd.f32 %v645, %v682
    %v692 = vadd.f32 %v646, %v684
    %v693 = vmul.f32 %v11, 0.018580211
    %v694 = vmul.f32 %v14, 0.018580211
    %v697 = vrot.slane %v307, 1
    %v698 = vrot.slane %v308, 1
    %v699 = vsel %vm177, %v697, %v698
    %v700 = vrot.slane %v693, 1
    %v701 = vsel %vm177, %v698, %v700
    %v702 = vrot.slane %v309, 1
    %v703 = vrot.slane %v310, 1
    %v704 = vsel %vm177, %v702, %v703
    %v705 = vrot.slane %v694, 1
    %v706 = vsel %vm177, %v703, %v705
    %v711 = vadd.f32 %v659, %v699
    %v712 = vadd.f32 %v660, %v701
    %v713 = vadd.f32 %v661, %v704
    %v714 = vadd.f32 %v662, %v706
    %v715 = vadd.f32 %v663, %v677
    %v716 = vadd.f32 %v664, %v679
    %v717 = vadd.f32 %v665, %v682
    %v718 = vadd.f32 %v666, %v684
    %v719 = vadd.f32 %v667, %v699
    %v720 = vadd.f32 %v668, %v701
    %v721 = vadd.f32 %v669, %v704
    %v722 = vadd.f32 %v670, %v706
    %v723 = vmul.f32 %v9, -0.18633553
    %v724 = vmul.f32 %v10, -0.18633553
    %v725 = vmul.f32 %v11, -0.18633553
    %v726 = vmul.f32 %v12, -0.18633553
    %v727 = vmul.f32 %v13, -0.18633553
    %v728 = vmul.f32 %v14, -0.18633553
    %v735 = vrot.slane %v723, 1
    %v736 = vrot.slane %v724, 1
    %v737 = vsel %vm177, %v735, %v736
    %v738 = vrot.slane %v725, 1
    %v739 = vsel %vm177, %v736, %v738
    %v740 = vrot.slane %v726, 1
    %v741 = vrot.slane %v727, 1
    %v742 = vsel %vm177, %v740, %v741
    %v743 = vrot.slane %v728, 1
    %v744 = vsel %vm177, %v741, %v743
    %745 = vrot.lane.b32.xlu0 %v737, 127
    %v746 = vpop.permute.xlu0 %745
    %747 = vrot.lane.b32.xlu0 %v739, 127
    %v748 = vpop.permute.xlu0 %747
    %749 = vrot.lane.b32.xlu0 %v742, 127
    %v750 = vpop.permute.xlu0 %749
    %751 = vrot.lane.b32.xlu0 %v744, 127
    %v752 = vpop.permute.xlu0 %751
    %v757 = vadd.f32 %v689, %v746
    %v758 = vadd.f32 %v690, %v748
    %v759 = vadd.f32 %v691, %v750
    %v760 = vadd.f32 %v692, %v752
    %v761 = vmul.f32 %v9, 0.077591814
    %v762 = vmul.f32 %v10, 0.077591814
    %v763 = vmul.f32 %v11, 0.077591814
    %v764 = vmul.f32 %v12, 0.077591814
    %v765 = vmul.f32 %v13, 0.077591814
    %v766 = vmul.f32 %v14, 0.077591814
    %v773 = vrot.slane %v761, 1
    %v774 = vrot.slane %v762, 1
    %v775 = vsel %vm177, %v773, %v774
    %v776 = vrot.slane %v763, 1
    %v777 = vsel %vm177, %v774, %v776
    %v778 = vrot.slane %v764, 1
    %v779 = vrot.slane %v765, 1
    %v780 = vsel %vm177, %v778, %v779
    %v781 = vrot.slane %v766, 1
    %v782 = vsel %vm177, %v779, %v781
    %783 = vrot.lane.b32.xlu0 %v775, 127
    %v784 = vpop.permute.xlu0 %783
    %785 = vrot.lane.b32.xlu0 %v777, 127
    %v786 = vpop.permute.xlu0 %785
    %787 = vrot.lane.b32.xlu0 %v780, 127
    %v788 = vpop.permute.xlu0 %787
    %789 = vrot.lane.b32.xlu0 %v782, 127
    %v790 = vpop.permute.xlu0 %789
    %v795 = vadd.f32 %v711, %v784
    %v796 = vadd.f32 %v712, %v786
    %v797 = vadd.f32 %v713, %v788
    %v798 = vadd.f32 %v714, %v790
    %v799 = vadd.f32 %v715, %v746
    %v800 = vadd.f32 %v716, %v748
    %v801 = vadd.f32 %v717, %v750
    %v802 = vadd.f32 %v718, %v752
    %v803 = vmul.f32 %v9, 0.28145564
    %v804 = vmul.f32 %v10, 0.28145564
    %v805 = vmul.f32 %v11, 0.28145564
    %v806 = vmul.f32 %v12, 0.28145564
    %v807 = vmul.f32 %v13, 0.28145564
    %v808 = vmul.f32 %v14, 0.28145564
    %v815 = vrot.slane %v803, 1
    %v816 = vrot.slane %v804, 1
    %v817 = vsel %vm177, %v815, %v816
    %v818 = vrot.slane %v805, 1
    %v819 = vsel %vm177, %v816, %v818
    %v820 = vrot.slane %v806, 1
    %v821 = vrot.slane %v807, 1
    %v822 = vsel %vm177, %v820, %v821
    %v823 = vrot.slane %v808, 1
    %v824 = vsel %vm177, %v821, %v823
    %825 = vrot.lane.b32.xlu0 %v817, 127
    %v826 = vpop.permute.xlu0 %825
    %827 = vrot.lane.b32.xlu0 %v819, 127
    %v828 = vpop.permute.xlu0 %827
    %829 = vrot.lane.b32.xlu0 %v822, 127
    %v830 = vpop.permute.xlu0 %829
    %831 = vrot.lane.b32.xlu0 %v824, 127
    %v832 = vpop.permute.xlu0 %831
    %v837 = vadd.f32 %v719, %v826
    %v838 = vadd.f32 %v720, %v828
    %v839 = vadd.f32 %v721, %v830
    %v840 = vadd.f32 %v722, %v832
    %v841 = vmul.f32 %v9, -0.18965298
    %v842 = vmul.f32 %v10, -0.18965298
    %v843 = vmul.f32 %v11, -0.18965298
    %v844 = vmul.f32 %v12, -0.18965298
    %v845 = vmul.f32 %v13, -0.18965298
    %v846 = vmul.f32 %v14, -0.18965298
    %v853 = vrot.slane %v841, 1
    %v854 = vrot.slane %v842, 1
    %v855 = vsel %vm177, %v853, %v854
    %v856 = vrot.slane %v843, 1
    %v857 = vsel %vm177, %v854, %v856
    %v858 = vrot.slane %v844, 1
    %v859 = vrot.slane %v845, 1
    %v860 = vsel %vm177, %v858, %v859
    %v861 = vrot.slane %v846, 1
    %v862 = vsel %vm177, %v859, %v861
    %863 = vrot.lane.b32.xlu0 %v855, 126
    %v864 = vpop.permute.xlu0 %863
    %865 = vrot.lane.b32.xlu0 %v857, 126
    %v866 = vpop.permute.xlu0 %865
    %867 = vrot.lane.b32.xlu0 %v860, 126
    %v868 = vpop.permute.xlu0 %867
    %869 = vrot.lane.b32.xlu0 %v862, 126
    %v870 = vpop.permute.xlu0 %869
    %v875 = vadd.f32 %v757, %v864
    %v876 = vadd.f32 %v758, %v866
    %v877 = vadd.f32 %v759, %v868
    %v878 = vadd.f32 %v760, %v870
    %v879 = vmul.f32 %v9, -0.14329976
    %v880 = vmul.f32 %v10, -0.14329976
    %v881 = vmul.f32 %v11, -0.14329976
    %v882 = vmul.f32 %v12, -0.14329976
    %v883 = vmul.f32 %v13, -0.14329976
    %v884 = vmul.f32 %v14, -0.14329976
    %v891 = vrot.slane %v879, 1
    %v892 = vrot.slane %v880, 1
    %v893 = vsel %vm177, %v891, %v892
    %v894 = vrot.slane %v881, 1
    %v895 = vsel %vm177, %v892, %v894
    %v896 = vrot.slane %v882, 1
    %v897 = vrot.slane %v883, 1
    %v898 = vsel %vm177, %v896, %v897
    %v899 = vrot.slane %v884, 1
    %v900 = vsel %vm177, %v897, %v899
    %901 = vrot.lane.b32.xlu0 %v893, 126
    %v902 = vpop.permute.xlu0 %901
    %903 = vrot.lane.b32.xlu0 %v895, 126
    %v904 = vpop.permute.xlu0 %903
    %905 = vrot.lane.b32.xlu0 %v898, 126
    %v906 = vpop.permute.xlu0 %905
    %907 = vrot.lane.b32.xlu0 %v900, 126
    %v908 = vpop.permute.xlu0 %907
    %v913 = vadd.f32 %v795, %v902
    %v914 = vadd.f32 %v796, %v904
    %v915 = vadd.f32 %v797, %v906
    %v916 = vadd.f32 %v798, %v908
    %v917 = vmul.f32 %v9, -0.05245252
    %v918 = vmul.f32 %v10, -0.05245252
    %v919 = vmul.f32 %v11, -0.05245252
    %v920 = vmul.f32 %v12, -0.05245252
    %v921 = vmul.f32 %v13, -0.05245252
    %v922 = vmul.f32 %v14, -0.05245252
    %v929 = vrot.slane %v917, 1
    %v930 = vrot.slane %v918, 1
    %v931 = vsel %vm177, %v929, %v930
    %v932 = vrot.slane %v919, 1
    %v933 = vsel %vm177, %v930, %v932
    %v934 = vrot.slane %v920, 1
    %v935 = vrot.slane %v921, 1
    %v936 = vsel %vm177, %v934, %v935
    %v937 = vrot.slane %v922, 1
    %v938 = vsel %vm177, %v935, %v937
    %939 = vrot.lane.b32.xlu0 %v931, 126
    %v940 = vpop.permute.xlu0 %939
    %941 = vrot.lane.b32.xlu0 %v933, 126
    %v942 = vpop.permute.xlu0 %941
    %943 = vrot.lane.b32.xlu0 %v936, 126
    %v944 = vpop.permute.xlu0 %943
    %945 = vrot.lane.b32.xlu0 %v938, 126
    %v946 = vpop.permute.xlu0 %945
    %v951 = vadd.f32 %v799, %v940
    %v952 = vadd.f32 %v800, %v942
    %v953 = vadd.f32 %v801, %v944
    %v954 = vadd.f32 %v802, %v946
    %v955 = vmul.f32 %v9, 0.09570172
    %v956 = vmul.f32 %v10, 0.09570172
    %v957 = vmul.f32 %v11, 0.09570172
    %v958 = vmul.f32 %v12, 0.09570172
    %v959 = vmul.f32 %v13, 0.09570172
    %v960 = vmul.f32 %v14, 0.09570172
    %v967 = vrot.slane %v955, 1
    %v968 = vrot.slane %v956, 1
    %v969 = vsel %vm177, %v967, %v968
    %v970 = vrot.slane %v957, 1
    %v971 = vsel %vm177, %v968, %v970
    %v972 = vrot.slane %v958, 1
    %v973 = vrot.slane %v959, 1
    %v974 = vsel %vm177, %v972, %v973
    %v975 = vrot.slane %v960, 1
    %v976 = vsel %vm177, %v973, %v975
    %977 = vrot.lane.b32.xlu0 %v969, 126
    %v978 = vpop.permute.xlu0 %977
    %979 = vrot.lane.b32.xlu0 %v971, 126
    %v980 = vpop.permute.xlu0 %979
    %981 = vrot.lane.b32.xlu0 %v974, 126
    %v982 = vpop.permute.xlu0 %981
    %983 = vrot.lane.b32.xlu0 %v976, 126
    %v984 = vpop.permute.xlu0 %983
    %v989 = vadd.f32 %v837, %v978
    %v990 = vadd.f32 %v838, %v980
    %v991 = vadd.f32 %v839, %v982
    %v992 = vadd.f32 %v840, %v984
    %v993 = vmul.f32 %v9, -0.19077156
    %v994 = vmul.f32 %v10, -0.19077156
    %v995 = vmul.f32 %v11, -0.19077156
    %v996 = vmul.f32 %v12, -0.19077156
    %v997 = vmul.f32 %v13, -0.19077156
    %v998 = vmul.f32 %v14, -0.19077156
    %v1005 = vrot.slane %v993, 1
    %v1006 = vrot.slane %v994, 1
    %v1007 = vsel %vm177, %v1005, %v1006
    %v1008 = vrot.slane %v995, 1
    %v1009 = vsel %vm177, %v1006, %v1008
    %v1010 = vrot.slane %v996, 1
    %v1011 = vrot.slane %v997, 1
    %v1012 = vsel %vm177, %v1010, %v1011
    %v1013 = vrot.slane %v998, 1
    %v1014 = vsel %vm177, %v1011, %v1013
    %1015 = vrot.lane.b32.xlu0 %v1007, 125
    %v1016 = vpop.permute.xlu0 %1015
    %1017 = vrot.lane.b32.xlu0 %v1009, 125
    %v1018 = vpop.permute.xlu0 %1017
    %1019 = vrot.lane.b32.xlu0 %v1012, 125
    %v1020 = vpop.permute.xlu0 %1019
    %1021 = vrot.lane.b32.xlu0 %v1014, 125
    %v1022 = vpop.permute.xlu0 %1021
    %v1027 = vadd.f32 %v875, %v1016
    %v1028 = vadd.f32 %v876, %v1018
    %v1029 = vadd.f32 %v877, %v1020
    %v1030 = vadd.f32 %v878, %v1022
    %v1031 = vmul.f32 %v9, -0.17871079
    %v1032 = vmul.f32 %v10, -0.17871079
    %v1033 = vmul.f32 %v11, -0.17871079
    %v1034 = vmul.f32 %v12, -0.17871079
    %v1035 = vmul.f32 %v13, -0.17871079
    %v1036 = vmul.f32 %v14, -0.17871079
    %v1043 = vrot.slane %v1031, 1
    %v1044 = vrot.slane %v1032, 1
    %v1045 = vsel %vm177, %v1043, %v1044
    %v1046 = vrot.slane %v1033, 1
    %v1047 = vsel %vm177, %v1044, %v1046
    %v1048 = vrot.slane %v1034, 1
    %v1049 = vrot.slane %v1035, 1
    %v1050 = vsel %vm177, %v1048, %v1049
    %v1051 = vrot.slane %v1036, 1
    %v1052 = vsel %vm177, %v1049, %v1051
    %1053 = vrot.lane.b32.xlu0 %v1045, 125
    %v1054 = vpop.permute.xlu0 %1053
    %1055 = vrot.lane.b32.xlu0 %v1047, 125
    %v1056 = vpop.permute.xlu0 %1055
    %1057 = vrot.lane.b32.xlu0 %v1050, 125
    %v1058 = vpop.permute.xlu0 %1057
    %1059 = vrot.lane.b32.xlu0 %v1052, 125
    %v1060 = vpop.permute.xlu0 %1059
    %v1065 = vadd.f32 %v913, %v1054
    %v1066 = vadd.f32 %v914, %v1056
    %v1067 = vadd.f32 %v915, %v1058
    %v1068 = vadd.f32 %v916, %v1060
    %v1069 = vmul.f32 %v9, 0.2782722
    %v1070 = vmul.f32 %v10, 0.2782722
    %v1071 = vmul.f32 %v11, 0.2782722
    %v1072 = vmul.f32 %v12, 0.2782722
    %v1073 = vmul.f32 %v13, 0.2782722
    %v1074 = vmul.f32 %v14, 0.2782722
    %v1081 = vrot.slane %v1069, 1
    %v1082 = vrot.slane %v1070, 1
    %v1083 = vsel %vm177, %v1081, %v1082
    %v1084 = vrot.slane %v1071, 1
    %v1085 = vsel %vm177, %v1082, %v1084
    %v1086 = vrot.slane %v1072, 1
    %v1087 = vrot.slane %v1073, 1
    %v1088 = vsel %vm177, %v1086, %v1087
    %v1089 = vrot.slane %v1074, 1
    %v1090 = vsel %vm177, %v1087, %v1089
    %1091 = vrot.lane.b32.xlu0 %v1083, 125
    %v1092 = vpop.permute.xlu0 %1091
    %1093 = vrot.lane.b32.xlu0 %v1085, 125
    %v1094 = vpop.permute.xlu0 %1093
    %1095 = vrot.lane.b32.xlu0 %v1088, 125
    %v1096 = vpop.permute.xlu0 %1095
    %1097 = vrot.lane.b32.xlu0 %v1090, 125
    %v1098 = vpop.permute.xlu0 %1097
    %v1103 = vadd.f32 %v951, %v1092
    %v1104 = vadd.f32 %v952, %v1094
    %v1105 = vadd.f32 %v953, %v1096
    %v1106 = vadd.f32 %v954, %v1098
    %v1107 = vadd.f32 %v989, %v1054
    %v1108 = vadd.f32 %v990, %v1056
    %v1109 = vadd.f32 %v991, %v1058
    %v1110 = vadd.f32 %v992, %v1060
    %1111 = vrot.lane.b32.xlu0 %v855, 124
    %v1112 = vpop.permute.xlu0 %1111
    %1113 = vrot.lane.b32.xlu0 %v857, 124
    %v1114 = vpop.permute.xlu0 %1113
    %1115 = vrot.lane.b32.xlu0 %v860, 124
    %v1116 = vpop.permute.xlu0 %1115
    %1117 = vrot.lane.b32.xlu0 %v862, 124
    %v1118 = vpop.permute.xlu0 %1117
    %v1123 = vadd.f32 %v1027, %v1112
    %v1124 = vadd.f32 %v1028, %v1114
    %v1125 = vadd.f32 %v1029, %v1116
    %v1126 = vadd.f32 %v1030, %v1118
    %1127 = vrot.lane.b32.xlu0 %v969, 124
    %v1128 = vpop.permute.xlu0 %1127
    %1129 = vrot.lane.b32.xlu0 %v971, 124
    %v1130 = vpop.permute.xlu0 %1129
    %1131 = vrot.lane.b32.xlu0 %v974, 124
    %v1132 = vpop.permute.xlu0 %1131
    %1133 = vrot.lane.b32.xlu0 %v976, 124
    %v1134 = vpop.permute.xlu0 %1133
    %v1139 = vadd.f32 %v1065, %v1128
    %v1140 = vadd.f32 %v1066, %v1130
    %v1141 = vadd.f32 %v1067, %v1132
    %v1142 = vadd.f32 %v1068, %v1134
    %1143 = vrot.lane.b32.xlu0 %v931, 124
    %v1144 = vpop.permute.xlu0 %1143
    %1145 = vrot.lane.b32.xlu0 %v933, 124
    %v1146 = vpop.permute.xlu0 %1145
    %1147 = vrot.lane.b32.xlu0 %v936, 124
    %v1148 = vpop.permute.xlu0 %1147
    %1149 = vrot.lane.b32.xlu0 %v938, 124
    %v1150 = vpop.permute.xlu0 %1149
    %v1155 = vadd.f32 %v1103, %v1144
    %v1156 = vadd.f32 %v1104, %v1146
    %v1157 = vadd.f32 %v1105, %v1148
    %v1158 = vadd.f32 %v1106, %v1150
    %1159 = vrot.lane.b32.xlu0 %v893, 124
    %v1160 = vpop.permute.xlu0 %1159
    %1161 = vrot.lane.b32.xlu0 %v895, 124
    %v1162 = vpop.permute.xlu0 %1161
    %1163 = vrot.lane.b32.xlu0 %v898, 124
    %v1164 = vpop.permute.xlu0 %1163
    %1165 = vrot.lane.b32.xlu0 %v900, 124
    %v1166 = vpop.permute.xlu0 %1165
    %v1171 = vadd.f32 %v1107, %v1160
    %v1172 = vadd.f32 %v1108, %v1162
    %v1173 = vadd.f32 %v1109, %v1164
    %v1174 = vadd.f32 %v1110, %v1166
    %1175 = vrot.lane.b32.xlu0 %v737, 123
    %v1176 = vpop.permute.xlu0 %1175
    %1177 = vrot.lane.b32.xlu0 %v739, 123
    %v1178 = vpop.permute.xlu0 %1177
    %1179 = vrot.lane.b32.xlu0 %v742, 123
    %v1180 = vpop.permute.xlu0 %1179
    %1181 = vrot.lane.b32.xlu0 %v744, 123
    %v1182 = vpop.permute.xlu0 %1181
    %v1187 = vadd.f32 %v1123, %v1176
    %v1188 = vadd.f32 %v1124, %v1178
    %v1189 = vadd.f32 %v1125, %v1180
    %v1190 = vadd.f32 %v1126, %v1182
    %1191 = vrot.lane.b32.xlu0 %v817, 123
    %v1192 = vpop.permute.xlu0 %1191
    %1193 = vrot.lane.b32.xlu0 %v819, 123
    %v1194 = vpop.permute.xlu0 %1193
    %1195 = vrot.lane.b32.xlu0 %v822, 123
    %v1196 = vpop.permute.xlu0 %1195
    %1197 = vrot.lane.b32.xlu0 %v824, 123
    %v1198 = vpop.permute.xlu0 %1197
    %v1203 = vadd.f32 %v1139, %v1192
    %v1204 = vadd.f32 %v1140, %v1194
    %v1205 = vadd.f32 %v1141, %v1196
    %v1206 = vadd.f32 %v1142, %v1198
    %v1207 = vadd.f32 %v1155, %v1176
    %v1208 = vadd.f32 %v1156, %v1178
    %v1209 = vadd.f32 %v1157, %v1180
    %v1210 = vadd.f32 %v1158, %v1182
    %1211 = vrot.lane.b32.xlu0 %v775, 123
    %v1212 = vpop.permute.xlu0 %1211
    %1213 = vrot.lane.b32.xlu0 %v777, 123
    %v1214 = vpop.permute.xlu0 %1213
    %1215 = vrot.lane.b32.xlu0 %v780, 123
    %v1216 = vpop.permute.xlu0 %1215
    %1217 = vrot.lane.b32.xlu0 %v782, 123
    %v1218 = vpop.permute.xlu0 %1217
    %v1223 = vadd.f32 %v1171, %v1212
    %v1224 = vadd.f32 %v1172, %v1214
    %v1225 = vadd.f32 %v1173, %v1216
    %v1226 = vadd.f32 %v1174, %v1218
    %1227 = vrot.lane.b32.xlu0 %v677, 122
    %v1228 = vpop.permute.xlu0 %1227
    %1229 = vrot.lane.b32.xlu0 %v679, 122
    %v1230 = vpop.permute.xlu0 %1229
    %1231 = vrot.lane.b32.xlu0 %v682, 122
    %v1232 = vpop.permute.xlu0 %1231
    %1233 = vrot.lane.b32.xlu0 %v684, 122
    %v1234 = vpop.permute.xlu0 %1233
    %v1239 = vadd.f32 %v1187, %v1228
    %v1240 = vadd.f32 %v1188, %v1230
    %v1241 = vadd.f32 %v1189, %v1232
    %v1242 = vadd.f32 %v1190, %v1234
    %1243 = vrot.lane.b32.xlu0 %v699, 122
    %v1244 = vpop.permute.xlu0 %1243
    %1245 = vrot.lane.b32.xlu0 %v701, 122
    %v1246 = vpop.permute.xlu0 %1245
    %1247 = vrot.lane.b32.xlu0 %v704, 122
    %v1248 = vpop.permute.xlu0 %1247
    %1249 = vrot.lane.b32.xlu0 %v706, 122
    %v1250 = vpop.permute.xlu0 %1249
    %v1255 = vadd.f32 %v1203, %v1244
    %v1256 = vadd.f32 %v1204, %v1246
    %v1257 = vadd.f32 %v1205, %v1248
    %v1258 = vadd.f32 %v1206, %v1250
    %v1259 = vadd.f32 %v1207, %v1228
    %v1260 = vadd.f32 %v1208, %v1230
    %v1261 = vadd.f32 %v1209, %v1232
    %v1262 = vadd.f32 %v1210, %v1234
    %v1263 = vadd.f32 %v1223, %v1244
    %v1264 = vadd.f32 %v1224, %v1246
    %v1265 = vadd.f32 %v1225, %v1248
    %v1266 = vadd.f32 %v1226, %v1250
    %v1267 = vmul.f32 %v11, -0.050836507
    %v1268 = vmul.f32 %v14, -0.050836507
    %v1271 = vrot.slane %v403, 2
    %v1272 = vrot.slane %v404, 2
    %v1273 = vsel %vm196, %v1271, %v1272
    %v1274 = vrot.slane %v1267, 2
    %v1275 = vsel %vm196, %v1272, %v1274
    %v1276 = vrot.slane %v405, 2
    %v1277 = vrot.slane %v406, 2
    %v1278 = vsel %vm196, %v1276, %v1277
    %v1279 = vrot.slane %v1268, 2
    %v1280 = vsel %vm196, %v1277, %v1279
    %v1285 = vadd.f32 %v1239, %v1273
    %v1286 = vadd.f32 %v1240, %v1275
    %v1287 = vadd.f32 %v1241, %v1278
    %v1288 = vadd.f32 %v1242, %v1280
    %v1289 = vmul.f32 %v11, 0.07691826
    %v1290 = vmul.f32 %v14, 0.07691826
    %v1293 = vrot.slane %v379, 2
    %v1294 = vrot.slane %v380, 2
    %v1295 = vsel %vm196, %v1293, %v1294
    %v1296 = vrot.slane %v1289, 2
    %v1297 = vsel %vm196, %v1294, %v1296
    %v1298 = vrot.slane %v381, 2
    %v1299 = vrot.slane %v382, 2
    %v1300 = vsel %vm196, %v1298, %v1299
    %v1301 = vrot.slane %v1290, 2
    %v1302 = vsel %vm196, %v1299, %v1301
    %v1307 = vadd.f32 %v1255, %v1295
    %v1308 = vadd.f32 %v1256, %v1297
    %v1309 = vadd.f32 %v1257, %v1300
    %v1310 = vadd.f32 %v1258, %v1302
    %v1311 = vmul.f32 %v11, 0.10242672
    %v1312 = vmul.f32 %v14, 0.10242672
    %v1315 = vrot.slane %v355, 2
    %v1316 = vrot.slane %v356, 2
    %v1317 = vsel %vm196, %v1315, %v1316
    %v1318 = vrot.slane %v1311, 2
    %v1319 = vsel %vm196, %v1316, %v1318
    %v1320 = vrot.slane %v357, 2
    %v1321 = vrot.slane %v358, 2
    %v1322 = vsel %vm196, %v1320, %v1321
    %v1323 = vrot.slane %v1312, 2
    %v1324 = vsel %vm196, %v1321, %v1323
    %v1329 = vadd.f32 %v1259, %v1317
    %v1330 = vadd.f32 %v1260, %v1319
    %v1331 = vadd.f32 %v1261, %v1322
    %v1332 = vadd.f32 %v1262, %v1324
    %v1333 = vmul.f32 %v11, -0.172032
    %v1334 = vmul.f32 %v14, -0.172032
    %v1337 = vrot.slane %v427, 2
    %v1338 = vrot.slane %v428, 2
    %v1339 = vsel %vm196, %v1337, %v1338
    %v1340 = vrot.slane %v1333, 2
    %v1341 = vsel %vm196, %v1338, %v1340
    %v1342 = vrot.slane %v429, 2
    %v1343 = vrot.slane %v430, 2
    %v1344 = vsel %vm196, %v1342, %v1343
    %v1345 = vrot.slane %v1334, 2
    %v1346 = vsel %vm196, %v1343, %v1345
    %v1351 = vadd.f32 %v1263, %v1339
    %v1352 = vadd.f32 %v1264, %v1341
    %v1353 = vadd.f32 %v1265, %v1344
    %v1354 = vadd.f32 %v1266, %v1346
    %v1355 = vrot.slane %v917, 2
    %v1356 = vrot.slane %v918, 2
    %v1357 = vsel %vm196, %v1355, %v1356
    %v1358 = vrot.slane %v919, 2
    %v1359 = vsel %vm196, %v1356, %v1358
    %v1360 = vrot.slane %v920, 2
    %v1361 = vrot.slane %v921, 2
    %v1362 = vsel %vm196, %v1360, %v1361
    %v1363 = vrot.slane %v922, 2
    %v1364 = vsel %vm196, %v1361, %v1363
    %1365 = vrot.lane.b32.xlu0 %v1357, 127
    %v1366 = vpop.permute.xlu0 %1365
    %1367 = vrot.lane.b32.xlu0 %v1359, 127
    %v1368 = vpop.permute.xlu0 %1367
    %1369 = vrot.lane.b32.xlu0 %v1362, 127
    %v1370 = vpop.permute.xlu0 %1369
    %1371 = vrot.lane.b32.xlu0 %v1364, 127
    %v1372 = vpop.permute.xlu0 %1371
    %v1377 = vadd.f32 %v1285, %v1366
    %v1378 = vadd.f32 %v1286, %v1368
    %v1379 = vadd.f32 %v1287, %v1370
    %v1380 = vadd.f32 %v1288, %v1372
    %v1381 = vrot.slane %v879, 2
    %v1382 = vrot.slane %v880, 2
    %v1383 = vsel %vm196, %v1381, %v1382
    %v1384 = vrot.slane %v881, 2
    %v1385 = vsel %vm196, %v1382, %v1384
    %v1386 = vrot.slane %v882, 2
    %v1387 = vrot.slane %v883, 2
    %v1388 = vsel %vm196, %v1386, %v1387
    %v1389 = vrot.slane %v884, 2
    %v1390 = vsel %vm196, %v1387, %v1389
    %1391 = vrot.lane.b32.xlu0 %v1383, 127
    %v1392 = vpop.permute.xlu0 %1391
    %1393 = vrot.lane.b32.xlu0 %v1385, 127
    %v1394 = vpop.permute.xlu0 %1393
    %1395 = vrot.lane.b32.xlu0 %v1388, 127
    %v1396 = vpop.permute.xlu0 %1395
    %1397 = vrot.lane.b32.xlu0 %v1390, 127
    %v1398 = vpop.permute.xlu0 %1397
    %v1403 = vadd.f32 %v1307, %v1392
    %v1404 = vadd.f32 %v1308, %v1394
    %v1405 = vadd.f32 %v1309, %v1396
    %v1406 = vadd.f32 %v1310, %v1398
    %v1407 = vrot.slane %v841, 2
    %v1408 = vrot.slane %v842, 2
    %v1409 = vsel %vm196, %v1407, %v1408
    %v1410 = vrot.slane %v843, 2
    %v1411 = vsel %vm196, %v1408, %v1410
    %v1412 = vrot.slane %v844, 2
    %v1413 = vrot.slane %v845, 2
    %v1414 = vsel %vm196, %v1412, %v1413
    %v1415 = vrot.slane %v846, 2
    %v1416 = vsel %vm196, %v1413, %v1415
    %1417 = vrot.lane.b32.xlu0 %v1409, 127
    %v1418 = vpop.permute.xlu0 %1417
    %1419 = vrot.lane.b32.xlu0 %v1411, 127
    %v1420 = vpop.permute.xlu0 %1419
    %1421 = vrot.lane.b32.xlu0 %v1414, 127
    %v1422 = vpop.permute.xlu0 %1421
    %1423 = vrot.lane.b32.xlu0 %v1416, 127
    %v1424 = vpop.permute.xlu0 %1423
    %v1429 = vadd.f32 %v1329, %v1418
    %v1430 = vadd.f32 %v1330, %v1420
    %v1431 = vadd.f32 %v1331, %v1422
    %v1432 = vadd.f32 %v1332, %v1424
    %v1433 = vrot.slane %v955, 2
    %v1434 = vrot.slane %v956, 2
    %v1435 = vsel %vm196, %v1433, %v1434
    %v1436 = vrot.slane %v957, 2
    %v1437 = vsel %vm196, %v1434, %v1436
    %v1438 = vrot.slane %v958, 2
    %v1439 = vrot.slane %v959, 2
    %v1440 = vsel %vm196, %v1438, %v1439
    %v1441 = vrot.slane %v960, 2
    %v1442 = vsel %vm196, %v1439, %v1441
    %1443 = vrot.lane.b32.xlu0 %v1435, 127
    %v1444 = vpop.permute.xlu0 %1443
    %1445 = vrot.lane.b32.xlu0 %v1437, 127
    %v1446 = vpop.permute.xlu0 %1445
    %1447 = vrot.lane.b32.xlu0 %v1440, 127
    %v1448 = vpop.permute.xlu0 %1447
    %1449 = vrot.lane.b32.xlu0 %v1442, 127
    %v1450 = vpop.permute.xlu0 %1449
    %v1455 = vadd.f32 %v1351, %v1444
    %v1456 = vadd.f32 %v1352, %v1446
    %v1457 = vadd.f32 %v1353, %v1448
    %v1458 = vadd.f32 %v1354, %v1450
    %v1459 = vmul.f32 %v9, -0.053444624
    %v1460 = vmul.f32 %v10, -0.053444624
    %v1461 = vmul.f32 %v11, -0.053444624
    %v1462 = vmul.f32 %v12, -0.053444624
    %v1463 = vmul.f32 %v13, -0.053444624
    %v1464 = vmul.f32 %v14, -0.053444624
    %v1471 = vrot.slane %v1459, 2
    %v1472 = vrot.slane %v1460, 2
    %v1473 = vsel %vm196, %v1471, %v1472
    %v1474 = vrot.slane %v1461, 2
    %v1475 = vsel %vm196, %v1472, %v1474
    %v1476 = vrot.slane %v1462, 2
    %v1477 = vrot.slane %v1463, 2
    %v1478 = vsel %vm196, %v1476, %v1477
    %v1479 = vrot.slane %v1464, 2
    %v1480 = vsel %vm196, %v1477, %v1479
    %1481 = vrot.lane.b32.xlu0 %v1473, 126
    %v1482 = vpop.permute.xlu0 %1481
    %1483 = vrot.lane.b32.xlu0 %v1475, 126
    %v1484 = vpop.permute.xlu0 %1483
    %1485 = vrot.lane.b32.xlu0 %v1478, 126
    %v1486 = vpop.permute.xlu0 %1485
    %1487 = vrot.lane.b32.xlu0 %v1480, 126
    %v1488 = vpop.permute.xlu0 %1487
    %v1493 = vadd.f32 %v1377, %v1482
    %v1494 = vadd.f32 %v1378, %v1484
    %v1495 = vadd.f32 %v1379, %v1486
    %v1496 = vadd.f32 %v1380, %v1488
    %v1497 = vmul.f32 %v9, -0.18098867
    %v1498 = vmul.f32 %v10, -0.18098867
    %v1499 = vmul.f32 %v11, -0.18098867
    %v1500 = vmul.f32 %v12, -0.18098867
    %v1501 = vmul.f32 %v13, -0.18098867
    %v1502 = vmul.f32 %v14, -0.18098867
    %v1509 = vrot.slane %v1497, 2
    %v1510 = vrot.slane %v1498, 2
    %v1511 = vsel %vm196, %v1509, %v1510
    %v1512 = vrot.slane %v1499, 2
    %v1513 = vsel %vm196, %v1510, %v1512
    %v1514 = vrot.slane %v1500, 2
    %v1515 = vrot.slane %v1501, 2
    %v1516 = vsel %vm196, %v1514, %v1515
    %v1517 = vrot.slane %v1502, 2
    %v1518 = vsel %vm196, %v1515, %v1517
    %1519 = vrot.lane.b32.xlu0 %v1511, 126
    %v1520 = vpop.permute.xlu0 %1519
    %1521 = vrot.lane.b32.xlu0 %v1513, 126
    %v1522 = vpop.permute.xlu0 %1521
    %1523 = vrot.lane.b32.xlu0 %v1516, 126
    %v1524 = vpop.permute.xlu0 %1523
    %1525 = vrot.lane.b32.xlu0 %v1518, 126
    %v1526 = vpop.permute.xlu0 %1525
    %v1531 = vadd.f32 %v1403, %v1520
    %v1532 = vadd.f32 %v1404, %v1522
    %v1533 = vadd.f32 %v1405, %v1524
    %v1534 = vadd.f32 %v1406, %v1526
    %v1535 = vadd.f32 %v1429, %v1482
    %v1536 = vadd.f32 %v1430, %v1484
    %v1537 = vadd.f32 %v1431, %v1486
    %v1538 = vadd.f32 %v1432, %v1488
    %v1539 = vmul.f32 %v9, 0.29066643
    %v1540 = vmul.f32 %v10, 0.29066643
    %v1541 = vmul.f32 %v11, 0.29066643
    %v1542 = vmul.f32 %v12, 0.29066643
    %v1543 = vmul.f32 %v13, 0.29066643
    %v1544 = vmul.f32 %v14, 0.29066643
    %v1551 = vrot.slane %v1539, 2
    %v1552 = vrot.slane %v1540, 2
    %v1553 = vsel %vm196, %v1551, %v1552
    %v1554 = vrot.slane %v1541, 2
    %v1555 = vsel %vm196, %v1552, %v1554
    %v1556 = vrot.slane %v1542, 2
    %v1557 = vrot.slane %v1543, 2
    %v1558 = vsel %vm196, %v1556, %v1557
    %v1559 = vrot.slane %v1544, 2
    %v1560 = vsel %vm196, %v1557, %v1559
    %1561 = vrot.lane.b32.xlu0 %v1553, 126
    %v1562 = vpop.permute.xlu0 %1561
    %1563 = vrot.lane.b32.xlu0 %v1555, 126
    %v1564 = vpop.permute.xlu0 %1563
    %1565 = vrot.lane.b32.xlu0 %v1558, 126
    %v1566 = vpop.permute.xlu0 %1565
    %1567 = vrot.lane.b32.xlu0 %v1560, 126
    %v1568 = vpop.permute.xlu0 %1567
    %v1573 = vadd.f32 %v1455, %v1562
    %v1574 = vadd.f32 %v1456, %v1564
    %v1575 = vadd.f32 %v1457, %v1566
    %v1576 = vadd.f32 %v1458, %v1568
    %v1577 = vmul.f32 %v9, -0.05377914
    %v1578 = vmul.f32 %v10, -0.05377914
    %v1579 = vmul.f32 %v11, -0.05377914
    %v1580 = vmul.f32 %v12, -0.05377914
    %v1581 = vmul.f32 %v13, -0.05377914
    %v1582 = vmul.f32 %v14, -0.05377914
    %v1589 = vrot.slane %v1577, 2
    %v1590 = vrot.slane %v1578, 2
    %v1591 = vsel %vm196, %v1589, %v1590
    %v1592 = vrot.slane %v1579, 2
    %v1593 = vsel %vm196, %v1590, %v1592
    %v1594 = vrot.slane %v1580, 2
    %v1595 = vrot.slane %v1581, 2
    %v1596 = vsel %vm196, %v1594, %v1595
    %v1597 = vrot.slane %v1582, 2
    %v1598 = vsel %vm196, %v1595, %v1597
    %1599 = vrot.lane.b32.xlu0 %v1591, 125
    %v1600 = vpop.permute.xlu0 %1599
    %1601 = vrot.lane.b32.xlu0 %v1593, 125
    %v1602 = vpop.permute.xlu0 %1601
    %1603 = vrot.lane.b32.xlu0 %v1596, 125
    %v1604 = vpop.permute.xlu0 %1603
    %1605 = vrot.lane.b32.xlu0 %v1598, 125
    %v1606 = vpop.permute.xlu0 %1605
    %v1611 = vadd.f32 %v1493, %v1600
    %v1612 = vadd.f32 %v1494, %v1602
    %v1613 = vadd.f32 %v1495, %v1604
    %v1614 = vadd.f32 %v1496, %v1606
    %v1615 = vmul.f32 %v9, 0.09749285
    %v1616 = vmul.f32 %v10, 0.09749285
    %v1617 = vmul.f32 %v11, 0.09749285
    %v1618 = vmul.f32 %v12, 0.09749285
    %v1619 = vmul.f32 %v13, 0.09749285
    %v1620 = vmul.f32 %v14, 0.09749285
    %v1627 = vrot.slane %v1615, 2
    %v1628 = vrot.slane %v1616, 2
    %v1629 = vsel %vm196, %v1627, %v1628
    %v1630 = vrot.slane %v1617, 2
    %v1631 = vsel %vm196, %v1628, %v1630
    %v1632 = vrot.slane %v1618, 2
    %v1633 = vrot.slane %v1619, 2
    %v1634 = vsel %vm196, %v1632, %v1633
    %v1635 = vrot.slane %v1620, 2
    %v1636 = vsel %vm196, %v1633, %v1635
    %1637 = vrot.lane.b32.xlu0 %v1629, 125
    %v1638 = vpop.permute.xlu0 %1637
    %1639 = vrot.lane.b32.xlu0 %v1631, 125
    %v1640 = vpop.permute.xlu0 %1639
    %1641 = vrot.lane.b32.xlu0 %v1634, 125
    %v1642 = vpop.permute.xlu0 %1641
    %1643 = vrot.lane.b32.xlu0 %v1636, 125
    %v1644 = vpop.permute.xlu0 %1643
    %v1649 = vadd.f32 %v1531, %v1638
    %v1650 = vadd.f32 %v1532, %v1640
    %v1651 = vadd.f32 %v1533, %v1642
    %v1652 = vadd.f32 %v1534, %v1644
    %v1653 = vmul.f32 %v9, 0.28302428
    %v1654 = vmul.f32 %v10, 0.28302428
    %v1655 = vmul.f32 %v11, 0.28302428
    %v1656 = vmul.f32 %v12, 0.28302428
    %v1657 = vmul.f32 %v13, 0.28302428
    %v1658 = vmul.f32 %v14, 0.28302428
    %v1665 = vrot.slane %v1653, 2
    %v1666 = vrot.slane %v1654, 2
    %v1667 = vsel %vm196, %v1665, %v1666
    %v1668 = vrot.slane %v1655, 2
    %v1669 = vsel %vm196, %v1666, %v1668
    %v1670 = vrot.slane %v1656, 2
    %v1671 = vrot.slane %v1657, 2
    %v1672 = vsel %vm196, %v1670, %v1671
    %v1673 = vrot.slane %v1658, 2
    %v1674 = vsel %vm196, %v1671, %v1673
    %1675 = vrot.lane.b32.xlu0 %v1667, 125
    %v1676 = vpop.permute.xlu0 %1675
    %1677 = vrot.lane.b32.xlu0 %v1669, 125
    %v1678 = vpop.permute.xlu0 %1677
    %1679 = vrot.lane.b32.xlu0 %v1672, 125
    %v1680 = vpop.permute.xlu0 %1679
    %1681 = vrot.lane.b32.xlu0 %v1674, 125
    %v1682 = vpop.permute.xlu0 %1681
    %v1687 = vadd.f32 %v1535, %v1676
    %v1688 = vadd.f32 %v1536, %v1678
    %v1689 = vadd.f32 %v1537, %v1680
    %v1690 = vadd.f32 %v1538, %v1682
    %v1691 = vadd.f32 %v1573, %v1638
    %v1692 = vadd.f32 %v1574, %v1640
    %v1693 = vadd.f32 %v1575, %v1642
    %v1694 = vadd.f32 %v1576, %v1644
    %1695 = vrot.lane.b32.xlu0 %v1473, 124
    %v1696 = vpop.permute.xlu0 %1695
    %1697 = vrot.lane.b32.xlu0 %v1475, 124
    %v1698 = vpop.permute.xlu0 %1697
    %1699 = vrot.lane.b32.xlu0 %v1478, 124
    %v1700 = vpop.permute.xlu0 %1699
    %1701 = vrot.lane.b32.xlu0 %v1480, 124
    %v1702 = vpop.permute.xlu0 %1701
    %v1707 = vadd.f32 %v1611, %v1696
    %v1708 = vadd.f32 %v1612, %v1698
    %v1709 = vadd.f32 %v1613, %v1700
    %v1710 = vadd.f32 %v1614, %v1702
    %1711 = vrot.lane.b32.xlu0 %v1553, 124
    %v1712 = vpop.permute.xlu0 %1711
    %1713 = vrot.lane.b32.xlu0 %v1555, 124
    %v1714 = vpop.permute.xlu0 %1713
    %1715 = vrot.lane.b32.xlu0 %v1558, 124
    %v1716 = vpop.permute.xlu0 %1715
    %1717 = vrot.lane.b32.xlu0 %v1560, 124
    %v1718 = vpop.permute.xlu0 %1717
    %v1723 = vadd.f32 %v1649, %v1712
    %v1724 = vadd.f32 %v1650, %v1714
    %v1725 = vadd.f32 %v1651, %v1716
    %v1726 = vadd.f32 %v1652, %v1718
    %v1727 = vadd.f32 %v1687, %v1696
    %v1728 = vadd.f32 %v1688, %v1698
    %v1729 = vadd.f32 %v1689, %v1700
    %v1730 = vadd.f32 %v1690, %v1702
    %1731 = vrot.lane.b32.xlu0 %v1511, 124
    %v1732 = vpop.permute.xlu0 %1731
    %1733 = vrot.lane.b32.xlu0 %v1513, 124
    %v1734 = vpop.permute.xlu0 %1733
    %1735 = vrot.lane.b32.xlu0 %v1516, 124
    %v1736 = vpop.permute.xlu0 %1735
    %1737 = vrot.lane.b32.xlu0 %v1518, 124
    %v1738 = vpop.permute.xlu0 %1737
    %v1743 = vadd.f32 %v1691, %v1732
    %v1744 = vadd.f32 %v1692, %v1734
    %v1745 = vadd.f32 %v1693, %v1736
    %v1746 = vadd.f32 %v1694, %v1738
    %1747 = vrot.lane.b32.xlu0 %v1357, 123
    %v1748 = vpop.permute.xlu0 %1747
    %1749 = vrot.lane.b32.xlu0 %v1359, 123
    %v1750 = vpop.permute.xlu0 %1749
    %1751 = vrot.lane.b32.xlu0 %v1362, 123
    %v1752 = vpop.permute.xlu0 %1751
    %1753 = vrot.lane.b32.xlu0 %v1364, 123
    %v1754 = vpop.permute.xlu0 %1753
    %v1759 = vadd.f32 %v1707, %v1748
    %v1760 = vadd.f32 %v1708, %v1750
    %v1761 = vadd.f32 %v1709, %v1752
    %v1762 = vadd.f32 %v1710, %v1754
    %1763 = vrot.lane.b32.xlu0 %v1435, 123
    %v1764 = vpop.permute.xlu0 %1763
    %1765 = vrot.lane.b32.xlu0 %v1437, 123
    %v1766 = vpop.permute.xlu0 %1765
    %1767 = vrot.lane.b32.xlu0 %v1440, 123
    %v1768 = vpop.permute.xlu0 %1767
    %1769 = vrot.lane.b32.xlu0 %v1442, 123
    %v1770 = vpop.permute.xlu0 %1769
    %v1775 = vadd.f32 %v1723, %v1764
    %v1776 = vadd.f32 %v1724, %v1766
    %v1777 = vadd.f32 %v1725, %v1768
    %v1778 = vadd.f32 %v1726, %v1770
    %1779 = vrot.lane.b32.xlu0 %v1409, 123
    %v1780 = vpop.permute.xlu0 %1779
    %1781 = vrot.lane.b32.xlu0 %v1411, 123
    %v1782 = vpop.permute.xlu0 %1781
    %1783 = vrot.lane.b32.xlu0 %v1414, 123
    %v1784 = vpop.permute.xlu0 %1783
    %1785 = vrot.lane.b32.xlu0 %v1416, 123
    %v1786 = vpop.permute.xlu0 %1785
    %v1791 = vadd.f32 %v1727, %v1780
    %v1792 = vadd.f32 %v1728, %v1782
    %v1793 = vadd.f32 %v1729, %v1784
    %v1794 = vadd.f32 %v1730, %v1786
    %1795 = vrot.lane.b32.xlu0 %v1383, 123
    %v1796 = vpop.permute.xlu0 %1795
    %1797 = vrot.lane.b32.xlu0 %v1385, 123
    %v1798 = vpop.permute.xlu0 %1797
    %1799 = vrot.lane.b32.xlu0 %v1388, 123
    %v1800 = vpop.permute.xlu0 %1799
    %1801 = vrot.lane.b32.xlu0 %v1390, 123
    %v1802 = vpop.permute.xlu0 %1801
    %v1807 = vadd.f32 %v1743, %v1796
    %v1808 = vadd.f32 %v1744, %v1798
    %v1809 = vadd.f32 %v1745, %v1800
    %v1810 = vadd.f32 %v1746, %v1802
    %1811 = vrot.lane.b32.xlu0 %v1273, 122
    %v1812 = vpop.permute.xlu0 %1811
    %1813 = vrot.lane.b32.xlu0 %v1275, 122
    %v1814 = vpop.permute.xlu0 %1813
    %1815 = vrot.lane.b32.xlu0 %v1278, 122
    %v1816 = vpop.permute.xlu0 %1815
    %1817 = vrot.lane.b32.xlu0 %v1280, 122
    %v1818 = vpop.permute.xlu0 %1817
    %v1823 = vadd.f32 %v1759, %v1812
    %v1824 = vadd.f32 %v1760, %v1814
    %v1825 = vadd.f32 %v1761, %v1816
    %v1826 = vadd.f32 %v1762, %v1818
    %1827 = vrot.lane.b32.xlu0 %v1339, 122
    %v1828 = vpop.permute.xlu0 %1827
    %1829 = vrot.lane.b32.xlu0 %v1341, 122
    %v1830 = vpop.permute.xlu0 %1829
    %1831 = vrot.lane.b32.xlu0 %v1344, 122
    %v1832 = vpop.permute.xlu0 %1831
    %1833 = vrot.lane.b32.xlu0 %v1346, 122
    %v1834 = vpop.permute.xlu0 %1833
    %v1839 = vadd.f32 %v1775, %v1828
    %v1840 = vadd.f32 %v1776, %v1830
    %v1841 = vadd.f32 %v1777, %v1832
    %v1842 = vadd.f32 %v1778, %v1834
    %1843 = vrot.lane.b32.xlu0 %v1317, 122
    %v1844 = vpop.permute.xlu0 %1843
    %1845 = vrot.lane.b32.xlu0 %v1319, 122
    %v1846 = vpop.permute.xlu0 %1845
    %1847 = vrot.lane.b32.xlu0 %v1322, 122
    %v1848 = vpop.permute.xlu0 %1847
    %1849 = vrot.lane.b32.xlu0 %v1324, 122
    %v1850 = vpop.permute.xlu0 %1849
    %v1855 = vadd.f32 %v1791, %v1844
    %v1856 = vadd.f32 %v1792, %v1846
    %v1857 = vadd.f32 %v1793, %v1848
    %v1858 = vadd.f32 %v1794, %v1850
    %1859 = vrot.lane.b32.xlu0 %v1295, 122
    %v1860 = vpop.permute.xlu0 %1859
    %1861 = vrot.lane.b32.xlu0 %v1297, 122
    %v1862 = vpop.permute.xlu0 %1861
    %1863 = vrot.lane.b32.xlu0 %v1300, 122
    %v1864 = vpop.permute.xlu0 %1863
    %1865 = vrot.lane.b32.xlu0 %v1302, 122
    %v1866 = vpop.permute.xlu0 %1865
    %v1871 = vadd.f32 %v1807, %v1860
    %v1872 = vadd.f32 %v1808, %v1862
    %v1873 = vadd.f32 %v1809, %v1864
    %v1874 = vadd.f32 %v1810, %v1866
    %v1875 = vmul.f32 %v11, 0.27053165
    %v1876 = vmul.f32 %v14, 0.27053165
    %v1879 = vrot.slane %v499, 3
    %v1880 = vrot.slane %v500, 3
    %v1881 = vsel %vm215, %v1879, %v1880
    %v1882 = vrot.slane %v1875, 3
    %v1883 = vsel %vm215, %v1880, %v1882
    %v1884 = vrot.slane %v501, 3
    %v1885 = vrot.slane %v502, 3
    %v1886 = vsel %vm215, %v1884, %v1885
    %v1887 = vrot.slane %v1876, 3
    %v1888 = vsel %vm215, %v1885, %v1887
    %v1893 = vadd.f32 %v1823, %v1881
    %v1894 = vadd.f32 %v1824, %v1883
    %v1895 = vadd.f32 %v1825, %v1886
    %v1896 = vadd.f32 %v1826, %v1888
    %v1897 = vmul.f32 %v11, -0.13962547
    %v1898 = vmul.f32 %v14, -0.13962547
    %v1901 = vrot.slane %v475, 3
    %v1902 = vrot.slane %v476, 3
    %v1903 = vsel %vm215, %v1901, %v1902
    %v1904 = vrot.slane %v1897, 3
    %v1905 = vsel %vm215, %v1902, %v1904
    %v1906 = vrot.slane %v477, 3
    %v1907 = vrot.slane %v478, 3
    %v1908 = vsel %vm215, %v1906, %v1907
    %v1909 = vrot.slane %v1898, 3
    %v1910 = vsel %vm215, %v1907, %v1909
    %v1915 = vadd.f32 %v1839, %v1903
    %v1916 = vadd.f32 %v1840, %v1905
    %v1917 = vadd.f32 %v1841, %v1908
    %v1918 = vadd.f32 %v1842, %v1910
    %v1919 = vmul.f32 %v11, 0.10298945
    %v1920 = vmul.f32 %v14, 0.10298945
    %v1923 = vrot.slane %v451, 3
    %v1924 = vrot.slane %v452, 3
    %v1925 = vsel %vm215, %v1923, %v1924
    %v1926 = vrot.slane %v1919, 3
    %v1927 = vsel %vm215, %v1924, %v1926
    %v1928 = vrot.slane %v453, 3
    %v1929 = vrot.slane %v454, 3
    %v1930 = vsel %vm215, %v1928, %v1929
    %v1931 = vrot.slane %v1920, 3
    %v1932 = vsel %vm215, %v1929, %v1931
    %v1937 = vadd.f32 %v1855, %v1925
    %v1938 = vadd.f32 %v1856, %v1927
    %v1939 = vadd.f32 %v1857, %v1930
    %v1940 = vadd.f32 %v1858, %v1932
    %v1941 = vadd.f32 %v1871, %v1903
    %v1942 = vadd.f32 %v1872, %v1905
    %v1943 = vadd.f32 %v1873, %v1908
    %v1944 = vadd.f32 %v1874, %v1910
    %v1945 = vrot.slane %v1069, 3
    %v1946 = vrot.slane %v1070, 3
    %v1947 = vsel %vm215, %v1945, %v1946
    %v1948 = vrot.slane %v1071, 3
    %v1949 = vsel %vm215, %v1946, %v1948
    %v1950 = vrot.slane %v1072, 3
    %v1951 = vrot.slane %v1073, 3
    %v1952 = vsel %vm215, %v1950, %v1951
    %v1953 = vrot.slane %v1074, 3
    %v1954 = vsel %vm215, %v1951, %v1953
    %1955 = vrot.lane.b32.xlu0 %v1947, 127
    %v1956 = vpop.permute.xlu0 %1955
    %1957 = vrot.lane.b32.xlu0 %v1949, 127
    %v1958 = vpop.permute.xlu0 %1957
    %1959 = vrot.lane.b32.xlu0 %v1952, 127
    %v1960 = vpop.permute.xlu0 %1959
    %1961 = vrot.lane.b32.xlu0 %v1954, 127
    %v1962 = vpop.permute.xlu0 %1961
    %v1967 = vadd.f32 %v1893, %v1956
    %v1968 = vadd.f32 %v1894, %v1958
    %v1969 = vadd.f32 %v1895, %v1960
    %v1970 = vadd.f32 %v1896, %v1962
    %v1971 = vrot.slane %v1031, 3
    %v1972 = vrot.slane %v1032, 3
    %v1973 = vsel %vm215, %v1971, %v1972
    %v1974 = vrot.slane %v1033, 3
    %v1975 = vsel %vm215, %v1972, %v1974
    %v1976 = vrot.slane %v1034, 3
    %v1977 = vrot.slane %v1035, 3
    %v1978 = vsel %vm215, %v1976, %v1977
    %v1979 = vrot.slane %v1036, 3
    %v1980 = vsel %vm215, %v1977, %v1979
    %1981 = vrot.lane.b32.xlu0 %v1973, 127
    %v1982 = vpop.permute.xlu0 %1981
    %1983 = vrot.lane.b32.xlu0 %v1975, 127
    %v1984 = vpop.permute.xlu0 %1983
    %1985 = vrot.lane.b32.xlu0 %v1978, 127
    %v1986 = vpop.permute.xlu0 %1985
    %1987 = vrot.lane.b32.xlu0 %v1980, 127
    %v1988 = vpop.permute.xlu0 %1987
    %v1993 = vadd.f32 %v1915, %v1982
    %v1994 = vadd.f32 %v1916, %v1984
    %v1995 = vadd.f32 %v1917, %v1986
    %v1996 = vadd.f32 %v1918, %v1988
    %v1997 = vrot.slane %v993, 3
    %v1998 = vrot.slane %v994, 3
    %v1999 = vsel %vm215, %v1997, %v1998
    %v2000 = vrot.slane %v995, 3
    %v2001 = vsel %vm215, %v1998, %v2000
    %v2002 = vrot.slane %v996, 3
    %v2003 = vrot.slane %v997, 3
    %v2004 = vsel %vm215, %v2002, %v2003
    %v2005 = vrot.slane %v998, 3
    %v2006 = vsel %vm215, %v2003, %v2005
    %2007 = vrot.lane.b32.xlu0 %v1999, 127
    %v2008 = vpop.permute.xlu0 %2007
    %2009 = vrot.lane.b32.xlu0 %v2001, 127
    %v2010 = vpop.permute.xlu0 %2009
    %2011 = vrot.lane.b32.xlu0 %v2004, 127
    %v2012 = vpop.permute.xlu0 %2011
    %2013 = vrot.lane.b32.xlu0 %v2006, 127
    %v2014 = vpop.permute.xlu0 %2013
    %v2019 = vadd.f32 %v1937, %v2008
    %v2020 = vadd.f32 %v1938, %v2010
    %v2021 = vadd.f32 %v1939, %v2012
    %v2022 = vadd.f32 %v1940, %v2014
    %v2023 = vadd.f32 %v1941, %v1982
    %v2024 = vadd.f32 %v1942, %v1984
    %v2025 = vadd.f32 %v1943, %v1986
    %v2026 = vadd.f32 %v1944, %v1988
    %v2027 = vrot.slane %v1653, 3
    %v2028 = vrot.slane %v1654, 3
    %v2029 = vsel %vm215, %v2027, %v2028
    %v2030 = vrot.slane %v1655, 3
    %v2031 = vsel %vm215, %v2028, %v2030
    %v2032 = vrot.slane %v1656, 3
    %v2033 = vrot.slane %v1657, 3
    %v2034 = vsel %vm215, %v2032, %v2033
    %v2035 = vrot.slane %v1658, 3
    %v2036 = vsel %vm215, %v2033, %v2035
    %2037 = vrot.lane.b32.xlu0 %v2029, 126
    %v2038 = vpop.permute.xlu0 %2037
    %2039 = vrot.lane.b32.xlu0 %v2031, 126
    %v2040 = vpop.permute.xlu0 %2039
    %2041 = vrot.lane.b32.xlu0 %v2034, 126
    %v2042 = vpop.permute.xlu0 %2041
    %2043 = vrot.lane.b32.xlu0 %v2036, 126
    %v2044 = vpop.permute.xlu0 %2043
    %v2049 = vadd.f32 %v1967, %v2038
    %v2050 = vadd.f32 %v1968, %v2040
    %v2051 = vadd.f32 %v1969, %v2042
    %v2052 = vadd.f32 %v1970, %v2044
    %v2053 = vrot.slane %v1615, 3
    %v2054 = vrot.slane %v1616, 3
    %v2055 = vsel %vm215, %v2053, %v2054
    %v2056 = vrot.slane %v1617, 3
    %v2057 = vsel %vm215, %v2054, %v2056
    %v2058 = vrot.slane %v1618, 3
    %v2059 = vrot.slane %v1619, 3
    %v2060 = vsel %vm215, %v2058, %v2059
    %v2061 = vrot.slane %v1620, 3
    %v2062 = vsel %vm215, %v2059, %v2061
    %2063 = vrot.lane.b32.xlu0 %v2055, 126
    %v2064 = vpop.permute.xlu0 %2063
    %2065 = vrot.lane.b32.xlu0 %v2057, 126
    %v2066 = vpop.permute.xlu0 %2065
    %2067 = vrot.lane.b32.xlu0 %v2060, 126
    %v2068 = vpop.permute.xlu0 %2067
    %2069 = vrot.lane.b32.xlu0 %v2062, 126
    %v2070 = vpop.permute.xlu0 %2069
    %v2075 = vadd.f32 %v1993, %v2064
    %v2076 = vadd.f32 %v1994, %v2066
    %v2077 = vadd.f32 %v1995, %v2068
    %v2078 = vadd.f32 %v1996, %v2070
    %v2079 = vrot.slane %v1577, 3
    %v2080 = vrot.slane %v1578, 3
    %v2081 = vsel %vm215, %v2079, %v2080
    %v2082 = vrot.slane %v1579, 3
    %v2083 = vsel %vm215, %v2080, %v2082
    %v2084 = vrot.slane %v1580, 3
    %v2085 = vrot.slane %v1581, 3
    %v2086 = vsel %vm215, %v2084, %v2085
    %v2087 = vrot.slane %v1582, 3
    %v2088 = vsel %vm215, %v2085, %v2087
    %2089 = vrot.lane.b32.xlu0 %v2081, 126
    %v2090 = vpop.permute.xlu0 %2089
    %2091 = vrot.lane.b32.xlu0 %v2083, 126
    %v2092 = vpop.permute.xlu0 %2091
    %2093 = vrot.lane.b32.xlu0 %v2086, 126
    %v2094 = vpop.permute.xlu0 %2093
    %2095 = vrot.lane.b32.xlu0 %v2088, 126
    %v2096 = vpop.permute.xlu0 %2095
    %v2101 = vadd.f32 %v2019, %v2090
    %v2102 = vadd.f32 %v2020, %v2092
    %v2103 = vadd.f32 %v2021, %v2094
    %v2104 = vadd.f32 %v2022, %v2096
    %v2105 = vadd.f32 %v2023, %v2064
    %v2106 = vadd.f32 %v2024, %v2066
    %v2107 = vadd.f32 %v2025, %v2068
    %v2108 = vadd.f32 %v2026, %v2070
    %v2109 = vmul.f32 %v9, 0.2846266
    %v2110 = vmul.f32 %v10, 0.2846266
    %v2111 = vmul.f32 %v11, 0.2846266
    %v2112 = vmul.f32 %v12, 0.2846266
    %v2113 = vmul.f32 %v13, 0.2846266
    %v2114 = vmul.f32 %v14, 0.2846266
    %v2121 = vrot.slane %v2109, 3
    %v2122 = vrot.slane %v2110, 3
    %v2123 = vsel %vm215, %v2121, %v2122
    %v2124 = vrot.slane %v2111, 3
    %v2125 = vsel %vm215, %v2122, %v2124
    %v2126 = vrot.slane %v2112, 3
    %v2127 = vrot.slane %v2113, 3
    %v2128 = vsel %vm215, %v2126, %v2127
    %v2129 = vrot.slane %v2114, 3
    %v2130 = vsel %vm215, %v2127, %v2129
    %2131 = vrot.lane.b32.xlu0 %v2123, 125
    %v2132 = vpop.permute.xlu0 %2131
    %2133 = vrot.lane.b32.xlu0 %v2125, 125
    %v2134 = vpop.permute.xlu0 %2133
    %2135 = vrot.lane.b32.xlu0 %v2128, 125
    %v2136 = vpop.permute.xlu0 %2135
    %2137 = vrot.lane.b32.xlu0 %v2130, 125
    %v2138 = vpop.permute.xlu0 %2137
    %v2143 = vadd.f32 %v2049, %v2132
    %v2144 = vadd.f32 %v2050, %v2134
    %v2145 = vadd.f32 %v2051, %v2136
    %v2146 = vadd.f32 %v2052, %v2138
    %v2147 = vmul.f32 %v9, 0.29380786
    %v2148 = vmul.f32 %v10, 0.29380786
    %v2149 = vmul.f32 %v11, 0.29380786
    %v2150 = vmul.f32 %v12, 0.29380786
    %v2151 = vmul.f32 %v13, 0.29380786
    %v2152 = vmul.f32 %v14, 0.29380786
    %v2159 = vrot.slane %v2147, 3
    %v2160 = vrot.slane %v2148, 3
    %v2161 = vsel %vm215, %v2159, %v2160
    %v2162 = vrot.slane %v2149, 3
    %v2163 = vsel %vm215, %v2160, %v2162
    %v2164 = vrot.slane %v2150, 3
    %v2165 = vrot.slane %v2151, 3
    %v2166 = vsel %vm215, %v2164, %v2165
    %v2167 = vrot.slane %v2152, 3
    %v2168 = vsel %vm215, %v2165, %v2167
    %2169 = vrot.lane.b32.xlu0 %v2161, 125
    %v2170 = vpop.permute.xlu0 %2169
    %2171 = vrot.lane.b32.xlu0 %v2163, 125
    %v2172 = vpop.permute.xlu0 %2171
    %2173 = vrot.lane.b32.xlu0 %v2166, 125
    %v2174 = vpop.permute.xlu0 %2173
    %2175 = vrot.lane.b32.xlu0 %v2168, 125
    %v2176 = vpop.permute.xlu0 %2175
    %v2181 = vadd.f32 %v2075, %v2170
    %v2182 = vadd.f32 %v2076, %v2172
    %v2183 = vadd.f32 %v2077, %v2174
    %v2184 = vadd.f32 %v2078, %v2176
    %v2185 = vadd.f32 %v2101, %v2132
    %v2186 = vadd.f32 %v2102, %v2134
    %v2187 = vadd.f32 %v2103, %v2136
    %v2188 = vadd.f32 %v2104, %v2138
    %v2189 = vadd.f32 %v2105, %v2170
    %v2190 = vadd.f32 %v2106, %v2172
    %v2191 = vadd.f32 %v2107, %v2174
    %v2192 = vadd.f32 %v2108, %v2176
    %2193 = vrot.lane.b32.xlu0 %v2029, 124
    %v2194 = vpop.permute.xlu0 %2193
    %2195 = vrot.lane.b32.xlu0 %v2031, 124
    %v2196 = vpop.permute.xlu0 %2195
    %2197 = vrot.lane.b32.xlu0 %v2034, 124
    %v2198 = vpop.permute.xlu0 %2197
    %2199 = vrot.lane.b32.xlu0 %v2036, 124
    %v2200 = vpop.permute.xlu0 %2199
    %v2205 = vadd.f32 %v2143, %v2194
    %v2206 = vadd.f32 %v2144, %v2196
    %v2207 = vadd.f32 %v2145, %v2198
    %v2208 = vadd.f32 %v2146, %v2200
    %2209 = vrot.lane.b32.xlu0 %v2055, 124
    %v2210 = vpop.permute.xlu0 %2209
    %2211 = vrot.lane.b32.xlu0 %v2057, 124
    %v2212 = vpop.permute.xlu0 %2211
    %2213 = vrot.lane.b32.xlu0 %v2060, 124
    %v2214 = vpop.permute.xlu0 %2213
    %2215 = vrot.lane.b32.xlu0 %v2062, 124
    %v2216 = vpop.permute.xlu0 %2215
    %v2221 = vadd.f32 %v2181, %v2210
    %v2222 = vadd.f32 %v2182, %v2212
    %v2223 = vadd.f32 %v2183, %v2214
    %v2224 = vadd.f32 %v2184, %v2216
    %2225 = vrot.lane.b32.xlu0 %v2081, 124
    %v2226 = vpop.permute.xlu0 %2225
    %2227 = vrot.lane.b32.xlu0 %v2083, 124
    %v2228 = vpop.permute.xlu0 %2227
    %2229 = vrot.lane.b32.xlu0 %v2086, 124
    %v2230 = vpop.permute.xlu0 %2229
    %2231 = vrot.lane.b32.xlu0 %v2088, 124
    %v2232 = vpop.permute.xlu0 %2231
    %v2237 = vadd.f32 %v2185, %v2226
    %v2238 = vadd.f32 %v2186, %v2228
    %v2239 = vadd.f32 %v2187, %v2230
    %v2240 = vadd.f32 %v2188, %v2232
    %v2241 = vadd.f32 %v2189, %v2210
    %v2242 = vadd.f32 %v2190, %v2212
    %v2243 = vadd.f32 %v2191, %v2214
    %v2244 = vadd.f32 %v2192, %v2216
    %2245 = vrot.lane.b32.xlu0 %v1947, 123
    %v2246 = vpop.permute.xlu0 %2245
    %2247 = vrot.lane.b32.xlu0 %v1949, 123
    %v2248 = vpop.permute.xlu0 %2247
    %2249 = vrot.lane.b32.xlu0 %v1952, 123
    %v2250 = vpop.permute.xlu0 %2249
    %2251 = vrot.lane.b32.xlu0 %v1954, 123
    %v2252 = vpop.permute.xlu0 %2251
    %v2257 = vadd.f32 %v2205, %v2246
    %v2258 = vadd.f32 %v2206, %v2248
    %v2259 = vadd.f32 %v2207, %v2250
    %v2260 = vadd.f32 %v2208, %v2252
    %2261 = vrot.lane.b32.xlu0 %v1973, 123
    %v2262 = vpop.permute.xlu0 %2261
    %2263 = vrot.lane.b32.xlu0 %v1975, 123
    %v2264 = vpop.permute.xlu0 %2263
    %2265 = vrot.lane.b32.xlu0 %v1978, 123
    %v2266 = vpop.permute.xlu0 %2265
    %2267 = vrot.lane.b32.xlu0 %v1980, 123
    %v2268 = vpop.permute.xlu0 %2267
    %v2273 = vadd.f32 %v2221, %v2262
    %v2274 = vadd.f32 %v2222, %v2264
    %v2275 = vadd.f32 %v2223, %v2266
    %v2276 = vadd.f32 %v2224, %v2268
    %2277 = vrot.lane.b32.xlu0 %v1999, 123
    %v2278 = vpop.permute.xlu0 %2277
    %2279 = vrot.lane.b32.xlu0 %v2001, 123
    %v2280 = vpop.permute.xlu0 %2279
    %2281 = vrot.lane.b32.xlu0 %v2004, 123
    %v2282 = vpop.permute.xlu0 %2281
    %2283 = vrot.lane.b32.xlu0 %v2006, 123
    %v2284 = vpop.permute.xlu0 %2283
    %v2289 = vadd.f32 %v2237, %v2278
    %v2290 = vadd.f32 %v2238, %v2280
    %v2291 = vadd.f32 %v2239, %v2282
    %v2292 = vadd.f32 %v2240, %v2284
    %v2293 = vadd.f32 %v2241, %v2262
    %v2294 = vadd.f32 %v2242, %v2264
    %v2295 = vadd.f32 %v2243, %v2266
    %v2296 = vadd.f32 %v2244, %v2268
    %2297 = vrot.lane.b32.xlu0 %v1881, 122
    %v2298 = vpop.permute.xlu0 %2297
    %2299 = vrot.lane.b32.xlu0 %v1883, 122
    %v2300 = vpop.permute.xlu0 %2299
    %2301 = vrot.lane.b32.xlu0 %v1886, 122
    %v2302 = vpop.permute.xlu0 %2301
    %2303 = vrot.lane.b32.xlu0 %v1888, 122
    %v2304 = vpop.permute.xlu0 %2303
    %v2309 = vadd.f32 %v2257, %v2298
    %v2310 = vadd.f32 %v2258, %v2300
    %v2311 = vadd.f32 %v2259, %v2302
    %v2312 = vadd.f32 %v2260, %v2304
    %2313 = vrot.lane.b32.xlu0 %v1903, 122
    %v2314 = vpop.permute.xlu0 %2313
    %2315 = vrot.lane.b32.xlu0 %v1905, 122
    %v2316 = vpop.permute.xlu0 %2315
    %2317 = vrot.lane.b32.xlu0 %v1908, 122
    %v2318 = vpop.permute.xlu0 %2317
    %2319 = vrot.lane.b32.xlu0 %v1910, 122
    %v2320 = vpop.permute.xlu0 %2319
    %v2325 = vadd.f32 %v2273, %v2314
    %v2326 = vadd.f32 %v2274, %v2316
    %v2327 = vadd.f32 %v2275, %v2318
    %v2328 = vadd.f32 %v2276, %v2320
    %2329 = vrot.lane.b32.xlu0 %v1925, 122
    %v2330 = vpop.permute.xlu0 %2329
    %2331 = vrot.lane.b32.xlu0 %v1927, 122
    %v2332 = vpop.permute.xlu0 %2331
    %2333 = vrot.lane.b32.xlu0 %v1930, 122
    %v2334 = vpop.permute.xlu0 %2333
    %2335 = vrot.lane.b32.xlu0 %v1932, 122
    %v2336 = vpop.permute.xlu0 %2335
    %v2341 = vadd.f32 %v2289, %v2330
    %v2342 = vadd.f32 %v2290, %v2332
    %v2343 = vadd.f32 %v2291, %v2334
    %v2344 = vadd.f32 %v2292, %v2336
    %v2345 = vadd.f32 %v2293, %v2314
    %v2346 = vadd.f32 %v2294, %v2316
    %v2347 = vadd.f32 %v2295, %v2318
    %v2348 = vadd.f32 %v2296, %v2320
    %v2349 = vrot.slane %v403, 4
    %v2350 = vrot.slane %v404, 4
    %v2351 = vsel %vm234, %v2349, %v2350
    %v2352 = vrot.slane %v1267, 4
    %v2353 = vsel %vm234, %v2350, %v2352
    %v2354 = vrot.slane %v405, 4
    %v2355 = vrot.slane %v406, 4
    %v2356 = vsel %vm234, %v2354, %v2355
    %v2357 = vrot.slane %v1268, 4
    %v2358 = vsel %vm234, %v2355, %v2357
    %v2363 = vadd.f32 %v2309, %v2351
    %v2364 = vadd.f32 %v2310, %v2353
    %v2365 = vadd.f32 %v2311, %v2356
    %v2366 = vadd.f32 %v2312, %v2358
    %v2367 = vrot.slane %v427, 4
    %v2368 = vrot.slane %v428, 4
    %v2369 = vsel %vm234, %v2367, %v2368
    %v2370 = vrot.slane %v1333, 4
    %v2371 = vsel %vm234, %v2368, %v2370
    %v2372 = vrot.slane %v429, 4
    %v2373 = vrot.slane %v430, 4
    %v2374 = vsel %vm234, %v2372, %v2373
    %v2375 = vrot.slane %v1334, 4
    %v2376 = vsel %vm234, %v2373, %v2375
    %v2381 = vadd.f32 %v2325, %v2369
    %v2382 = vadd.f32 %v2326, %v2371
    %v2383 = vadd.f32 %v2327, %v2374
    %v2384 = vadd.f32 %v2328, %v2376
    %v2385 = vrot.slane %v355, 4
    %v2386 = vrot.slane %v356, 4
    %v2387 = vsel %vm234, %v2385, %v2386
    %v2388 = vrot.slane %v1311, 4
    %v2389 = vsel %vm234, %v2386, %v2388
    %v2390 = vrot.slane %v357, 4
    %v2391 = vrot.slane %v358, 4
    %v2392 = vsel %vm234, %v2390, %v2391
    %v2393 = vrot.slane %v1312, 4
    %v2394 = vsel %vm234, %v2391, %v2393
    %v2399 = vadd.f32 %v2341, %v2387
    %v2400 = vadd.f32 %v2342, %v2389
    %v2401 = vadd.f32 %v2343, %v2392
    %v2402 = vadd.f32 %v2344, %v2394
    %v2403 = vrot.slane %v379, 4
    %v2404 = vrot.slane %v380, 4
    %v2405 = vsel %vm234, %v2403, %v2404
    %v2406 = vrot.slane %v1289, 4
    %v2407 = vsel %vm234, %v2404, %v2406
    %v2408 = vrot.slane %v381, 4
    %v2409 = vrot.slane %v382, 4
    %v2410 = vsel %vm234, %v2408, %v2409
    %v2411 = vrot.slane %v1290, 4
    %v2412 = vsel %vm234, %v2409, %v2411
    %v2417 = vadd.f32 %v2345, %v2405
    %v2418 = vadd.f32 %v2346, %v2407
    %v2419 = vadd.f32 %v2347, %v2410
    %v2420 = vadd.f32 %v2348, %v2412
    %v2421 = vrot.slane %v917, 4
    %v2422 = vrot.slane %v918, 4
    %v2423 = vsel %vm234, %v2421, %v2422
    %v2424 = vrot.slane %v919, 4
    %v2425 = vsel %vm234, %v2422, %v2424
    %v2426 = vrot.slane %v920, 4
    %v2427 = vrot.slane %v921, 4
    %v2428 = vsel %vm234, %v2426, %v2427
    %v2429 = vrot.slane %v922, 4
    %v2430 = vsel %vm234, %v2427, %v2429
    %2431 = vrot.lane.b32.xlu0 %v2423, 127
    %v2432 = vpop.permute.xlu0 %2431
    %2433 = vrot.lane.b32.xlu0 %v2425, 127
    %v2434 = vpop.permute.xlu0 %2433
    %2435 = vrot.lane.b32.xlu0 %v2428, 127
    %v2436 = vpop.permute.xlu0 %2435
    %2437 = vrot.lane.b32.xlu0 %v2430, 127
    %v2438 = vpop.permute.xlu0 %2437
    %v2443 = vadd.f32 %v2363, %v2432
    %v2444 = vadd.f32 %v2364, %v2434
    %v2445 = vadd.f32 %v2365, %v2436
    %v2446 = vadd.f32 %v2366, %v2438
    %v2447 = vrot.slane %v955, 4
    %v2448 = vrot.slane %v956, 4
    %v2449 = vsel %vm234, %v2447, %v2448
    %v2450 = vrot.slane %v957, 4
    %v2451 = vsel %vm234, %v2448, %v2450
    %v2452 = vrot.slane %v958, 4
    %v2453 = vrot.slane %v959, 4
    %v2454 = vsel %vm234, %v2452, %v2453
    %v2455 = vrot.slane %v960, 4
    %v2456 = vsel %vm234, %v2453, %v2455
    %2457 = vrot.lane.b32.xlu0 %v2449, 127
    %v2458 = vpop.permute.xlu0 %2457
    %2459 = vrot.lane.b32.xlu0 %v2451, 127
    %v2460 = vpop.permute.xlu0 %2459
    %2461 = vrot.lane.b32.xlu0 %v2454, 127
    %v2462 = vpop.permute.xlu0 %2461
    %2463 = vrot.lane.b32.xlu0 %v2456, 127
    %v2464 = vpop.permute.xlu0 %2463
    %v2469 = vadd.f32 %v2381, %v2458
    %v2470 = vadd.f32 %v2382, %v2460
    %v2471 = vadd.f32 %v2383, %v2462
    %v2472 = vadd.f32 %v2384, %v2464
    %v2473 = vrot.slane %v841, 4
    %v2474 = vrot.slane %v842, 4
    %v2475 = vsel %vm234, %v2473, %v2474
    %v2476 = vrot.slane %v843, 4
    %v2477 = vsel %vm234, %v2474, %v2476
    %v2478 = vrot.slane %v844, 4
    %v2479 = vrot.slane %v845, 4
    %v2480 = vsel %vm234, %v2478, %v2479
    %v2481 = vrot.slane %v846, 4
    %v2482 = vsel %vm234, %v2479, %v2481
    %2483 = vrot.lane.b32.xlu0 %v2475, 127
    %v2484 = vpop.permute.xlu0 %2483
    %2485 = vrot.lane.b32.xlu0 %v2477, 127
    %v2486 = vpop.permute.xlu0 %2485
    %2487 = vrot.lane.b32.xlu0 %v2480, 127
    %v2488 = vpop.permute.xlu0 %2487
    %2489 = vrot.lane.b32.xlu0 %v2482, 127
    %v2490 = vpop.permute.xlu0 %2489
    %v2495 = vadd.f32 %v2399, %v2484
    %v2496 = vadd.f32 %v2400, %v2486
    %v2497 = vadd.f32 %v2401, %v2488
    %v2498 = vadd.f32 %v2402, %v2490
    %v2499 = vrot.slane %v879, 4
    %v2500 = vrot.slane %v880, 4
    %v2501 = vsel %vm234, %v2499, %v2500
    %v2502 = vrot.slane %v881, 4
    %v2503 = vsel %vm234, %v2500, %v2502
    %v2504 = vrot.slane %v882, 4
    %v2505 = vrot.slane %v883, 4
    %v2506 = vsel %vm234, %v2504, %v2505
    %v2507 = vrot.slane %v884, 4
    %v2508 = vsel %vm234, %v2505, %v2507
    %2509 = vrot.lane.b32.xlu0 %v2501, 127
    %v2510 = vpop.permute.xlu0 %2509
    %2511 = vrot.lane.b32.xlu0 %v2503, 127
    %v2512 = vpop.permute.xlu0 %2511
    %2513 = vrot.lane.b32.xlu0 %v2506, 127
    %v2514 = vpop.permute.xlu0 %2513
    %2515 = vrot.lane.b32.xlu0 %v2508, 127
    %v2516 = vpop.permute.xlu0 %2515
    %v2521 = vadd.f32 %v2417, %v2510
    %v2522 = vadd.f32 %v2418, %v2512
    %v2523 = vadd.f32 %v2419, %v2514
    %v2524 = vadd.f32 %v2420, %v2516
    %v2525 = vrot.slane %v1459, 4
    %v2526 = vrot.slane %v1460, 4
    %v2527 = vsel %vm234, %v2525, %v2526
    %v2528 = vrot.slane %v1461, 4
    %v2529 = vsel %vm234, %v2526, %v2528
    %v2530 = vrot.slane %v1462, 4
    %v2531 = vrot.slane %v1463, 4
    %v2532 = vsel %vm234, %v2530, %v2531
    %v2533 = vrot.slane %v1464, 4
    %v2534 = vsel %vm234, %v2531, %v2533
    %2535 = vrot.lane.b32.xlu0 %v2527, 126
    %v2536 = vpop.permute.xlu0 %2535
    %2537 = vrot.lane.b32.xlu0 %v2529, 126
    %v2538 = vpop.permute.xlu0 %2537
    %2539 = vrot.lane.b32.xlu0 %v2532, 126
    %v2540 = vpop.permute.xlu0 %2539
    %2541 = vrot.lane.b32.xlu0 %v2534, 126
    %v2542 = vpop.permute.xlu0 %2541
    %v2547 = vadd.f32 %v2443, %v2536
    %v2548 = vadd.f32 %v2444, %v2538
    %v2549 = vadd.f32 %v2445, %v2540
    %v2550 = vadd.f32 %v2446, %v2542
    %v2551 = vrot.slane %v1539, 4
    %v2552 = vrot.slane %v1540, 4
    %v2553 = vsel %vm234, %v2551, %v2552
    %v2554 = vrot.slane %v1541, 4
    %v2555 = vsel %vm234, %v2552, %v2554
    %v2556 = vrot.slane %v1542, 4
    %v2557 = vrot.slane %v1543, 4
    %v2558 = vsel %vm234, %v2556, %v2557
    %v2559 = vrot.slane %v1544, 4
    %v2560 = vsel %vm234, %v2557, %v2559
    %2561 = vrot.lane.b32.xlu0 %v2553, 126
    %v2562 = vpop.permute.xlu0 %2561
    %2563 = vrot.lane.b32.xlu0 %v2555, 126
    %v2564 = vpop.permute.xlu0 %2563
    %2565 = vrot.lane.b32.xlu0 %v2558, 126
    %v2566 = vpop.permute.xlu0 %2565
    %2567 = vrot.lane.b32.xlu0 %v2560, 126
    %v2568 = vpop.permute.xlu0 %2567
    %v2573 = vadd.f32 %v2469, %v2562
    %v2574 = vadd.f32 %v2470, %v2564
    %v2575 = vadd.f32 %v2471, %v2566
    %v2576 = vadd.f32 %v2472, %v2568
    %v2577 = vadd.f32 %v2495, %v2536
    %v2578 = vadd.f32 %v2496, %v2538
    %v2579 = vadd.f32 %v2497, %v2540
    %v2580 = vadd.f32 %v2498, %v2542
    %v2581 = vrot.slane %v1497, 4
    %v2582 = vrot.slane %v1498, 4
    %v2583 = vsel %vm234, %v2581, %v2582
    %v2584 = vrot.slane %v1499, 4
    %v2585 = vsel %vm234, %v2582, %v2584
    %v2586 = vrot.slane %v1500, 4
    %v2587 = vrot.slane %v1501, 4
    %v2588 = vsel %vm234, %v2586, %v2587
    %v2589 = vrot.slane %v1502, 4
    %v2590 = vsel %vm234, %v2587, %v2589
    %2591 = vrot.lane.b32.xlu0 %v2583, 126
    %v2592 = vpop.permute.xlu0 %2591
    %2593 = vrot.lane.b32.xlu0 %v2585, 126
    %v2594 = vpop.permute.xlu0 %2593
    %2595 = vrot.lane.b32.xlu0 %v2588, 126
    %v2596 = vpop.permute.xlu0 %2595
    %2597 = vrot.lane.b32.xlu0 %v2590, 126
    %v2598 = vpop.permute.xlu0 %2597
    %v2603 = vadd.f32 %v2521, %v2592
    %v2604 = vadd.f32 %v2522, %v2594
    %v2605 = vadd.f32 %v2523, %v2596
    %v2606 = vadd.f32 %v2524, %v2598
    %v2607 = vrot.slane %v1577, 4
    %v2608 = vrot.slane %v1578, 4
    %v2609 = vsel %vm234, %v2607, %v2608
    %v2610 = vrot.slane %v1579, 4
    %v2611 = vsel %vm234, %v2608, %v2610
    %v2612 = vrot.slane %v1580, 4
    %v2613 = vrot.slane %v1581, 4
    %v2614 = vsel %vm234, %v2612, %v2613
    %v2615 = vrot.slane %v1582, 4
    %v2616 = vsel %vm234, %v2613, %v2615
    %2617 = vrot.lane.b32.xlu0 %v2609, 125
    %v2618 = vpop.permute.xlu0 %2617
    %2619 = vrot.lane.b32.xlu0 %v2611, 125
    %v2620 = vpop.permute.xlu0 %2619
    %2621 = vrot.lane.b32.xlu0 %v2614, 125
    %v2622 = vpop.permute.xlu0 %2621
    %2623 = vrot.lane.b32.xlu0 %v2616, 125
    %v2624 = vpop.permute.xlu0 %2623
    %v2629 = vadd.f32 %v2547, %v2618
    %v2630 = vadd.f32 %v2548, %v2620
    %v2631 = vadd.f32 %v2549, %v2622
    %v2632 = vadd.f32 %v2550, %v2624
    %v2633 = vrot.slane %v1615, 4
    %v2634 = vrot.slane %v1616, 4
    %v2635 = vsel %vm234, %v2633, %v2634
    %v2636 = vrot.slane %v1617, 4
    %v2637 = vsel %vm234, %v2634, %v2636
    %v2638 = vrot.slane %v1618, 4
    %v2639 = vrot.slane %v1619, 4
    %v2640 = vsel %vm234, %v2638, %v2639
    %v2641 = vrot.slane %v1620, 4
    %v2642 = vsel %vm234, %v2639, %v2641
    %2643 = vrot.lane.b32.xlu0 %v2635, 125
    %v2644 = vpop.permute.xlu0 %2643
    %2645 = vrot.lane.b32.xlu0 %v2637, 125
    %v2646 = vpop.permute.xlu0 %2645
    %2647 = vrot.lane.b32.xlu0 %v2640, 125
    %v2648 = vpop.permute.xlu0 %2647
    %2649 = vrot.lane.b32.xlu0 %v2642, 125
    %v2650 = vpop.permute.xlu0 %2649
    %v2655 = vadd.f32 %v2573, %v2644
    %v2656 = vadd.f32 %v2574, %v2646
    %v2657 = vadd.f32 %v2575, %v2648
    %v2658 = vadd.f32 %v2576, %v2650
    %v2659 = vrot.slane %v1653, 4
    %v2660 = vrot.slane %v1654, 4
    %v2661 = vsel %vm234, %v2659, %v2660
    %v2662 = vrot.slane %v1655, 4
    %v2663 = vsel %vm234, %v2660, %v2662
    %v2664 = vrot.slane %v1656, 4
    %v2665 = vrot.slane %v1657, 4
    %v2666 = vsel %vm234, %v2664, %v2665
    %v2667 = vrot.slane %v1658, 4
    %v2668 = vsel %vm234, %v2665, %v2667
    %2669 = vrot.lane.b32.xlu0 %v2661, 125
    %v2670 = vpop.permute.xlu0 %2669
    %2671 = vrot.lane.b32.xlu0 %v2663, 125
    %v2672 = vpop.permute.xlu0 %2671
    %2673 = vrot.lane.b32.xlu0 %v2666, 125
    %v2674 = vpop.permute.xlu0 %2673
    %2675 = vrot.lane.b32.xlu0 %v2668, 125
    %v2676 = vpop.permute.xlu0 %2675
    %v2681 = vadd.f32 %v2577, %v2670
    %v2682 = vadd.f32 %v2578, %v2672
    %v2683 = vadd.f32 %v2579, %v2674
    %v2684 = vadd.f32 %v2580, %v2676
    %v2685 = vadd.f32 %v2603, %v2644
    %v2686 = vadd.f32 %v2604, %v2646
    %v2687 = vadd.f32 %v2605, %v2648
    %v2688 = vadd.f32 %v2606, %v2650
    %2689 = vrot.lane.b32.xlu0 %v2527, 124
    %v2690 = vpop.permute.xlu0 %2689
    %2691 = vrot.lane.b32.xlu0 %v2529, 124
    %v2692 = vpop.permute.xlu0 %2691
    %2693 = vrot.lane.b32.xlu0 %v2532, 124
    %v2694 = vpop.permute.xlu0 %2693
    %2695 = vrot.lane.b32.xlu0 %v2534, 124
    %v2696 = vpop.permute.xlu0 %2695
    %v2701 = vadd.f32 %v2629, %v2690
    %v2702 = vadd.f32 %v2630, %v2692
    %v2703 = vadd.f32 %v2631, %v2694
    %v2704 = vadd.f32 %v2632, %v2696
    %2705 = vrot.lane.b32.xlu0 %v2583, 124
    %v2706 = vpop.permute.xlu0 %2705
    %2707 = vrot.lane.b32.xlu0 %v2585, 124
    %v2708 = vpop.permute.xlu0 %2707
    %2709 = vrot.lane.b32.xlu0 %v2588, 124
    %v2710 = vpop.permute.xlu0 %2709
    %2711 = vrot.lane.b32.xlu0 %v2590, 124
    %v2712 = vpop.permute.xlu0 %2711
    %v2717 = vadd.f32 %v2655, %v2706
    %v2718 = vadd.f32 %v2656, %v2708
    %v2719 = vadd.f32 %v2657, %v2710
    %v2720 = vadd.f32 %v2658, %v2712
    %v2721 = vadd.f32 %v2681, %v2690
    %v2722 = vadd.f32 %v2682, %v2692
    %v2723 = vadd.f32 %v2683, %v2694
    %v2724 = vadd.f32 %v2684, %v2696
    %2725 = vrot.lane.b32.xlu0 %v2553, 124
    %v2726 = vpop.permute.xlu0 %2725
    %2727 = vrot.lane.b32.xlu0 %v2555, 124
    %v2728 = vpop.permute.xlu0 %2727
    %2729 = vrot.lane.b32.xlu0 %v2558, 124
    %v2730 = vpop.permute.xlu0 %2729
    %2731 = vrot.lane.b32.xlu0 %v2560, 124
    %v2732 = vpop.permute.xlu0 %2731
    %v2737 = vadd.f32 %v2685, %v2726
    %v2738 = vadd.f32 %v2686, %v2728
    %v2739 = vadd.f32 %v2687, %v2730
    %v2740 = vadd.f32 %v2688, %v2732
    %2741 = vrot.lane.b32.xlu0 %v2423, 123
    %v2742 = vpop.permute.xlu0 %2741
    %2743 = vrot.lane.b32.xlu0 %v2425, 123
    %v2744 = vpop.permute.xlu0 %2743
    %2745 = vrot.lane.b32.xlu0 %v2428, 123
    %v2746 = vpop.permute.xlu0 %2745
    %2747 = vrot.lane.b32.xlu0 %v2430, 123
    %v2748 = vpop.permute.xlu0 %2747
    %v2753 = vadd.f32 %v2701, %v2742
    %v2754 = vadd.f32 %v2702, %v2744
    %v2755 = vadd.f32 %v2703, %v2746
    %v2756 = vadd.f32 %v2704, %v2748
    %2757 = vrot.lane.b32.xlu0 %v2501, 123
    %v2758 = vpop.permute.xlu0 %2757
    %2759 = vrot.lane.b32.xlu0 %v2503, 123
    %v2760 = vpop.permute.xlu0 %2759
    %2761 = vrot.lane.b32.xlu0 %v2506, 123
    %v2762 = vpop.permute.xlu0 %2761
    %2763 = vrot.lane.b32.xlu0 %v2508, 123
    %v2764 = vpop.permute.xlu0 %2763
    %v2769 = vadd.f32 %v2717, %v2758
    %v2770 = vadd.f32 %v2718, %v2760
    %v2771 = vadd.f32 %v2719, %v2762
    %v2772 = vadd.f32 %v2720, %v2764
    %2773 = vrot.lane.b32.xlu0 %v2475, 123
    %v2774 = vpop.permute.xlu0 %2773
    %2775 = vrot.lane.b32.xlu0 %v2477, 123
    %v2776 = vpop.permute.xlu0 %2775
    %2777 = vrot.lane.b32.xlu0 %v2480, 123
    %v2778 = vpop.permute.xlu0 %2777
    %2779 = vrot.lane.b32.xlu0 %v2482, 123
    %v2780 = vpop.permute.xlu0 %2779
    %v2785 = vadd.f32 %v2721, %v2774
    %v2786 = vadd.f32 %v2722, %v2776
    %v2787 = vadd.f32 %v2723, %v2778
    %v2788 = vadd.f32 %v2724, %v2780
    %2789 = vrot.lane.b32.xlu0 %v2449, 123
    %v2790 = vpop.permute.xlu0 %2789
    %2791 = vrot.lane.b32.xlu0 %v2451, 123
    %v2792 = vpop.permute.xlu0 %2791
    %2793 = vrot.lane.b32.xlu0 %v2454, 123
    %v2794 = vpop.permute.xlu0 %2793
    %2795 = vrot.lane.b32.xlu0 %v2456, 123
    %v2796 = vpop.permute.xlu0 %2795
    %v2801 = vadd.f32 %v2737, %v2790
    %v2802 = vadd.f32 %v2738, %v2792
    %v2803 = vadd.f32 %v2739, %v2794
    %v2804 = vadd.f32 %v2740, %v2796
    %2805 = vrot.lane.b32.xlu0 %v2351, 122
    %v2806 = vpop.permute.xlu0 %2805
    %2807 = vrot.lane.b32.xlu0 %v2353, 122
    %v2808 = vpop.permute.xlu0 %2807
    %2809 = vrot.lane.b32.xlu0 %v2356, 122
    %v2810 = vpop.permute.xlu0 %2809
    %2811 = vrot.lane.b32.xlu0 %v2358, 122
    %v2812 = vpop.permute.xlu0 %2811
    %v2817 = vadd.f32 %v2753, %v2806
    %v2818 = vadd.f32 %v2754, %v2808
    %v2819 = vadd.f32 %v2755, %v2810
    %v2820 = vadd.f32 %v2756, %v2812
    %2821 = vrot.lane.b32.xlu0 %v2405, 122
    %v2822 = vpop.permute.xlu0 %2821
    %2823 = vrot.lane.b32.xlu0 %v2407, 122
    %v2824 = vpop.permute.xlu0 %2823
    %2825 = vrot.lane.b32.xlu0 %v2410, 122
    %v2826 = vpop.permute.xlu0 %2825
    %2827 = vrot.lane.b32.xlu0 %v2412, 122
    %v2828 = vpop.permute.xlu0 %2827
    %v2833 = vadd.f32 %v2769, %v2822
    %v2834 = vadd.f32 %v2770, %v2824
    %v2835 = vadd.f32 %v2771, %v2826
    %v2836 = vadd.f32 %v2772, %v2828
    %2837 = vrot.lane.b32.xlu0 %v2387, 122
    %v2838 = vpop.permute.xlu0 %2837
    %2839 = vrot.lane.b32.xlu0 %v2389, 122
    %v2840 = vpop.permute.xlu0 %2839
    %2841 = vrot.lane.b32.xlu0 %v2392, 122
    %v2842 = vpop.permute.xlu0 %2841
    %2843 = vrot.lane.b32.xlu0 %v2394, 122
    %v2844 = vpop.permute.xlu0 %2843
    %v2849 = vadd.f32 %v2785, %v2838
    %v2850 = vadd.f32 %v2786, %v2840
    %v2851 = vadd.f32 %v2787, %v2842
    %v2852 = vadd.f32 %v2788, %v2844
    %2853 = vrot.lane.b32.xlu0 %v2369, 122
    %v2854 = vpop.permute.xlu0 %2853
    %2855 = vrot.lane.b32.xlu0 %v2371, 122
    %v2856 = vpop.permute.xlu0 %2855
    %2857 = vrot.lane.b32.xlu0 %v2374, 122
    %v2858 = vpop.permute.xlu0 %2857
    %2859 = vrot.lane.b32.xlu0 %v2376, 122
    %v2860 = vpop.permute.xlu0 %2859
    %v2865 = vadd.f32 %v2801, %v2854
    %v2866 = vadd.f32 %v2802, %v2856
    %v2867 = vadd.f32 %v2803, %v2858
    %v2868 = vadd.f32 %v2804, %v2860
    %v2869 = vrot.slane %v299, 5
    %v2870 = vrot.slane %v300, 5
    %v2871 = vsel %vm253, %v2869, %v2870
    %v2872 = vrot.slane %v671, 5
    %v2873 = vsel %vm253, %v2870, %v2872
    %v2874 = vrot.slane %v301, 5
    %v2875 = vrot.slane %v302, 5
    %v2876 = vsel %vm253, %v2874, %v2875
    %v2877 = vrot.slane %v672, 5
    %v2878 = vsel %vm253, %v2875, %v2877
    %v2883 = vadd.f32 %v2817, %v2871
    %v2884 = vadd.f32 %v2818, %v2873
    %v2885 = vadd.f32 %v2819, %v2876
    %v2886 = vadd.f32 %v2820, %v2878
    %v2887 = vrot.slane %v307, 5
    %v2888 = vrot.slane %v308, 5
    %v2889 = vsel %vm253, %v2887, %v2888
    %v2890 = vrot.slane %v693, 5
    %v2891 = vsel %vm253, %v2888, %v2890
    %v2892 = vrot.slane %v309, 5
    %v2893 = vrot.slane %v310, 5
    %v2894 = vsel %vm253, %v2892, %v2893
    %v2895 = vrot.slane %v694, 5
    %v2896 = vsel %vm253, %v2893, %v2895
    %v2901 = vadd.f32 %v2833, %v2889
    %v2902 = vadd.f32 %v2834, %v2891
    %v2903 = vadd.f32 %v2835, %v2894
    %v2904 = vadd.f32 %v2836, %v2896
    %v2905 = vadd.f32 %v2849, %v2871
    %v2906 = vadd.f32 %v2850, %v2873
    %v2907 = vadd.f32 %v2851, %v2876
    %v2908 = vadd.f32 %v2852, %v2878
    %v2909 = vadd.f32 %v2865, %v2889
    %v2910 = vadd.f32 %v2866, %v2891
    %v2911 = vadd.f32 %v2867, %v2894
    %v2912 = vadd.f32 %v2868, %v2896
    %v2913 = vrot.slane %v723, 5
    %v2914 = vrot.slane %v724, 5
    %v2915 = vsel %vm253, %v2913, %v2914
    %v2916 = vrot.slane %v725, 5
    %v2917 = vsel %vm253, %v2914, %v2916
    %v2918 = vrot.slane %v726, 5
    %v2919 = vrot.slane %v727, 5
    %v2920 = vsel %vm253, %v2918, %v2919
    %v2921 = vrot.slane %v728, 5
    %v2922 = vsel %vm253, %v2919, %v2921
    %2923 = vrot.lane.b32.xlu0 %v2915, 127
    %v2924 = vpop.permute.xlu0 %2923
    %2925 = vrot.lane.b32.xlu0 %v2917, 127
    %v2926 = vpop.permute.xlu0 %2925
    %2927 = vrot.lane.b32.xlu0 %v2920, 127
    %v2928 = vpop.permute.xlu0 %2927
    %2929 = vrot.lane.b32.xlu0 %v2922, 127
    %v2930 = vpop.permute.xlu0 %2929
    %v2935 = vadd.f32 %v2883, %v2924
    %v2936 = vadd.f32 %v2884, %v2926
    %v2937 = vadd.f32 %v2885, %v2928
    %v2938 = vadd.f32 %v2886, %v2930
    %v2939 = vrot.slane %v803, 5
    %v2940 = vrot.slane %v804, 5
    %v2941 = vsel %vm253, %v2939, %v2940
    %v2942 = vrot.slane %v805, 5
    %v2943 = vsel %vm253, %v2940, %v2942
    %v2944 = vrot.slane %v806, 5
    %v2945 = vrot.slane %v807, 5
    %v2946 = vsel %vm253, %v2944, %v2945
    %v2947 = vrot.slane %v808, 5
    %v2948 = vsel %vm253, %v2945, %v2947
    %2949 = vrot.lane.b32.xlu0 %v2941, 127
    %v2950 = vpop.permute.xlu0 %2949
    %2951 = vrot.lane.b32.xlu0 %v2943, 127
    %v2952 = vpop.permute.xlu0 %2951
    %2953 = vrot.lane.b32.xlu0 %v2946, 127
    %v2954 = vpop.permute.xlu0 %2953
    %2955 = vrot.lane.b32.xlu0 %v2948, 127
    %v2956 = vpop.permute.xlu0 %2955
    %v2961 = vadd.f32 %v2901, %v2950
    %v2962 = vadd.f32 %v2902, %v2952
    %v2963 = vadd.f32 %v2903, %v2954
    %v2964 = vadd.f32 %v2904, %v2956
    %v2965 = vadd.f32 %v2905, %v2924
    %v2966 = vadd.f32 %v2906, %v2926
    %v2967 = vadd.f32 %v2907, %v2928
    %v2968 = vadd.f32 %v2908, %v2930
    %v2969 = vrot.slane %v761, 5
    %v2970 = vrot.slane %v762, 5
    %v2971 = vsel %vm253, %v2969, %v2970
    %v2972 = vrot.slane %v763, 5
    %v2973 = vsel %vm253, %v2970, %v2972
    %v2974 = vrot.slane %v764, 5
    %v2975 = vrot.slane %v765, 5
    %v2976 = vsel %vm253, %v2974, %v2975
    %v2977 = vrot.slane %v766, 5
    %v2978 = vsel %vm253, %v2975, %v2977
    %2979 = vrot.lane.b32.xlu0 %v2971, 127
    %v2980 = vpop.permute.xlu0 %2979
    %2981 = vrot.lane.b32.xlu0 %v2973, 127
    %v2982 = vpop.permute.xlu0 %2981
    %2983 = vrot.lane.b32.xlu0 %v2976, 127
    %v2984 = vpop.permute.xlu0 %2983
    %2985 = vrot.lane.b32.xlu0 %v2978, 127
    %v2986 = vpop.permute.xlu0 %2985
    %v2991 = vadd.f32 %v2909, %v2980
    %v2992 = vadd.f32 %v2910, %v2982
    %v2993 = vadd.f32 %v2911, %v2984
    %v2994 = vadd.f32 %v2912, %v2986
    %v2995 = vrot.slane %v841, 5
    %v2996 = vrot.slane %v842, 5
    %v2997 = vsel %vm253, %v2995, %v2996
    %v2998 = vrot.slane %v843, 5
    %v2999 = vsel %vm253, %v2996, %v2998
    %v3000 = vrot.slane %v844, 5
    %v3001 = vrot.slane %v845, 5
    %v3002 = vsel %vm253, %v3000, %v3001
    %v3003 = vrot.slane %v846, 5
    %v3004 = vsel %vm253, %v3001, %v3003
    %3005 = vrot.lane.b32.xlu0 %v2997, 126
    %v3006 = vpop.permute.xlu0 %3005
    %3007 = vrot.lane.b32.xlu0 %v2999, 126
    %v3008 = vpop.permute.xlu0 %3007
    %3009 = vrot.lane.b32.xlu0 %v3002, 126
    %v3010 = vpop.permute.xlu0 %3009
    %3011 = vrot.lane.b32.xlu0 %v3004, 126
    %v3012 = vpop.permute.xlu0 %3011
    %v3017 = vadd.f32 %v2935, %v3006
    %v3018 = vadd.f32 %v2936, %v3008
    %v3019 = vadd.f32 %v2937, %v3010
    %v3020 = vadd.f32 %v2938, %v3012
    %v3021 = vrot.slane %v955, 5
    %v3022 = vrot.slane %v956, 5
    %v3023 = vsel %vm253, %v3021, %v3022
    %v3024 = vrot.slane %v957, 5
    %v3025 = vsel %vm253, %v3022, %v3024
    %v3026 = vrot.slane %v958, 5
    %v3027 = vrot.slane %v959, 5
    %v3028 = vsel %vm253, %v3026, %v3027
    %v3029 = vrot.slane %v960, 5
    %v3030 = vsel %vm253, %v3027, %v3029
    %3031 = vrot.lane.b32.xlu0 %v3023, 126
    %v3032 = vpop.permute.xlu0 %3031
    %3033 = vrot.lane.b32.xlu0 %v3025, 126
    %v3034 = vpop.permute.xlu0 %3033
    %3035 = vrot.lane.b32.xlu0 %v3028, 126
    %v3036 = vpop.permute.xlu0 %3035
    %3037 = vrot.lane.b32.xlu0 %v3030, 126
    %v3038 = vpop.permute.xlu0 %3037
    %v3043 = vadd.f32 %v2961, %v3032
    %v3044 = vadd.f32 %v2962, %v3034
    %v3045 = vadd.f32 %v2963, %v3036
    %v3046 = vadd.f32 %v2964, %v3038
    %v3047 = vrot.slane %v917, 5
    %v3048 = vrot.slane %v918, 5
    %v3049 = vsel %vm253, %v3047, %v3048
    %v3050 = vrot.slane %v919, 5
    %v3051 = vsel %vm253, %v3048, %v3050
    %v3052 = vrot.slane %v920, 5
    %v3053 = vrot.slane %v921, 5
    %v3054 = vsel %vm253, %v3052, %v3053
    %v3055 = vrot.slane %v922, 5
    %v3056 = vsel %vm253, %v3053, %v3055
    %3057 = vrot.lane.b32.xlu0 %v3049, 126
    %v3058 = vpop.permute.xlu0 %3057
    %3059 = vrot.lane.b32.xlu0 %v3051, 126
    %v3060 = vpop.permute.xlu0 %3059
    %3061 = vrot.lane.b32.xlu0 %v3054, 126
    %v3062 = vpop.permute.xlu0 %3061
    %3063 = vrot.lane.b32.xlu0 %v3056, 126
    %v3064 = vpop.permute.xlu0 %3063
    %v3069 = vadd.f32 %v2965, %v3058
    %v3070 = vadd.f32 %v2966, %v3060
    %v3071 = vadd.f32 %v2967, %v3062
    %v3072 = vadd.f32 %v2968, %v3064
    %v3073 = vrot.slane %v879, 5
    %v3074 = vrot.slane %v880, 5
    %v3075 = vsel %vm253, %v3073, %v3074
    %v3076 = vrot.slane %v881, 5
    %v3077 = vsel %vm253, %v3074, %v3076
    %v3078 = vrot.slane %v882, 5
    %v3079 = vrot.slane %v883, 5
    %v3080 = vsel %vm253, %v3078, %v3079
    %v3081 = vrot.slane %v884, 5
    %v3082 = vsel %vm253, %v3079, %v3081
    %3083 = vrot.lane.b32.xlu0 %v3075, 126
    %v3084 = vpop.permute.xlu0 %3083
    %3085 = vrot.lane.b32.xlu0 %v3077, 126
    %v3086 = vpop.permute.xlu0 %3085
    %3087 = vrot.lane.b32.xlu0 %v3080, 126
    %v3088 = vpop.permute.xlu0 %3087
    %3089 = vrot.lane.b32.xlu0 %v3082, 126
    %v3090 = vpop.permute.xlu0 %3089
    %v3095 = vadd.f32 %v2991, %v3084
    %v3096 = vadd.f32 %v2992, %v3086
    %v3097 = vadd.f32 %v2993, %v3088
    %v3098 = vadd.f32 %v2994, %v3090
    %v3099 = vrot.slane %v993, 5
    %v3100 = vrot.slane %v994, 5
    %v3101 = vsel %vm253, %v3099, %v3100
    %v3102 = vrot.slane %v995, 5
    %v3103 = vsel %vm253, %v3100, %v3102
    %v3104 = vrot.slane %v996, 5
    %v3105 = vrot.slane %v997, 5
    %v3106 = vsel %vm253, %v3104, %v3105
    %v3107 = vrot.slane %v998, 5
    %v3108 = vsel %vm253, %v3105, %v3107
    %3109 = vrot.lane.b32.xlu0 %v3101, 125
    %v3110 = vpop.permute.xlu0 %3109
    %3111 = vrot.lane.b32.xlu0 %v3103, 125
    %v3112 = vpop.permute.xlu0 %3111
    %3113 = vrot.lane.b32.xlu0 %v3106, 125
    %v3114 = vpop.permute.xlu0 %3113
    %3115 = vrot.lane.b32.xlu0 %v3108, 125
    %v3116 = vpop.permute.xlu0 %3115
    %v3121 = vadd.f32 %v3017, %v3110
    %v3122 = vadd.f32 %v3018, %v3112
    %v3123 = vadd.f32 %v3019, %v3114
    %v3124 = vadd.f32 %v3020, %v3116
    %v3125 = vrot.slane %v1031, 5
    %v3126 = vrot.slane %v1032, 5
    %v3127 = vsel %vm253, %v3125, %v3126
    %v3128 = vrot.slane %v1033, 5
    %v3129 = vsel %vm253, %v3126, %v3128
    %v3130 = vrot.slane %v1034, 5
    %v3131 = vrot.slane %v1035, 5
    %v3132 = vsel %vm253, %v3130, %v3131
    %v3133 = vrot.slane %v1036, 5
    %v3134 = vsel %vm253, %v3131, %v3133
    %3135 = vrot.lane.b32.xlu0 %v3127, 125
    %v3136 = vpop.permute.xlu0 %3135
    %3137 = vrot.lane.b32.xlu0 %v3129, 125
    %v3138 = vpop.permute.xlu0 %3137
    %3139 = vrot.lane.b32.xlu0 %v3132, 125
    %v3140 = vpop.permute.xlu0 %3139
    %3141 = vrot.lane.b32.xlu0 %v3134, 125
    %v3142 = vpop.permute.xlu0 %3141
    %v3147 = vadd.f32 %v3043, %v3136
    %v3148 = vadd.f32 %v3044, %v3138
    %v3149 = vadd.f32 %v3045, %v3140
    %v3150 = vadd.f32 %v3046, %v3142
    %v3151 = vrot.slane %v1069, 5
    %v3152 = vrot.slane %v1070, 5
    %v3153 = vsel %vm253, %v3151, %v3152
    %v3154 = vrot.slane %v1071, 5
    %v3155 = vsel %vm253, %v3152, %v3154
    %v3156 = vrot.slane %v1072, 5
    %v3157 = vrot.slane %v1073, 5
    %v3158 = vsel %vm253, %v3156, %v3157
    %v3159 = vrot.slane %v1074, 5
    %v3160 = vsel %vm253, %v3157, %v3159
    %3161 = vrot.lane.b32.xlu0 %v3153, 125
    %v3162 = vpop.permute.xlu0 %3161
    %3163 = vrot.lane.b32.xlu0 %v3155, 125
    %v3164 = vpop.permute.xlu0 %3163
    %3165 = vrot.lane.b32.xlu0 %v3158, 125
    %v3166 = vpop.permute.xlu0 %3165
    %3167 = vrot.lane.b32.xlu0 %v3160, 125
    %v3168 = vpop.permute.xlu0 %3167
    %v3173 = vadd.f32 %v3069, %v3162
    %v3174 = vadd.f32 %v3070, %v3164
    %v3175 = vadd.f32 %v3071, %v3166
    %v3176 = vadd.f32 %v3072, %v3168
    %v3177 = vadd.f32 %v3095, %v3136
    %v3178 = vadd.f32 %v3096, %v3138
    %v3179 = vadd.f32 %v3097, %v3140
    %v3180 = vadd.f32 %v3098, %v3142
    %3181 = vrot.lane.b32.xlu0 %v2997, 124
    %v3182 = vpop.permute.xlu0 %3181
    %3183 = vrot.lane.b32.xlu0 %v2999, 124
    %v3184 = vpop.permute.xlu0 %3183
    %3185 = vrot.lane.b32.xlu0 %v3002, 124
    %v3186 = vpop.permute.xlu0 %3185
    %3187 = vrot.lane.b32.xlu0 %v3004, 124
    %v3188 = vpop.permute.xlu0 %3187
    %v3193 = vadd.f32 %v3121, %v3182
    %v3194 = vadd.f32 %v3122, %v3184
    %v3195 = vadd.f32 %v3123, %v3186
    %v3196 = vadd.f32 %v3124, %v3188
    %3197 = vrot.lane.b32.xlu0 %v3075, 124
    %v3198 = vpop.permute.xlu0 %3197
    %3199 = vrot.lane.b32.xlu0 %v3077, 124
    %v3200 = vpop.permute.xlu0 %3199
    %3201 = vrot.lane.b32.xlu0 %v3080, 124
    %v3202 = vpop.permute.xlu0 %3201
    %3203 = vrot.lane.b32.xlu0 %v3082, 124
    %v3204 = vpop.permute.xlu0 %3203
    %v3209 = vadd.f32 %v3147, %v3198
    %v3210 = vadd.f32 %v3148, %v3200
    %v3211 = vadd.f32 %v3149, %v3202
    %v3212 = vadd.f32 %v3150, %v3204
    %3213 = vrot.lane.b32.xlu0 %v3049, 124
    %v3214 = vpop.permute.xlu0 %3213
    %3215 = vrot.lane.b32.xlu0 %v3051, 124
    %v3216 = vpop.permute.xlu0 %3215
    %3217 = vrot.lane.b32.xlu0 %v3054, 124
    %v3218 = vpop.permute.xlu0 %3217
    %3219 = vrot.lane.b32.xlu0 %v3056, 124
    %v3220 = vpop.permute.xlu0 %3219
    %v3225 = vadd.f32 %v3173, %v3214
    %v3226 = vadd.f32 %v3174, %v3216
    %v3227 = vadd.f32 %v3175, %v3218
    %v3228 = vadd.f32 %v3176, %v3220
    %3229 = vrot.lane.b32.xlu0 %v3023, 124
    %v3230 = vpop.permute.xlu0 %3229
    %3231 = vrot.lane.b32.xlu0 %v3025, 124
    %v3232 = vpop.permute.xlu0 %3231
    %3233 = vrot.lane.b32.xlu0 %v3028, 124
    %v3234 = vpop.permute.xlu0 %3233
    %3235 = vrot.lane.b32.xlu0 %v3030, 124
    %v3236 = vpop.permute.xlu0 %3235
    %v3241 = vadd.f32 %v3177, %v3230
    %v3242 = vadd.f32 %v3178, %v3232
    %v3243 = vadd.f32 %v3179, %v3234
    %v3244 = vadd.f32 %v3180, %v3236
    %3245 = vrot.lane.b32.xlu0 %v2915, 123
    %v3246 = vpop.permute.xlu0 %3245
    %3247 = vrot.lane.b32.xlu0 %v2917, 123
    %v3248 = vpop.permute.xlu0 %3247
    %3249 = vrot.lane.b32.xlu0 %v2920, 123
    %v3250 = vpop.permute.xlu0 %3249
    %3251 = vrot.lane.b32.xlu0 %v2922, 123
    %v3252 = vpop.permute.xlu0 %3251
    %v3257 = vadd.f32 %v3193, %v3246
    %v3258 = vadd.f32 %v3194, %v3248
    %v3259 = vadd.f32 %v3195, %v3250
    %v3260 = vadd.f32 %v3196, %v3252
    %3261 = vrot.lane.b32.xlu0 %v2971, 123
    %v3262 = vpop.permute.xlu0 %3261
    %3263 = vrot.lane.b32.xlu0 %v2973, 123
    %v3264 = vpop.permute.xlu0 %3263
    %3265 = vrot.lane.b32.xlu0 %v2976, 123
    %v3266 = vpop.permute.xlu0 %3265
    %3267 = vrot.lane.b32.xlu0 %v2978, 123
    %v3268 = vpop.permute.xlu0 %3267
    %v3273 = vadd.f32 %v3209, %v3262
    %v3274 = vadd.f32 %v3210, %v3264
    %v3275 = vadd.f32 %v3211, %v3266
    %v3276 = vadd.f32 %v3212, %v3268
    %v3277 = vadd.f32 %v3225, %v3246
    %v3278 = vadd.f32 %v3226, %v3248
    %v3279 = vadd.f32 %v3227, %v3250
    %v3280 = vadd.f32 %v3228, %v3252
    %3281 = vrot.lane.b32.xlu0 %v2941, 123
    %v3282 = vpop.permute.xlu0 %3281
    %3283 = vrot.lane.b32.xlu0 %v2943, 123
    %v3284 = vpop.permute.xlu0 %3283
    %3285 = vrot.lane.b32.xlu0 %v2946, 123
    %v3286 = vpop.permute.xlu0 %3285
    %3287 = vrot.lane.b32.xlu0 %v2948, 123
    %v3288 = vpop.permute.xlu0 %3287
    %v3293 = vadd.f32 %v3241, %v3282
    %v3294 = vadd.f32 %v3242, %v3284
    %v3295 = vadd.f32 %v3243, %v3286
    %v3296 = vadd.f32 %v3244, %v3288
    %3297 = vrot.lane.b32.xlu0 %v2871, 122
    %v3298 = vpop.permute.xlu0 %3297
    %3299 = vrot.lane.b32.xlu0 %v2873, 122
    %v3300 = vpop.permute.xlu0 %3299
    %3301 = vrot.lane.b32.xlu0 %v2876, 122
    %v3302 = vpop.permute.xlu0 %3301
    %3303 = vrot.lane.b32.xlu0 %v2878, 122
    %v3304 = vpop.permute.xlu0 %3303
    %v3309 = vadd.f32 %v3257, %v3298
    %v3310 = vadd.f32 %v3258, %v3300
    %v3311 = vadd.f32 %v3259, %v3302
    %v3312 = vadd.f32 %v3260, %v3304
    %3313 = vrot.lane.b32.xlu0 %v2889, 122
    %v3314 = vpop.permute.xlu0 %3313
    %3315 = vrot.lane.b32.xlu0 %v2891, 122
    %v3316 = vpop.permute.xlu0 %3315
    %3317 = vrot.lane.b32.xlu0 %v2894, 122
    %v3318 = vpop.permute.xlu0 %3317
    %3319 = vrot.lane.b32.xlu0 %v2896, 122
    %v3320 = vpop.permute.xlu0 %3319
    %v3325 = vadd.f32 %v3273, %v3314
    %v3326 = vadd.f32 %v3274, %v3316
    %v3327 = vadd.f32 %v3275, %v3318
    %v3328 = vadd.f32 %v3276, %v3320
    %v3329 = vadd.f32 %v3277, %v3298
    %v3330 = vadd.f32 %v3278, %v3300
    %v3331 = vadd.f32 %v3279, %v3302
    %v3332 = vadd.f32 %v3280, %v3304
    %v3333 = vadd.f32 %v3293, %v3314
    %v3334 = vadd.f32 %v3294, %v3316
    %v3335 = vadd.f32 %v3295, %v3318
    %v3336 = vadd.f32 %v3296, %v3320
    %v3337 = vrot.slane %v299, 6
    %v3338 = vrot.slane %v300, 6
    %v3339 = vsel %vm272, %v3337, %v3338
    %v3340 = vrot.slane %v671, 6
    %v3341 = vsel %vm272, %v3338, %v3340
    %v3342 = vrot.slane %v301, 6
    %v3343 = vrot.slane %v302, 6
    %v3344 = vsel %vm272, %v3342, %v3343
    %v3345 = vrot.slane %v672, 6
    %v3346 = vsel %vm272, %v3343, %v3345
    %v3351 = vadd.f32 %v3309, %v3339
    %v3352 = vadd.f32 %v3310, %v3341
    %v3353 = vadd.f32 %v3311, %v3344
    %v3354 = vadd.f32 %v3312, %v3346
    %v3355 = vrot.slane %v307, 6
    %v3356 = vrot.slane %v308, 6
    %v3357 = vsel %vm272, %v3355, %v3356
    %v3358 = vrot.slane %v693, 6
    %v3359 = vsel %vm272, %v3356, %v3358
    %v3360 = vrot.slane %v309, 6
    %v3361 = vrot.slane %v310, 6
    %v3362 = vsel %vm272, %v3360, %v3361
    %v3363 = vrot.slane %v694, 6
    %v3364 = vsel %vm272, %v3361, %v3363
    %v3369 = vadd.f32 %v3325, %v3357
    %v3370 = vadd.f32 %v3326, %v3359
    %v3371 = vadd.f32 %v3327, %v3362
    %v3372 = vadd.f32 %v3328, %v3364
    %v3373 = vadd.f32 %v3329, %v3339
    %v3374 = vadd.f32 %v3330, %v3341
    %v3375 = vadd.f32 %v3331, %v3344
    %v3376 = vadd.f32 %v3332, %v3346
    %v3377 = vadd.f32 %v3333, %v3357
    %v3378 = vadd.f32 %v3334, %v3359
    %v3379 = vadd.f32 %v3335, %v3362
    %v3380 = vadd.f32 %v3336, %v3364
    %3381 = vrot.lane.b32.xlu0 %v3339, 127
    %v3382 = vpop.permute.xlu0 %3381
    %3383 = vrot.lane.b32.xlu0 %v3341, 127
    %v3384 = vpop.permute.xlu0 %3383
    %3385 = vrot.lane.b32.xlu0 %v3344, 127
    %v3386 = vpop.permute.xlu0 %3385
    %3387 = vrot.lane.b32.xlu0 %v3346, 127
    %v3388 = vpop.permute.xlu0 %3387
    %v3393 = vadd.f32 %v3351, %v3382
    %v3394 = vadd.f32 %v3352, %v3384
    %v3395 = vadd.f32 %v3353, %v3386
    %v3396 = vadd.f32 %v3354, %v3388
    %3397 = vrot.lane.b32.xlu0 %v3357, 127
    %v3398 = vpop.permute.xlu0 %3397
    %3399 = vrot.lane.b32.xlu0 %v3359, 127
    %v3400 = vpop.permute.xlu0 %3399
    %3401 = vrot.lane.b32.xlu0 %v3362, 127
    %v3402 = vpop.permute.xlu0 %3401
    %3403 = vrot.lane.b32.xlu0 %v3364, 127
    %v3404 = vpop.permute.xlu0 %3403
    %v3409 = vadd.f32 %v3369, %v3398
    %v3410 = vadd.f32 %v3370, %v3400
    %v3411 = vadd.f32 %v3371, %v3402
    %v3412 = vadd.f32 %v3372, %v3404
    %v3413 = vadd.f32 %v3373, %v3382
    %v3414 = vadd.f32 %v3374, %v3384
    %v3415 = vadd.f32 %v3375, %v3386
    %v3416 = vadd.f32 %v3376, %v3388
    %v3417 = vadd.f32 %v3377, %v3398
    %v3418 = vadd.f32 %v3378, %v3400
    %v3419 = vadd.f32 %v3379, %v3402
    %v3420 = vadd.f32 %v3380, %v3404
    %v3421 = vrot.slane %v355, 6
    %v3422 = vrot.slane %v356, 6
    %v3423 = vsel %vm272, %v3421, %v3422
    %v3424 = vrot.slane %v1311, 6
    %v3425 = vsel %vm272, %v3422, %v3424
    %v3426 = vrot.slane %v357, 6
    %v3427 = vrot.slane %v358, 6
    %v3428 = vsel %vm272, %v3426, %v3427
    %v3429 = vrot.slane %v1312, 6
    %v3430 = vsel %vm272, %v3427, %v3429
    %3431 = vrot.lane.b32.xlu0 %v3423, 126
    %v3432 = vpop.permute.xlu0 %3431
    %3433 = vrot.lane.b32.xlu0 %v3425, 126
    %v3434 = vpop.permute.xlu0 %3433
    %3435 = vrot.lane.b32.xlu0 %v3428, 126
    %v3436 = vpop.permute.xlu0 %3435
    %3437 = vrot.lane.b32.xlu0 %v3430, 126
    %v3438 = vpop.permute.xlu0 %3437
    %v3443 = vadd.f32 %v3393, %v3432
    %v3444 = vadd.f32 %v3394, %v3434
    %v3445 = vadd.f32 %v3395, %v3436
    %v3446 = vadd.f32 %v3396, %v3438
    %v3447 = vrot.slane %v427, 6
    %v3448 = vrot.slane %v428, 6
    %v3449 = vsel %vm272, %v3447, %v3448
    %v3450 = vrot.slane %v1333, 6
    %v3451 = vsel %vm272, %v3448, %v3450
    %v3452 = vrot.slane %v429, 6
    %v3453 = vrot.slane %v430, 6
    %v3454 = vsel %vm272, %v3452, %v3453
    %v3455 = vrot.slane %v1334, 6
    %v3456 = vsel %vm272, %v3453, %v3455
    %3457 = vrot.lane.b32.xlu0 %v3449, 126
    %v3458 = vpop.permute.xlu0 %3457
    %3459 = vrot.lane.b32.xlu0 %v3451, 126
    %v3460 = vpop.permute.xlu0 %3459
    %3461 = vrot.lane.b32.xlu0 %v3454, 126
    %v3462 = vpop.permute.xlu0 %3461
    %3463 = vrot.lane.b32.xlu0 %v3456, 126
    %v3464 = vpop.permute.xlu0 %3463
    %v3469 = vadd.f32 %v3409, %v3458
    %v3470 = vadd.f32 %v3410, %v3460
    %v3471 = vadd.f32 %v3411, %v3462
    %v3472 = vadd.f32 %v3412, %v3464
    %v3473 = vrot.slane %v403, 6
    %v3474 = vrot.slane %v404, 6
    %v3475 = vsel %vm272, %v3473, %v3474
    %v3476 = vrot.slane %v1267, 6
    %v3477 = vsel %vm272, %v3474, %v3476
    %v3478 = vrot.slane %v405, 6
    %v3479 = vrot.slane %v406, 6
    %v3480 = vsel %vm272, %v3478, %v3479
    %v3481 = vrot.slane %v1268, 6
    %v3482 = vsel %vm272, %v3479, %v3481
    %3483 = vrot.lane.b32.xlu0 %v3475, 126
    %v3484 = vpop.permute.xlu0 %3483
    %3485 = vrot.lane.b32.xlu0 %v3477, 126
    %v3486 = vpop.permute.xlu0 %3485
    %3487 = vrot.lane.b32.xlu0 %v3480, 126
    %v3488 = vpop.permute.xlu0 %3487
    %3489 = vrot.lane.b32.xlu0 %v3482, 126
    %v3490 = vpop.permute.xlu0 %3489
    %v3495 = vadd.f32 %v3413, %v3484
    %v3496 = vadd.f32 %v3414, %v3486
    %v3497 = vadd.f32 %v3415, %v3488
    %v3498 = vadd.f32 %v3416, %v3490
    %v3499 = vrot.slane %v379, 6
    %v3500 = vrot.slane %v380, 6
    %v3501 = vsel %vm272, %v3499, %v3500
    %v3502 = vrot.slane %v1289, 6
    %v3503 = vsel %vm272, %v3500, %v3502
    %v3504 = vrot.slane %v381, 6
    %v3505 = vrot.slane %v382, 6
    %v3506 = vsel %vm272, %v3504, %v3505
    %v3507 = vrot.slane %v1290, 6
    %v3508 = vsel %vm272, %v3505, %v3507
    %3509 = vrot.lane.b32.xlu0 %v3501, 126
    %v3510 = vpop.permute.xlu0 %3509
    %3511 = vrot.lane.b32.xlu0 %v3503, 126
    %v3512 = vpop.permute.xlu0 %3511
    %3513 = vrot.lane.b32.xlu0 %v3506, 126
    %v3514 = vpop.permute.xlu0 %3513
    %3515 = vrot.lane.b32.xlu0 %v3508, 126
    %v3516 = vpop.permute.xlu0 %3515
    %v3521 = vadd.f32 %v3417, %v3510
    %v3522 = vadd.f32 %v3418, %v3512
    %v3523 = vadd.f32 %v3419, %v3514
    %v3524 = vadd.f32 %v3420, %v3516
    %v3525 = vrot.slane %v451, 6
    %v3526 = vrot.slane %v452, 6
    %v3527 = vsel %vm272, %v3525, %v3526
    %v3528 = vrot.slane %v1919, 6
    %v3529 = vsel %vm272, %v3526, %v3528
    %v3530 = vrot.slane %v453, 6
    %v3531 = vrot.slane %v454, 6
    %v3532 = vsel %vm272, %v3530, %v3531
    %v3533 = vrot.slane %v1920, 6
    %v3534 = vsel %vm272, %v3531, %v3533
    %3535 = vrot.lane.b32.xlu0 %v3527, 125
    %v3536 = vpop.permute.xlu0 %3535
    %3537 = vrot.lane.b32.xlu0 %v3529, 125
    %v3538 = vpop.permute.xlu0 %3537
    %3539 = vrot.lane.b32.xlu0 %v3532, 125
    %v3540 = vpop.permute.xlu0 %3539
    %3541 = vrot.lane.b32.xlu0 %v3534, 125
    %v3542 = vpop.permute.xlu0 %3541
    %v3547 = vadd.f32 %v3443, %v3536
    %v3548 = vadd.f32 %v3444, %v3538
    %v3549 = vadd.f32 %v3445, %v3540
    %v3550 = vadd.f32 %v3446, %v3542
    %v3551 = vrot.slane %v475, 6
    %v3552 = vrot.slane %v476, 6
    %v3553 = vsel %vm272, %v3551, %v3552
    %v3554 = vrot.slane %v1897, 6
    %v3555 = vsel %vm272, %v3552, %v3554
    %v3556 = vrot.slane %v477, 6
    %v3557 = vrot.slane %v478, 6
    %v3558 = vsel %vm272, %v3556, %v3557
    %v3559 = vrot.slane %v1898, 6
    %v3560 = vsel %vm272, %v3557, %v3559
    %3561 = vrot.lane.b32.xlu0 %v3553, 125
    %v3562 = vpop.permute.xlu0 %3561
    %3563 = vrot.lane.b32.xlu0 %v3555, 125
    %v3564 = vpop.permute.xlu0 %3563
    %3565 = vrot.lane.b32.xlu0 %v3558, 125
    %v3566 = vpop.permute.xlu0 %3565
    %3567 = vrot.lane.b32.xlu0 %v3560, 125
    %v3568 = vpop.permute.xlu0 %3567
    %v3573 = vadd.f32 %v3469, %v3562
    %v3574 = vadd.f32 %v3470, %v3564
    %v3575 = vadd.f32 %v3471, %v3566
    %v3576 = vadd.f32 %v3472, %v3568
    %v3577 = vrot.slane %v499, 6
    %v3578 = vrot.slane %v500, 6
    %v3579 = vsel %vm272, %v3577, %v3578
    %v3580 = vrot.slane %v1875, 6
    %v3581 = vsel %vm272, %v3578, %v3580
    %v3582 = vrot.slane %v501, 6
    %v3583 = vrot.slane %v502, 6
    %v3584 = vsel %vm272, %v3582, %v3583
    %v3585 = vrot.slane %v1876, 6
    %v3586 = vsel %vm272, %v3583, %v3585
    %3587 = vrot.lane.b32.xlu0 %v3579, 125
    %v3588 = vpop.permute.xlu0 %3587
    %3589 = vrot.lane.b32.xlu0 %v3581, 125
    %v3590 = vpop.permute.xlu0 %3589
    %3591 = vrot.lane.b32.xlu0 %v3584, 125
    %v3592 = vpop.permute.xlu0 %3591
    %3593 = vrot.lane.b32.xlu0 %v3586, 125
    %v3594 = vpop.permute.xlu0 %3593
    %v3599 = vadd.f32 %v3495, %v3588
    %v3600 = vadd.f32 %v3496, %v3590
    %v3601 = vadd.f32 %v3497, %v3592
    %v3602 = vadd.f32 %v3498, %v3594
    %v3603 = vadd.f32 %v3521, %v3562
    %v3604 = vadd.f32 %v3522, %v3564
    %v3605 = vadd.f32 %v3523, %v3566
    %v3606 = vadd.f32 %v3524, %v3568
    %3607 = vrot.lane.b32.xlu0 %v3423, 124
    %v3608 = vpop.permute.xlu0 %3607
    %3609 = vrot.lane.b32.xlu0 %v3425, 124
    %v3610 = vpop.permute.xlu0 %3609
    %3611 = vrot.lane.b32.xlu0 %v3428, 124
    %v3612 = vpop.permute.xlu0 %3611
    %3613 = vrot.lane.b32.xlu0 %v3430, 124
    %v3614 = vpop.permute.xlu0 %3613
    %v3619 = vadd.f32 %v3547, %v3608
    %v3620 = vadd.f32 %v3548, %v3610
    %v3621 = vadd.f32 %v3549, %v3612
    %v3622 = vadd.f32 %v3550, %v3614
    %3623 = vrot.lane.b32.xlu0 %v3501, 124
    %v3624 = vpop.permute.xlu0 %3623
    %3625 = vrot.lane.b32.xlu0 %v3503, 124
    %v3626 = vpop.permute.xlu0 %3625
    %3627 = vrot.lane.b32.xlu0 %v3506, 124
    %v3628 = vpop.permute.xlu0 %3627
    %3629 = vrot.lane.b32.xlu0 %v3508, 124
    %v3630 = vpop.permute.xlu0 %3629
    %v3635 = vadd.f32 %v3573, %v3624
    %v3636 = vadd.f32 %v3574, %v3626
    %v3637 = vadd.f32 %v3575, %v3628
    %v3638 = vadd.f32 %v3576, %v3630
    %3639 = vrot.lane.b32.xlu0 %v3475, 124
    %v3640 = vpop.permute.xlu0 %3639
    %3641 = vrot.lane.b32.xlu0 %v3477, 124
    %v3642 = vpop.permute.xlu0 %3641
    %3643 = vrot.lane.b32.xlu0 %v3480, 124
    %v3644 = vpop.permute.xlu0 %3643
    %3645 = vrot.lane.b32.xlu0 %v3482, 124
    %v3646 = vpop.permute.xlu0 %3645
    %v3651 = vadd.f32 %v3599, %v3640
    %v3652 = vadd.f32 %v3600, %v3642
    %v3653 = vadd.f32 %v3601, %v3644
    %v3654 = vadd.f32 %v3602, %v3646
    %3655 = vrot.lane.b32.xlu0 %v3449, 124
    %v3656 = vpop.permute.xlu0 %3655
    %3657 = vrot.lane.b32.xlu0 %v3451, 124
    %v3658 = vpop.permute.xlu0 %3657
    %3659 = vrot.lane.b32.xlu0 %v3454, 124
    %v3660 = vpop.permute.xlu0 %3659
    %3661 = vrot.lane.b32.xlu0 %v3456, 124
    %v3662 = vpop.permute.xlu0 %3661
    %v3667 = vadd.f32 %v3603, %v3656
    %v3668 = vadd.f32 %v3604, %v3658
    %v3669 = vadd.f32 %v3605, %v3660
    %v3670 = vadd.f32 %v3606, %v3662
    %3671 = vrot.lane.b32.xlu0 %v3339, 123
    %v3672 = vpop.permute.xlu0 %3671
    %3673 = vrot.lane.b32.xlu0 %v3341, 123
    %v3674 = vpop.permute.xlu0 %3673
    %3675 = vrot.lane.b32.xlu0 %v3344, 123
    %v3676 = vpop.permute.xlu0 %3675
    %3677 = vrot.lane.b32.xlu0 %v3346, 123
    %v3678 = vpop.permute.xlu0 %3677
    %v3683 = vadd.f32 %v3619, %v3672
    %v3684 = vadd.f32 %v3620, %v3674
    %v3685 = vadd.f32 %v3621, %v3676
    %v3686 = vadd.f32 %v3622, %v3678
    %3687 = vrot.lane.b32.xlu0 %v3357, 123
    %v3688 = vpop.permute.xlu0 %3687
    %3689 = vrot.lane.b32.xlu0 %v3359, 123
    %v3690 = vpop.permute.xlu0 %3689
    %3691 = vrot.lane.b32.xlu0 %v3362, 123
    %v3692 = vpop.permute.xlu0 %3691
    %3693 = vrot.lane.b32.xlu0 %v3364, 123
    %v3694 = vpop.permute.xlu0 %3693
    %v3699 = vadd.f32 %v3635, %v3688
    %v3700 = vadd.f32 %v3636, %v3690
    %v3701 = vadd.f32 %v3637, %v3692
    %v3702 = vadd.f32 %v3638, %v3694
    %v3703 = vadd.f32 %v3651, %v3672
    %v3704 = vadd.f32 %v3652, %v3674
    %v3705 = vadd.f32 %v3653, %v3676
    %v3706 = vadd.f32 %v3654, %v3678
    %v3707 = vadd.f32 %v3667, %v3688
    %v3708 = vadd.f32 %v3668, %v3690
    %v3709 = vadd.f32 %v3669, %v3692
    %v3710 = vadd.f32 %v3670, %v3694
    %3711 = vrot.lane.b32.xlu0 %v3339, 122
    %v3712 = vpop.permute.xlu0 %3711
    %3713 = vrot.lane.b32.xlu0 %v3341, 122
    %v3714 = vpop.permute.xlu0 %3713
    %3715 = vrot.lane.b32.xlu0 %v3344, 122
    %v3716 = vpop.permute.xlu0 %3715
    %3717 = vrot.lane.b32.xlu0 %v3346, 122
    %v3718 = vpop.permute.xlu0 %3717
    %v3723 = vadd.f32 %v3683, %v3712
    %v3724 = vadd.f32 %v3684, %v3714
    %v3725 = vadd.f32 %v3685, %v3716
    %v3726 = vadd.f32 %v3686, %v3718
    %3727 = vrot.lane.b32.xlu0 %v3357, 122
    %v3728 = vpop.permute.xlu0 %3727
    %3729 = vrot.lane.b32.xlu0 %v3359, 122
    %v3730 = vpop.permute.xlu0 %3729
    %3731 = vrot.lane.b32.xlu0 %v3362, 122
    %v3732 = vpop.permute.xlu0 %3731
    %3733 = vrot.lane.b32.xlu0 %v3364, 122
    %v3734 = vpop.permute.xlu0 %3733
    %v3739 = vadd.f32 %v3699, %v3728
    %v3740 = vadd.f32 %v3700, %v3730
    %v3741 = vadd.f32 %v3701, %v3732
    %v3742 = vadd.f32 %v3702, %v3734
    %v3743 = vadd.f32 %v3703, %v3712
    %v3744 = vadd.f32 %v3704, %v3714
    %v3745 = vadd.f32 %v3705, %v3716
    %v3746 = vadd.f32 %v3706, %v3718
    %v3747 = vadd.f32 %v3707, %v3728
    %v3748 = vadd.f32 %v3708, %v3730
    %v3749 = vadd.f32 %v3709, %v3732
    %v3750 = vadd.f32 %v3710, %v3734
    %v3751 = vand.u32 2147483647, %v3723
    %v3752 = vand.u32 2147483647, %v3724
    %v3753 = vand.u32 2147483647, %v3725
    %v3754 = vand.u32 2147483647, %v3726
    %v3755 = vmul.f32 %v3751, %v295
    %v3756 = vmul.f32 %v3752, %v296
    %v3757 = vmul.f32 %v3753, %v297
    %v3758 = vmul.f32 %v3754, %v298
    %vm3759 = vcmask 130048
    %3760 = vst.msk [vmem:[#allocation2] sm:$0xff] %vm3759, %v3755
    %3761 = vst.msk [vmem:[#allocation2 + $0x8] sm:$0xff] %vm3759, %v3756
    %3762 = vst.msk [vmem:[#allocation2 + $0x40] sm:$0xff] %vm3759, %v3757
    %3763 = vst.msk [vmem:[#allocation2 + $0x48] sm:$0xff] %vm3759, %v3758
    %v3764 = vand.u32 2147483647, %v3739
    %v3765 = vand.u32 2147483647, %v3740
    %v3766 = vand.u32 2147483647, %v3741
    %v3767 = vand.u32 2147483647, %v3742
    %v3768 = vmul.f32 %v3764, %v295
    %v3769 = vmul.f32 %v3765, %v296
    %v3770 = vmul.f32 %v3766, %v297
    %v3771 = vmul.f32 %v3767, %v298
    %s3772 = scalar_lea.vmem [#allocation2], 16
    %3773 = vst.msk [vmem:[%s3772] sm:$0xff] %vm3759, %v3768
    %3774 = vst.msk [vmem:[%s3772 + $0x8] sm:$0xff] %vm3759, %v3769
    %3775 = vst.msk [vmem:[%s3772 + $0x40] sm:$0xff] %vm3759, %v3770
    %3776 = vst.msk [vmem:[%s3772 + $0x48] sm:$0xff] %vm3759, %v3771
    %v3777 = vand.u32 2147483647, %v3743
    %v3778 = vand.u32 2147483647, %v3744
    %v3779 = vand.u32 2147483647, %v3745
    %v3780 = vand.u32 2147483647, %v3746
    %v3781 = vmul.f32 %v3777, %v295
    %v3782 = vmul.f32 %v3778, %v296
    %v3783 = vmul.f32 %v3779, %v297
    %v3784 = vmul.f32 %v3780, %v298
    %s3785 = scalar_lea.vmem [#allocation2], 32
    %3786 = vst.msk [vmem:[%s3785] sm:$0xff] %vm3759, %v3781
    %3787 = vst.msk [vmem:[%s3785 + $0x8] sm:$0xff] %vm3759, %v3782
    %3788 = vst.msk [vmem:[%s3785 + $0x40] sm:$0xff] %vm3759, %v3783
    %3789 = vst.msk [vmem:[%s3785 + $0x48] sm:$0xff] %vm3759, %v3784
    %v3790 = vand.u32 2147483647, %v3747
    %v3791 = vand.u32 2147483647, %v3748
    %v3792 = vand.u32 2147483647, %v3749
    %v3793 = vand.u32 2147483647, %v3750
    %v3794 = vmul.f32 %v3790, %v295
    %v3795 = vmul.f32 %v3791, %v296
    %v3796 = vmul.f32 %v3792, %v297
    %v3797 = vmul.f32 %v3793, %v298
    %s3798 = scalar_lea.vmem [#allocation2], 48
    %3799 = vst.msk [vmem:[%s3798] sm:$0xff] %vm3759, %v3794
    %3800 = vst.msk [vmem:[%s3798 + $0x8] sm:$0xff] %vm3759, %v3795
    %3801 = vst.msk [vmem:[%s3798 + $0x40] sm:$0xff] %vm3759, %v3796
    %3802 = vst.msk [vmem:[%s3798 + $0x48] sm:$0xff] %vm3759, %v3797
    // Predicated region
    $region6: #{tpu_custom_call.1} parent=1 // pred_check
      _
    $region7: #{tpu_custom_call.1} parent=1 // pred_check_branch
      %3804 = sbr.rel (0) target = $region9
    $region8: #{tpu_custom_call.1} parent=1 // pred_region
      %s3806 = ssub.s32 2048, 2048
      %3807 = vsyncadd [#allocation3], %s3806
      %s3808 = sshll.u32 [#allocation2], 4
      %s3809 = int_to_ptr.vmem [resolvable:$true] %s3808
      %3814 = dma.vmem_to_hbm [thread:$0]  %s3809, 2048, %s1, [#allocation3], 128, 128, 8
    $region9: #{tpu_custom_call.1} parent=1 // pred_fallthru
      _
    // Predicated region
    $region10: #{tpu_custom_call.1} parent=1 // pred_check
      _
    $region11: #{tpu_custom_call.1} parent=1 // pred_check_branch
      %3816 = sbr.rel (0) target = $region13
    $region12: #{tpu_custom_call.1} parent=1 // pred_region
      %3817 = dma.done [#allocation3], 2048
    $region13: #{tpu_custom_call.1} parent=1 // pred_fallthru
      _
    %3818 = vsyncpa [#allocation3], 1

</llo_original>
